<compile_context>
chip_gen: v5e
topology: v5e:2x2
jax: 0.10.0
libtpu: 0.0.40
codegen_flags: <defaults>
</compile_context>

<pallas_src>
import jax
import jax.numpy as jnp
from jax.experimental import pallas as pl
from jax.experimental.pallas import tpu as pltpu


# ----------------------------- model dims (small) -----------------------------
VOCAB_SIZE = 500
EMBED_D = 128          # vocab_embed_d
HIDDEN = 128           # hidden_size
OUT_D = 12             # output_size
SEQ = 8
BATCH = 2


# --------------------------------- kernel -------------------------------------
def lstm_vocab_kernel(tok_ref,     # SMEM (S, B) int32   [scalar prefetch]
                      emb_ref,     # VMEM (Vpad, D) f32  embedding table
                      wih_ref,     # VMEM (D, 4H) f32    W_ih^T
                      bih_ref,     # VMEM (1, 4H) f32    b_ih + b_hh
                      whh_ref,     # VMEM (H, 4H) bf16   W_hh^T
                      wout_ref,    # VMEM (H, OUT) bf16  W_out^T
                      bout_ref,    # VMEM (1, OUT) f32   b_out
                      o_ref,       # VMEM (S, OUT) f32   Linear(h_t)[last batch]
                      x_scr,       # VMEM (S, D) f32     gathered embeddings
                      xp_scr,      # VMEM (S, 4H) f32    input projection
                      hs_scr):     # VMEM (S, H) f32     h_t history
    S, B = tok_ref.shape
    H = whh_ref.shape[0]

    # ---- Prologue 1: embedding gather for the LAST batch element only ----
    # (padding_idx=0 is handled by the zeroed row 0 of the table itself.)
    for t in range(S):
        tok = tok_ref[t, B - 1]
        x_scr[t:t + 1, :] = emb_ref[pl.ds(tok, 1), :]

    # ---- Prologue 2: input projection, one matmul off the serial path ----
    # Kept in f32 (runs once, feeds every timestep; accuracy > speed here).
    xp_scr[...] = (jnp.dot(x_scr[...], wih_ref[...],
                           preferred_element_type=jnp.float32)
                   + bih_ref[...])

    # ---- Fully-unrolled 8-step recurrence (gate order i, f, g, o) ----
    h = jnp.zeros((1, H), jnp.float32)
    c = jnp.zeros((1, H), jnp.float32)
    for t in range(S):
        h_bf = h.astype(jnp.bfloat16)        # bf16 MXU operand, f32 accumulate

        def gate_pre(g, _t=t, _h=h_bf):
            lo, hi = g * H, (g + 1) * H
            # Per-gate 128-column slice, loaded from VMEM at the use site.
            return xp_scr[_t:_t + 1, lo:hi] + jnp.dot(
                _h, whh_ref[:, lo:hi], preferred_element_type=jnp.float32)

        # Apply each nonlinearity as soon as its gate slice is ready so EUP
        # (sigmoid/tanh) overlaps the remaining MXU work of this timestep.
        i_g = jax.nn.sigmoid(gate_pre(0))
        f_g = jax.nn.sigmoid(gate_pre(1))
        g_g = jnp.tanh(gate_pre(2))
        o_g = jax.nn.sigmoid(gate_pre(3))

        c = f_g * c + i_g * g_g
        h = o_g * jnp.tanh(c)
        hs_scr[t:t + 1, :] = h               # lane-dense (1,128) store

    # ---- Epilogue: output Linear over all timesteps, one store ----
    o_ref[...] = (jnp.dot(hs_scr[...].astype(jnp.bfloat16), wout_ref[...],
                          preferred_element_type=jnp.float32)
                  + bout_ref[...])


def lstm_vocab_pallas(tokens, emb, w_ih_t, b_ihhh, w_hh_t, w_out_t, b_out):
    """tokens: (S, B) int32.  Returns (S, OUT) f32 == PyTorch output[:, -1, :]."""
    S, B = tokens.shape
    V, D = emb.shape
    H, H4 = w_hh_t.shape
    OUT = w_out_t.shape[1]

    return pl.pallas_call(
        lstm_vocab_kernel,
        out_shape=jax.ShapeDtypeStruct((S, OUT), jnp.float32),
        grid_spec=pltpu.PrefetchScalarGridSpec(
            num_scalar_prefetch=1,                 # token ids -> SMEM
            grid=(1,),                             # single invocation
            in_specs=[
                pl.BlockSpec((V, D), lambda i, tok: (0, 0)),     # emb table
                pl.BlockSpec((D, H4), lambda i, tok: (0, 0)),    # W_ih^T
                pl.BlockSpec((1, H4), lambda i, tok: (0, 0)),    # b_ih + b_hh
                pl.BlockSpec((H, H4), lambda i, tok: (0, 0)),    # W_hh^T (bf16)
                pl.BlockSpec((H, OUT), lambda i, tok: (0, 0)),   # W_out^T (bf16)
                pl.BlockSpec((1, OUT), lambda i, tok: (0, 0)),   # b_out
            ],
            out_specs=pl.BlockSpec((S, OUT), lambda i, tok: (0, 0)),
            scratch_shapes=[
                pltpu.VMEM((S, D), jnp.float32),    # gathered embedding rows
                pltpu.VMEM((S, H4), jnp.float32),   # x_proj (stays in VMEM)
                pltpu.VMEM((S, H), jnp.float32),    # h_t history (last batch)
            ],
        ),
        compiler_params=pltpu.CompilerParams(
            dimension_semantics=("arbitrary",),
        ),
    )(tokens, emb, w_ih_t, b_ihhh, w_hh_t, w_out_t, b_out)


# ------------------------------ parameter setup --------------------------------
def init_params(key):
    k_emb, k_wih, k_whh, k_bih, k_bhh, k_wout, k_bout = jax.random.split(key, 7)
    k = 1.0 / jnp.sqrt(HIDDEN)

    emb = jax.random.normal(k_emb, (VOCAB_SIZE, EMBED_D), jnp.float32)
    emb = emb.at[0].set(0.0)  # padding_idx=0

    w_ih = jax.random.uniform(k_wih, (4 * HIDDEN, EMBED_D), jnp.float32, -k, k)
    w_hh = jax.random.uniform(k_whh, (4 * HIDDEN, HIDDEN), jnp.float32, -k, k)
    b_ih = jax.random.uniform(k_bih, (4 * HIDDEN,), jnp.float32, -k, k)
    b_hh = jax.random.uniform(k_bhh, (4 * HIDDEN,), jnp.float32, -k, k)

    ko = 1.0 / jnp.sqrt(HIDDEN)
    w_out = jax.random.uniform(k_wout, (OUT_D, HIDDEN), jnp.float32, -ko, ko)
    b_out = jax.random.uniform(k_bout, (OUT_D,), jnp.float32, -ko, ko)

    return dict(emb=emb, w_ih=w_ih, w_hh=w_hh, b_ih=b_ih, b_hh=b_hh,
                w_out=w_out, b_out=b_out)


def prepare_kernel_params(params):
    """One-time (outside jit) weight prep: transposes, bf16 casts, vocab pad."""
    V, _ = params["emb"].shape
    v_pad = (-V) % 8                                   # sublane-clean table
    emb = jnp.pad(params["emb"], ((0, v_pad), (0, 0)))
    w_ih_t = params["w_ih"].T.astype(jnp.float32)                 # (D, 4H)
    b_ihhh = (params["b_ih"] + params["b_hh"]).reshape(1, -1)     # (1, 4H)
    w_hh_t = params["w_hh"].T.astype(jnp.bfloat16)                # (H, 4H)
    w_out_t = params["w_out"].T.astype(jnp.bfloat16)              # (H, OUT)
    b_out = params["b_out"].reshape(1, -1)                        # (1, OUT)
    return dict(emb=emb, w_ih_t=w_ih_t, b_ihhh=b_ihhh, w_hh_t=w_hh_t,
                w_out_t=w_out_t, b_out=b_out)


@jax.jit
def forward(tokens, kp):
    # The whole forward pass is exactly one pallas_call (one XLA launch).
    return lstm_vocab_pallas(tokens, kp["emb"], kp["w_ih_t"], kp["b_ihhh"],
                             kp["w_hh_t"], kp["w_out_t"], kp["b_out"])


# ------------------------------ pure-JAX reference ------------------------------
def forward_ref(tokens, params):
    x = jnp.take(params["emb"], tokens, axis=0)    # (S, B, D)
    S, B, _ = x.shape
    H = HIDDEN
    h = jnp.zeros((B, H), jnp.float32)
    c = jnp.zeros((B, H), jnp.float32)
    hs = []
    for t in range(S):
        gates = x[t] @ params["w_ih"].T + params["b_ih"] \
              + h @ params["w_hh"].T + params["b_hh"]
        i_g = jax.nn.sigmoid(gates[:, 0 * H:1 * H])
        f_g = jax.nn.sigmoid(gates[:, 1 * H:2 * H])
        g_g = jnp.tanh(gates[:, 2 * H:3 * H])
        o_g = jax.nn.sigmoid(gates[:, 3 * H:4 * H])
        c = f_g * c + i_g * g_g
        h = o_g * jnp.tanh(c)
        hs.append(h)
    out = jnp.stack(hs, axis=0)                    # (S, B, H)
    y = out @ params["w_out"].T + params["b_out"]  # (S, B, OUT)
    return y[:, -1, :]                             # (S, OUT)


# ----------------------------------- main ---------------------------------------
if __name__ == "__main__":
    key = jax.random.PRNGKey(0)
    k_params, k_tok = jax.random.split(key)
    params = init_params(k_params)
    kparams = prepare_kernel_params(params)
    tokens = jax.random.randint(k_tok, (SEQ, BATCH), 0, VOCAB_SIZE, jnp.int32)

    out = forward(tokens, kparams)
    out = jax.block_until_ready(out)

    ref = forward_ref(tokens, params)
    assert out.shape == (SEQ, OUT_D), out.shape
    # bf16 MXU operands (f32 accumulation) compound a little error over the
    # 8 recurrent steps; tolerance reflects that.
    assert jnp.allclose(out, ref, atol=2e-2, rtol=2e-2), (
        float(jnp.max(jnp.abs(out - ref))))

    print("KERNEL_OK")
</pallas_src>

<mosaic_0001>
module attributes {stable_mosaic.version = 11 : i64} {
  func.func @lstm_vocab_kernel(%arg0: i32, %arg1: memref<8x2xi32, #tpu.memory_space<smem>>, %arg2: memref<504x128xf32, #tpu.memory_space<vmem>>, %arg3: memref<128x512xf32, #tpu.memory_space<vmem>>, %arg4: memref<1x512xf32, #tpu.memory_space<vmem>>, %arg5: memref<128x512xbf16, #tpu.memory_space<vmem>>, %arg6: memref<128x12xbf16, #tpu.memory_space<vmem>>, %arg7: memref<1x12xf32, #tpu.memory_space<vmem>>, %arg8: memref<8x12xf32, #tpu.memory_space<vmem>>, %arg9: memref<8x128xf32, #tpu.memory_space<vmem>>, %arg10: memref<8x512xf32, #tpu.memory_space<vmem>>, %arg11: memref<8x128xf32, #tpu.memory_space<vmem>>) attributes {dimension_semantics = [#tpu.dimension_semantics<arbitrary>], iteration_bounds = array<i64: 1>, scalar_prefetch = 1 : i64, scratch_operands = 3 : i64, tpu.core_type = #tpu.core_type<tc>, window_params = [{pipeline_mode = #tpu.pipeline_mode<synchronous>, transform_indices = @transform_0, window_bounds = array<i64: 504, 128>}, {pipeline_mode = #tpu.pipeline_mode<synchronous>, transform_indices = @transform_1, window_bounds = array<i64: 128, 512>}, {pipeline_mode = #tpu.pipeline_mode<synchronous>, transform_indices = @transform_2, window_bounds = array<i64: 1, 512>}, {pipeline_mode = #tpu.pipeline_mode<synchronous>, transform_indices = @transform_3, window_bounds = array<i64: 128, 512>}, {pipeline_mode = #tpu.pipeline_mode<synchronous>, transform_indices = @transform_4, window_bounds = array<i64: 128, 12>}, {pipeline_mode = #tpu.pipeline_mode<synchronous>, transform_indices = @transform_5, window_bounds = array<i64: 1, 12>}, {pipeline_mode = #tpu.pipeline_mode<synchronous>, transform_indices = @transform_6, window_bounds = array<i64: 8, 12>}]} {
    %c0 = arith.constant 0 : index
    %c1 = arith.constant 1 : index
    %0 = memref.load %arg1[%c0, %c1] : memref<8x2xi32, #tpu.memory_space<smem>>
    %1 = arith.index_cast %0 : i32 to index
    %c0_0 = arith.constant 0 : index
    %2 = vector.load %arg2[%1, %c0_0] : memref<504x128xf32, #tpu.memory_space<vmem>>, vector<1x128xf32>
    %c0_1 = arith.constant 0 : index
    %c0_2 = arith.constant 0 : index
    %3 = vector.load %arg9[%c0_1, %c0_2] : memref<8x128xf32, #tpu.memory_space<vmem>>, vector<1x128xf32>
    tpu.vector_store %arg9[%c0_1, %c0_2], %2 {strides = array<i32>} : memref<8x128xf32, #tpu.memory_space<vmem>>, vector<1x128xf32>,
    %c1_3 = arith.constant 1 : index
    %c1_4 = arith.constant 1 : index
    %4 = memref.load %arg1[%c1_3, %c1_4] : memref<8x2xi32, #tpu.memory_space<smem>>
    %5 = arith.index_cast %4 : i32 to index
    %c0_5 = arith.constant 0 : index
    %6 = vector.load %arg2[%5, %c0_5] : memref<504x128xf32, #tpu.memory_space<vmem>>, vector<1x128xf32>
    %c1_6 = arith.constant 1 : index
    %c0_7 = arith.constant 0 : index
    %7 = vector.load %arg9[%c1_6, %c0_7] : memref<8x128xf32, #tpu.memory_space<vmem>>, vector<1x128xf32>
    tpu.vector_store %arg9[%c1_6, %c0_7], %6 {strides = array<i32>} : memref<8x128xf32, #tpu.memory_space<vmem>>, vector<1x128xf32>,
    %c2 = arith.constant 2 : index
    %c1_8 = arith.constant 1 : index
    %8 = memref.load %arg1[%c2, %c1_8] : memref<8x2xi32, #tpu.memory_space<smem>>
    %9 = arith.index_cast %8 : i32 to index
    %c0_9 = arith.constant 0 : index
    %10 = vector.load %arg2[%9, %c0_9] : memref<504x128xf32, #tpu.memory_space<vmem>>, vector<1x128xf32>
    %c2_10 = arith.constant 2 : index
    %c0_11 = arith.constant 0 : index
    %11 = vector.load %arg9[%c2_10, %c0_11] : memref<8x128xf32, #tpu.memory_space<vmem>>, vector<1x128xf32>
    tpu.vector_store %arg9[%c2_10, %c0_11], %10 {strides = array<i32>} : memref<8x128xf32, #tpu.memory_space<vmem>>, vector<1x128xf32>,
    %c3 = arith.constant 3 : index
    %c1_12 = arith.constant 1 : index
    %12 = memref.load %arg1[%c3, %c1_12] : memref<8x2xi32, #tpu.memory_space<smem>>
    %13 = arith.index_cast %12 : i32 to index
    %c0_13 = arith.constant 0 : index
    %14 = vector.load %arg2[%13, %c0_13] : memref<504x128xf32, #tpu.memory_space<vmem>>, vector<1x128xf32>
    %c3_14 = arith.constant 3 : index
    %c0_15 = arith.constant 0 : index
    %15 = vector.load %arg9[%c3_14, %c0_15] : memref<8x128xf32, #tpu.memory_space<vmem>>, vector<1x128xf32>
    tpu.vector_store %arg9[%c3_14, %c0_15], %14 {strides = array<i32>} : memref<8x128xf32, #tpu.memory_space<vmem>>, vector<1x128xf32>,
    %c4 = arith.constant 4 : index
    %c1_16 = arith.constant 1 : index
    %16 = memref.load %arg1[%c4, %c1_16] : memref<8x2xi32, #tpu.memory_space<smem>>
    %17 = arith.index_cast %16 : i32 to index
    %c0_17 = arith.constant 0 : index
    %18 = vector.load %arg2[%17, %c0_17] : memref<504x128xf32, #tpu.memory_space<vmem>>, vector<1x128xf32>
    %c4_18 = arith.constant 4 : index
    %c0_19 = arith.constant 0 : index
    %19 = vector.load %arg9[%c4_18, %c0_19] : memref<8x128xf32, #tpu.memory_space<vmem>>, vector<1x128xf32>
    tpu.vector_store %arg9[%c4_18, %c0_19], %18 {strides = array<i32>} : memref<8x128xf32, #tpu.memory_space<vmem>>, vector<1x128xf32>,
    %c5 = arith.constant 5 : index
    %c1_20 = arith.constant 1 : index
    %20 = memref.load %arg1[%c5, %c1_20] : memref<8x2xi32, #tpu.memory_space<smem>>
    %21 = arith.index_cast %20 : i32 to index
    %c0_21 = arith.constant 0 : index
    %22 = vector.load %arg2[%21, %c0_21] : memref<504x128xf32, #tpu.memory_space<vmem>>, vector<1x128xf32>
    %c5_22 = arith.constant 5 : index
    %c0_23 = arith.constant 0 : index
    %23 = vector.load %arg9[%c5_22, %c0_23] : memref<8x128xf32, #tpu.memory_space<vmem>>, vector<1x128xf32>
    tpu.vector_store %arg9[%c5_22, %c0_23], %22 {strides = array<i32>} : memref<8x128xf32, #tpu.memory_space<vmem>>, vector<1x128xf32>,
    %c6 = arith.constant 6 : index
    %c1_24 = arith.constant 1 : index
    %24 = memref.load %arg1[%c6, %c1_24] : memref<8x2xi32, #tpu.memory_space<smem>>
    %25 = arith.index_cast %24 : i32 to index
    %c0_25 = arith.constant 0 : index
    %26 = vector.load %arg2[%25, %c0_25] : memref<504x128xf32, #tpu.memory_space<vmem>>, vector<1x128xf32>
    %c6_26 = arith.constant 6 : index
    %c0_27 = arith.constant 0 : index
    %27 = vector.load %arg9[%c6_26, %c0_27] : memref<8x128xf32, #tpu.memory_space<vmem>>, vector<1x128xf32>
    tpu.vector_store %arg9[%c6_26, %c0_27], %26 {strides = array<i32>} : memref<8x128xf32, #tpu.memory_space<vmem>>, vector<1x128xf32>,
    %c7 = arith.constant 7 : index
    %c1_28 = arith.constant 1 : index
    %28 = memref.load %arg1[%c7, %c1_28] : memref<8x2xi32, #tpu.memory_space<smem>>
    %29 = arith.index_cast %28 : i32 to index
    %c0_29 = arith.constant 0 : index
    %30 = vector.load %arg2[%29, %c0_29] : memref<504x128xf32, #tpu.memory_space<vmem>>, vector<1x128xf32>
    %c7_30 = arith.constant 7 : index
    %c0_31 = arith.constant 0 : index
    %31 = vector.load %arg9[%c7_30, %c0_31] : memref<8x128xf32, #tpu.memory_space<vmem>>, vector<1x128xf32>
    tpu.vector_store %arg9[%c7_30, %c0_31], %30 {strides = array<i32>} : memref<8x128xf32, #tpu.memory_space<vmem>>, vector<1x128xf32>,
    %c0_32 = arith.constant 0 : index
    %c0_33 = arith.constant 0 : index
    %32 = vector.load %arg9[%c0_32, %c0_33] : memref<8x128xf32, #tpu.memory_space<vmem>>, vector<8x128xf32>
    %c0_34 = arith.constant 0 : index
    %c0_35 = arith.constant 0 : index
    %33 = vector.load %arg3[%c0_34, %c0_35] : memref<128x512xf32, #tpu.memory_space<vmem>>, vector<128x512xf32>
    %cst = arith.constant dense<0.000000e+00> : vector<8x512xf32>
    %34 = tpu.matmul %32, %33, %cst {dimension_numbers = #tpu.dot_dimension_numbers<[1], [0], [0], [1], [0, 0, 1, 1], [], []>} : vector<8x128xf32>, vector<128x512xf32>, vector<8x512xf32> -> vector<8x512xf32>
    %c0_36 = arith.constant 0 : index
    %c0_37 = arith.constant 0 : index
    %35 = vector.load %arg4[%c0_36, %c0_37] : memref<1x512xf32, #tpu.memory_space<vmem>>, vector<1x512xf32>
    %36 = vector.broadcast %35 : vector<1x512xf32> to vector<8x512xf32>
    %37 = arith.addf %34, %36 : vector<8x512xf32>
    %c0_38 = arith.constant 0 : index
    %c0_39 = arith.constant 0 : index
    %38 = vector.load %arg10[%c0_38, %c0_39] : memref<8x512xf32, #tpu.memory_space<vmem>>, vector<8x512xf32>
    tpu.vector_store %arg10[%c0_38, %c0_39], %37 {strides = array<i32>} : memref<8x512xf32, #tpu.memory_space<vmem>>, vector<8x512xf32>,
    %cst_40 = arith.constant 0.000000e+00 : f32
    %39 = vector.broadcast %cst_40 : f32 to vector<1x128xf32>
    %cst_41 = arith.constant 0.000000e+00 : f32
    %40 = vector.broadcast %cst_41 : f32 to vector<1x128xf32>
    %41 = arith.truncf %39 : vector<1x128xf32> to vector<1x128xbf16>
    %c0_42 = arith.constant 0 : index
    %c0_43 = arith.constant 0 : index
    %42 = vector.load %arg10[%c0_42, %c0_43] : memref<8x512xf32, #tpu.memory_space<vmem>>, vector<1x128xf32>
    %c0_44 = arith.constant 0 : index
    %c0_45 = arith.constant 0 : index
    %43 = vector.load %arg5[%c0_44, %c0_45] : memref<128x512xbf16, #tpu.memory_space<vmem>>, vector<128x128xbf16>
    %cst_46 = arith.constant dense<0.000000e+00> : vector<1x128xf32>
    %44 = tpu.matmul %41, %43, %cst_46 {dimension_numbers = #tpu.dot_dimension_numbers<[1], [0], [0], [1], [0, 0, 1, 1], [], []>} : vector<1x128xbf16>, vector<128x128xbf16>, vector<1x128xf32> -> vector<1x128xf32>
    %45 = arith.addf %42, %44 : vector<1x128xf32>
    %46 = arith.negf %45 : vector<1x128xf32>
    %47 = math.exp %46 : vector<1x128xf32>
    %cst_47 = arith.constant 1.000000e+00 : f32
    %48 = vector.broadcast %cst_47 : f32 to vector<1x128xf32>
    %49 = arith.addf %48, %47 : vector<1x128xf32>
    %50 = arith.divf %48, %49 : vector<1x128xf32>
    %c0_48 = arith.constant 0 : index
    %c128 = arith.constant 128 : index
    %51 = vector.load %arg10[%c0_48, %c128] : memref<8x512xf32, #tpu.memory_space<vmem>>, vector<1x128xf32>
    %c0_49 = arith.constant 0 : index
    %c128_50 = arith.constant 128 : index
    %52 = vector.load %arg5[%c0_49, %c128_50] : memref<128x512xbf16, #tpu.memory_space<vmem>>, vector<128x128xbf16>
    %cst_51 = arith.constant dense<0.000000e+00> : vector<1x128xf32>
    %53 = tpu.matmul %41, %52, %cst_51 {dimension_numbers = #tpu.dot_dimension_numbers<[1], [0], [0], [1], [0, 0, 1, 1], [], []>} : vector<1x128xbf16>, vector<128x128xbf16>, vector<1x128xf32> -> vector<1x128xf32>
    %54 = arith.addf %51, %53 : vector<1x128xf32>
    %55 = arith.negf %54 : vector<1x128xf32>
    %56 = math.exp %55 : vector<1x128xf32>
    %cst_52 = arith.constant 1.000000e+00 : f32
    %57 = vector.broadcast %cst_52 : f32 to vector<1x128xf32>
    %58 = arith.addf %57, %56 : vector<1x128xf32>
    %59 = arith.divf %57, %58 : vector<1x128xf32>
    %c0_53 = arith.constant 0 : index
    %c256 = arith.constant 256 : index
    %60 = vector.load %arg10[%c0_53, %c256] : memref<8x512xf32, #tpu.memory_space<vmem>>, vector<1x128xf32>
    %c0_54 = arith.constant 0 : index
    %c256_55 = arith.constant 256 : index
    %61 = vector.load %arg5[%c0_54, %c256_55] : memref<128x512xbf16, #tpu.memory_space<vmem>>, vector<128x128xbf16>
    %cst_56 = arith.constant dense<0.000000e+00> : vector<1x128xf32>
    %62 = tpu.matmul %41, %61, %cst_56 {dimension_numbers = #tpu.dot_dimension_numbers<[1], [0], [0], [1], [0, 0, 1, 1], [], []>} : vector<1x128xbf16>, vector<128x128xbf16>, vector<1x128xf32> -> vector<1x128xf32>
    %63 = arith.addf %60, %62 : vector<1x128xf32>
    %64 = math.tanh %63 : vector<1x128xf32>
    %c0_57 = arith.constant 0 : index
    %c384 = arith.constant 384 : index
    %65 = vector.load %arg10[%c0_57, %c384] : memref<8x512xf32, #tpu.memory_space<vmem>>, vector<1x128xf32>
    %c0_58 = arith.constant 0 : index
    %c384_59 = arith.constant 384 : index
    %66 = vector.load %arg5[%c0_58, %c384_59] : memref<128x512xbf16, #tpu.memory_space<vmem>>, vector<128x128xbf16>
    %cst_60 = arith.constant dense<0.000000e+00> : vector<1x128xf32>
    %67 = tpu.matmul %41, %66, %cst_60 {dimension_numbers = #tpu.dot_dimension_numbers<[1], [0], [0], [1], [0, 0, 1, 1], [], []>} : vector<1x128xbf16>, vector<128x128xbf16>, vector<1x128xf32> -> vector<1x128xf32>
    %68 = arith.addf %65, %67 : vector<1x128xf32>
    %69 = arith.negf %68 : vector<1x128xf32>
    %70 = math.exp %69 : vector<1x128xf32>
    %cst_61 = arith.constant 1.000000e+00 : f32
    %71 = vector.broadcast %cst_61 : f32 to vector<1x128xf32>
    %72 = arith.addf %71, %70 : vector<1x128xf32>
    %73 = arith.divf %71, %72 : vector<1x128xf32>
    %74 = arith.mulf %59, %40 : vector<1x128xf32>
    %75 = arith.mulf %50, %64 : vector<1x128xf32>
    %76 = arith.addf %74, %75 : vector<1x128xf32>
    %77 = math.tanh %76 : vector<1x128xf32>
    %78 = arith.mulf %73, %77 : vector<1x128xf32>
    %c0_62 = arith.constant 0 : index
    %c0_63 = arith.constant 0 : index
    %79 = vector.load %arg11[%c0_62, %c0_63] : memref<8x128xf32, #tpu.memory_space<vmem>>, vector<1x128xf32>
    tpu.vector_store %arg11[%c0_62, %c0_63], %78 {strides = array<i32>} : memref<8x128xf32, #tpu.memory_space<vmem>>, vector<1x128xf32>,
    %80 = arith.truncf %78 : vector<1x128xf32> to vector<1x128xbf16>
    %c1_64 = arith.constant 1 : index
    %c0_65 = arith.constant 0 : index
    %81 = vector.load %arg10[%c1_64, %c0_65] : memref<8x512xf32, #tpu.memory_space<vmem>>, vector<1x128xf32>
    %c0_66 = arith.constant 0 : index
    %c0_67 = arith.constant 0 : index
    %82 = vector.load %arg5[%c0_66, %c0_67] : memref<128x512xbf16, #tpu.memory_space<vmem>>, vector<128x128xbf16>
    %cst_68 = arith.constant dense<0.000000e+00> : vector<1x128xf32>
    %83 = tpu.matmul %80, %82, %cst_68 {dimension_numbers = #tpu.dot_dimension_numbers<[1], [0], [0], [1], [0, 0, 1, 1], [], []>} : vector<1x128xbf16>, vector<128x128xbf16>, vector<1x128xf32> -> vector<1x128xf32>
    %84 = arith.addf %81, %83 : vector<1x128xf32>
    %85 = arith.negf %84 : vector<1x128xf32>
    %86 = math.exp %85 : vector<1x128xf32>
    %cst_69 = arith.constant 1.000000e+00 : f32
    %87 = vector.broadcast %cst_69 : f32 to vector<1x128xf32>
    %88 = arith.addf %87, %86 : vector<1x128xf32>
    %89 = arith.divf %87, %88 : vector<1x128xf32>
    %c1_70 = arith.constant 1 : index
    %c128_71 = arith.constant 128 : index
    %90 = vector.load %arg10[%c1_70, %c128_71] : memref<8x512xf32, #tpu.memory_space<vmem>>, vector<1x128xf32>
    %c0_72 = arith.constant 0 : index
    %c128_73 = arith.constant 128 : index
    %91 = vector.load %arg5[%c0_72, %c128_73] : memref<128x512xbf16, #tpu.memory_space<vmem>>, vector<128x128xbf16>
    %cst_74 = arith.constant dense<0.000000e+00> : vector<1x128xf32>
    %92 = tpu.matmul %80, %91, %cst_74 {dimension_numbers = #tpu.dot_dimension_numbers<[1], [0], [0], [1], [0, 0, 1, 1], [], []>} : vector<1x128xbf16>, vector<128x128xbf16>, vector<1x128xf32> -> vector<1x128xf32>
    %93 = arith.addf %90, %92 : vector<1x128xf32>
    %94 = arith.negf %93 : vector<1x128xf32>
    %95 = math.exp %94 : vector<1x128xf32>
    %cst_75 = arith.constant 1.000000e+00 : f32
    %96 = vector.broadcast %cst_75 : f32 to vector<1x128xf32>
    %97 = arith.addf %96, %95 : vector<1x128xf32>
    %98 = arith.divf %96, %97 : vector<1x128xf32>
    %c1_76 = arith.constant 1 : index
    %c256_77 = arith.constant 256 : index
    %99 = vector.load %arg10[%c1_76, %c256_77] : memref<8x512xf32, #tpu.memory_space<vmem>>, vector<1x128xf32>
    %c0_78 = arith.constant 0 : index
    %c256_79 = arith.constant 256 : index
    %100 = vector.load %arg5[%c0_78, %c256_79] : memref<128x512xbf16, #tpu.memory_space<vmem>>, vector<128x128xbf16>
    %cst_80 = arith.constant dense<0.000000e+00> : vector<1x128xf32>
    %101 = tpu.matmul %80, %100, %cst_80 {dimension_numbers = #tpu.dot_dimension_numbers<[1], [0], [0], [1], [0, 0, 1, 1], [], []>} : vector<1x128xbf16>, vector<128x128xbf16>, vector<1x128xf32> -> vector<1x128xf32>
    %102 = arith.addf %99, %101 : vector<1x128xf32>
    %103 = math.tanh %102 : vector<1x128xf32>
    %c1_81 = arith.constant 1 : index
    %c384_82 = arith.constant 384 : index
    %104 = vector.load %arg10[%c1_81, %c384_82] : memref<8x512xf32, #tpu.memory_space<vmem>>, vector<1x128xf32>
    %c0_83 = arith.constant 0 : index
    %c384_84 = arith.constant 384 : index
    %105 = vector.load %arg5[%c0_83, %c384_84] : memref<128x512xbf16, #tpu.memory_space<vmem>>, vector<128x128xbf16>
    %cst_85 = arith.constant dense<0.000000e+00> : vector<1x128xf32>
    %106 = tpu.matmul %80, %105, %cst_85 {dimension_numbers = #tpu.dot_dimension_numbers<[1], [0], [0], [1], [0, 0, 1, 1], [], []>} : vector<1x128xbf16>, vector<128x128xbf16>, vector<1x128xf32> -> vector<1x128xf32>
    %107 = arith.addf %104, %106 : vector<1x128xf32>
    %108 = arith.negf %107 : vector<1x128xf32>
    %109 = math.exp %108 : vector<1x128xf32>
    %cst_86 = arith.constant 1.000000e+00 : f32
    %110 = vector.broadcast %cst_86 : f32 to vector<1x128xf32>
    %111 = arith.addf %110, %109 : vector<1x128xf32>
    %112 = arith.divf %110, %111 : vector<1x128xf32>
    %113 = arith.mulf %98, %76 : vector<1x128xf32>
    %114 = arith.mulf %89, %103 : vector<1x128xf32>
    %115 = arith.addf %113, %114 : vector<1x128xf32>
    %116 = math.tanh %115 : vector<1x128xf32>
    %117 = arith.mulf %112, %116 : vector<1x128xf32>
    %c1_87 = arith.constant 1 : index
    %c0_88 = arith.constant 0 : index
    %118 = vector.load %arg11[%c1_87, %c0_88] : memref<8x128xf32, #tpu.memory_space<vmem>>, vector<1x128xf32>
    tpu.vector_store %arg11[%c1_87, %c0_88], %117 {strides = array<i32>} : memref<8x128xf32, #tpu.memory_space<vmem>>, vector<1x128xf32>,
    %119 = arith.truncf %117 : vector<1x128xf32> to vector<1x128xbf16>
    %c2_89 = arith.constant 2 : index
    %c0_90 = arith.constant 0 : index
    %120 = vector.load %arg10[%c2_89, %c0_90] : memref<8x512xf32, #tpu.memory_space<vmem>>, vector<1x128xf32>
    %c0_91 = arith.constant 0 : index
    %c0_92 = arith.constant 0 : index
    %121 = vector.load %arg5[%c0_91, %c0_92] : memref<128x512xbf16, #tpu.memory_space<vmem>>, vector<128x128xbf16>
    %cst_93 = arith.constant dense<0.000000e+00> : vector<1x128xf32>
    %122 = tpu.matmul %119, %121, %cst_93 {dimension_numbers = #tpu.dot_dimension_numbers<[1], [0], [0], [1], [0, 0, 1, 1], [], []>} : vector<1x128xbf16>, vector<128x128xbf16>, vector<1x128xf32> -> vector<1x128xf32>
    %123 = arith.addf %120, %122 : vector<1x128xf32>
    %124 = arith.negf %123 : vector<1x128xf32>
    %125 = math.exp %124 : vector<1x128xf32>
    %cst_94 = arith.constant 1.000000e+00 : f32
    %126 = vector.broadcast %cst_94 : f32 to vector<1x128xf32>
    %127 = arith.addf %126, %125 : vector<1x128xf32>
    %128 = arith.divf %126, %127 : vector<1x128xf32>
    %c2_95 = arith.constant 2 : index
    %c128_96 = arith.constant 128 : index
    %129 = vector.load %arg10[%c2_95, %c128_96] : memref<8x512xf32, #tpu.memory_space<vmem>>, vector<1x128xf32>
    %c0_97 = arith.constant 0 : index
    %c128_98 = arith.constant 128 : index
    %130 = vector.load %arg5[%c0_97, %c128_98] : memref<128x512xbf16, #tpu.memory_space<vmem>>, vector<128x128xbf16>
    %cst_99 = arith.constant dense<0.000000e+00> : vector<1x128xf32>
    %131 = tpu.matmul %119, %130, %cst_99 {dimension_numbers = #tpu.dot_dimension_numbers<[1], [0], [0], [1], [0, 0, 1, 1], [], []>} : vector<1x128xbf16>, vector<128x128xbf16>, vector<1x128xf32> -> vector<1x128xf32>
    %132 = arith.addf %129, %131 : vector<1x128xf32>
    %133 = arith.negf %132 : vector<1x128xf32>
    %134 = math.exp %133 : vector<1x128xf32>
    %cst_100 = arith.constant 1.000000e+00 : f32
    %135 = vector.broadcast %cst_100 : f32 to vector<1x128xf32>
    %136 = arith.addf %135, %134 : vector<1x128xf32>
    %137 = arith.divf %135, %136 : vector<1x128xf32>
    %c2_101 = arith.constant 2 : index
    %c256_102 = arith.constant 256 : index
    %138 = vector.load %arg10[%c2_101, %c256_102] : memref<8x512xf32, #tpu.memory_space<vmem>>, vector<1x128xf32>
    %c0_103 = arith.constant 0 : index
    %c256_104 = arith.constant 256 : index
    %139 = vector.load %arg5[%c0_103, %c256_104] : memref<128x512xbf16, #tpu.memory_space<vmem>>, vector<128x128xbf16>
    %cst_105 = arith.constant dense<0.000000e+00> : vector<1x128xf32>
    %140 = tpu.matmul %119, %139, %cst_105 {dimension_numbers = #tpu.dot_dimension_numbers<[1], [0], [0], [1], [0, 0, 1, 1], [], []>} : vector<1x128xbf16>, vector<128x128xbf16>, vector<1x128xf32> -> vector<1x128xf32>
    %141 = arith.addf %138, %140 : vector<1x128xf32>
    %142 = math.tanh %141 : vector<1x128xf32>
    %c2_106 = arith.constant 2 : index
    %c384_107 = arith.constant 384 : index
    %143 = vector.load %arg10[%c2_106, %c384_107] : memref<8x512xf32, #tpu.memory_space<vmem>>, vector<1x128xf32>
    %c0_108 = arith.constant 0 : index
    %c384_109 = arith.constant 384 : index
    %144 = vector.load %arg5[%c0_108, %c384_109] : memref<128x512xbf16, #tpu.memory_space<vmem>>, vector<128x128xbf16>
    %cst_110 = arith.constant dense<0.000000e+00> : vector<1x128xf32>
    %145 = tpu.matmul %119, %144, %cst_110 {dimension_numbers = #tpu.dot_dimension_numbers<[1], [0], [0], [1], [0, 0, 1, 1], [], []>} : vector<1x128xbf16>, vector<128x128xbf16>, vector<1x128xf32> -> vector<1x128xf32>
    %146 = arith.addf %143, %145 : vector<1x128xf32>
    %147 = arith.negf %146 : vector<1x128xf32>
    %148 = math.exp %147 : vector<1x128xf32>
    %cst_111 = arith.constant 1.000000e+00 : f32
    %149 = vector.broadcast %cst_111 : f32 to vector<1x128xf32>
    %150 = arith.addf %149, %148 : vector<1x128xf32>
    %151 = arith.divf %149, %150 : vector<1x128xf32>
    %152 = arith.mulf %137, %115 : vector<1x128xf32>
    %153 = arith.mulf %128, %142 : vector<1x128xf32>
    %154 = arith.addf %152, %153 : vector<1x128xf32>
    %155 = math.tanh %154 : vector<1x128xf32>
    %156 = arith.mulf %151, %155 : vector<1x128xf32>
    %c2_112 = arith.constant 2 : index
    %c0_113 = arith.constant 0 : index
    %157 = vector.load %arg11[%c2_112, %c0_113] : memref<8x128xf32, #tpu.memory_space<vmem>>, vector<1x128xf32>
    tpu.vector_store %arg11[%c2_112, %c0_113], %156 {strides = array<i32>} : memref<8x128xf32, #tpu.memory_space<vmem>>, vector<1x128xf32>,
    %158 = arith.truncf %156 : vector<1x128xf32> to vector<1x128xbf16>
    %c3_114 = arith.constant 3 : index
    %c0_115 = arith.constant 0 : index
    %159 = vector.load %arg10[%c3_114, %c0_115] : memref<8x512xf32, #tpu.memory_space<vmem>>, vector<1x128xf32>
    %c0_116 = arith.constant 0 : index
    %c0_117 = arith.constant 0 : index
    %160 = vector.load %arg5[%c0_116, %c0_117] : memref<128x512xbf16, #tpu.memory_space<vmem>>, vector<128x128xbf16>
    %cst_118 = arith.constant dense<0.000000e+00> : vector<1x128xf32>
    %161 = tpu.matmul %158, %160, %cst_118 {dimension_numbers = #tpu.dot_dimension_numbers<[1], [0], [0], [1], [0, 0, 1, 1], [], []>} : vector<1x128xbf16>, vector<128x128xbf16>, vector<1x128xf32> -> vector<1x128xf32>
    %162 = arith.addf %159, %161 : vector<1x128xf32>
    %163 = arith.negf %162 : vector<1x128xf32>
    %164 = math.exp %163 : vector<1x128xf32>
    %cst_119 = arith.constant 1.000000e+00 : f32
    %165 = vector.broadcast %cst_119 : f32 to vector<1x128xf32>
    %166 = arith.addf %165, %164 : vector<1x128xf32>
    %167 = arith.divf %165, %166 : vector<1x128xf32>
    %c3_120 = arith.constant 3 : index
    %c128_121 = arith.constant 128 : index
    %168 = vector.load %arg10[%c3_120, %c128_121] : memref<8x512xf32, #tpu.memory_space<vmem>>, vector<1x128xf32>
    %c0_122 = arith.constant 0 : index
    %c128_123 = arith.constant 128 : index
    %169 = vector.load %arg5[%c0_122, %c128_123] : memref<128x512xbf16, #tpu.memory_space<vmem>>, vector<128x128xbf16>
    %cst_124 = arith.constant dense<0.000000e+00> : vector<1x128xf32>
    %170 = tpu.matmul %158, %169, %cst_124 {dimension_numbers = #tpu.dot_dimension_numbers<[1], [0], [0], [1], [0, 0, 1, 1], [], []>} : vector<1x128xbf16>, vector<128x128xbf16>, vector<1x128xf32> -> vector<1x128xf32>
    %171 = arith.addf %168, %170 : vector<1x128xf32>
    %172 = arith.negf %171 : vector<1x128xf32>
    %173 = math.exp %172 : vector<1x128xf32>
    %cst_125 = arith.constant 1.000000e+00 : f32
    %174 = vector.broadcast %cst_125 : f32 to vector<1x128xf32>
    %175 = arith.addf %174, %173 : vector<1x128xf32>
    %176 = arith.divf %174, %175 : vector<1x128xf32>
    %c3_126 = arith.constant 3 : index
    %c256_127 = arith.constant 256 : index
    %177 = vector.load %arg10[%c3_126, %c256_127] : memref<8x512xf32, #tpu.memory_space<vmem>>, vector<1x128xf32>
    %c0_128 = arith.constant 0 : index
    %c256_129 = arith.constant 256 : index
    %178 = vector.load %arg5[%c0_128, %c256_129] : memref<128x512xbf16, #tpu.memory_space<vmem>>, vector<128x128xbf16>
    %cst_130 = arith.constant dense<0.000000e+00> : vector<1x128xf32>
    %179 = tpu.matmul %158, %178, %cst_130 {dimension_numbers = #tpu.dot_dimension_numbers<[1], [0], [0], [1], [0, 0, 1, 1], [], []>} : vector<1x128xbf16>, vector<128x128xbf16>, vector<1x128xf32> -> vector<1x128xf32>
    %180 = arith.addf %177, %179 : vector<1x128xf32>
    %181 = math.tanh %180 : vector<1x128xf32>
    %c3_131 = arith.constant 3 : index
    %c384_132 = arith.constant 384 : index
    %182 = vector.load %arg10[%c3_131, %c384_132] : memref<8x512xf32, #tpu.memory_space<vmem>>, vector<1x128xf32>
    %c0_133 = arith.constant 0 : index
    %c384_134 = arith.constant 384 : index
    %183 = vector.load %arg5[%c0_133, %c384_134] : memref<128x512xbf16, #tpu.memory_space<vmem>>, vector<128x128xbf16>
    %cst_135 = arith.constant dense<0.000000e+00> : vector<1x128xf32>
    %184 = tpu.matmul %158, %183, %cst_135 {dimension_numbers = #tpu.dot_dimension_numbers<[1], [0], [0], [1], [0, 0, 1, 1], [], []>} : vector<1x128xbf16>, vector<128x128xbf16>, vector<1x128xf32> -> vector<1x128xf32>
    %185 = arith.addf %182, %184 : vector<1x128xf32>
    %186 = arith.negf %185 : vector<1x128xf32>
    %187 = math.exp %186 : vector<1x128xf32>
    %cst_136 = arith.constant 1.000000e+00 : f32
    %188 = vector.broadcast %cst_136 : f32 to vector<1x128xf32>
    %189 = arith.addf %188, %187 : vector<1x128xf32>
    %190 = arith.divf %188, %189 : vector<1x128xf32>
    %191 = arith.mulf %176, %154 : vector<1x128xf32>
    %192 = arith.mulf %167, %181 : vector<1x128xf32>
    %193 = arith.addf %191, %192 : vector<1x128xf32>
    %194 = math.tanh %193 : vector<1x128xf32>
    %195 = arith.mulf %190, %194 : vector<1x128xf32>
    %c3_137 = arith.constant 3 : index
    %c0_138 = arith.constant 0 : index
    %196 = vector.load %arg11[%c3_137, %c0_138] : memref<8x128xf32, #tpu.memory_space<vmem>>, vector<1x128xf32>
    tpu.vector_store %arg11[%c3_137, %c0_138], %195 {strides = array<i32>} : memref<8x128xf32, #tpu.memory_space<vmem>>, vector<1x128xf32>,
    %197 = arith.truncf %195 : vector<1x128xf32> to vector<1x128xbf16>
    %c4_139 = arith.constant 4 : index
    %c0_140 = arith.constant 0 : index
    %198 = vector.load %arg10[%c4_139, %c0_140] : memref<8x512xf32, #tpu.memory_space<vmem>>, vector<1x128xf32>
    %c0_141 = arith.constant 0 : index
    %c0_142 = arith.constant 0 : index
    %199 = vector.load %arg5[%c0_141, %c0_142] : memref<128x512xbf16, #tpu.memory_space<vmem>>, vector<128x128xbf16>
    %cst_143 = arith.constant dense<0.000000e+00> : vector<1x128xf32>
    %200 = tpu.matmul %197, %199, %cst_143 {dimension_numbers = #tpu.dot_dimension_numbers<[1], [0], [0], [1], [0, 0, 1, 1], [], []>} : vector<1x128xbf16>, vector<128x128xbf16>, vector<1x128xf32> -> vector<1x128xf32>
    %201 = arith.addf %198, %200 : vector<1x128xf32>
    %202 = arith.negf %201 : vector<1x128xf32>
    %203 = math.exp %202 : vector<1x128xf32>
    %cst_144 = arith.constant 1.000000e+00 : f32
    %204 = vector.broadcast %cst_144 : f32 to vector<1x128xf32>
    %205 = arith.addf %204, %203 : vector<1x128xf32>
    %206 = arith.divf %204, %205 : vector<1x128xf32>
    %c4_145 = arith.constant 4 : index
    %c128_146 = arith.constant 128 : index
    %207 = vector.load %arg10[%c4_145, %c128_146] : memref<8x512xf32, #tpu.memory_space<vmem>>, vector<1x128xf32>
    %c0_147 = arith.constant 0 : index
    %c128_148 = arith.constant 128 : index
    %208 = vector.load %arg5[%c0_147, %c128_148] : memref<128x512xbf16, #tpu.memory_space<vmem>>, vector<128x128xbf16>
    %cst_149 = arith.constant dense<0.000000e+00> : vector<1x128xf32>
    %209 = tpu.matmul %197, %208, %cst_149 {dimension_numbers = #tpu.dot_dimension_numbers<[1], [0], [0], [1], [0, 0, 1, 1], [], []>} : vector<1x128xbf16>, vector<128x128xbf16>, vector<1x128xf32> -> vector<1x128xf32>
    %210 = arith.addf %207, %209 : vector<1x128xf32>
    %211 = arith.negf %210 : vector<1x128xf32>
    %212 = math.exp %211 : vector<1x128xf32>
    %cst_150 = arith.constant 1.000000e+00 : f32
    %213 = vector.broadcast %cst_150 : f32 to vector<1x128xf32>
    %214 = arith.addf %213, %212 : vector<1x128xf32>
    %215 = arith.divf %213, %214 : vector<1x128xf32>
    %c4_151 = arith.constant 4 : index
    %c256_152 = arith.constant 256 : index
    %216 = vector.load %arg10[%c4_151, %c256_152] : memref<8x512xf32, #tpu.memory_space<vmem>>, vector<1x128xf32>
    %c0_153 = arith.constant 0 : index
    %c256_154 = arith.constant 256 : index
    %217 = vector.load %arg5[%c0_153, %c256_154] : memref<128x512xbf16, #tpu.memory_space<vmem>>, vector<128x128xbf16>
    %cst_155 = arith.constant dense<0.000000e+00> : vector<1x128xf32>
    %218 = tpu.matmul %197, %217, %cst_155 {dimension_numbers = #tpu.dot_dimension_numbers<[1], [0], [0], [1], [0, 0, 1, 1], [], []>} : vector<1x128xbf16>, vector<128x128xbf16>, vector<1x128xf32> -> vector<1x128xf32>
    %219 = arith.addf %216, %218 : vector<1x128xf32>
    %220 = math.tanh %219 : vector<1x128xf32>
    %c4_156 = arith.constant 4 : index
    %c384_157 = arith.constant 384 : index
    %221 = vector.load %arg10[%c4_156, %c384_157] : memref<8x512xf32, #tpu.memory_space<vmem>>, vector<1x128xf32>
    %c0_158 = arith.constant 0 : index
    %c384_159 = arith.constant 384 : index
    %222 = vector.load %arg5[%c0_158, %c384_159] : memref<128x512xbf16, #tpu.memory_space<vmem>>, vector<128x128xbf16>
    %cst_160 = arith.constant dense<0.000000e+00> : vector<1x128xf32>
    %223 = tpu.matmul %197, %222, %cst_160 {dimension_numbers = #tpu.dot_dimension_numbers<[1], [0], [0], [1], [0, 0, 1, 1], [], []>} : vector<1x128xbf16>, vector<128x128xbf16>, vector<1x128xf32> -> vector<1x128xf32>
    %224 = arith.addf %221, %223 : vector<1x128xf32>
    %225 = arith.negf %224 : vector<1x128xf32>
    %226 = math.exp %225 : vector<1x128xf32>
    %cst_161 = arith.constant 1.000000e+00 : f32
    %227 = vector.broadcast %cst_161 : f32 to vector<1x128xf32>
    %228 = arith.addf %227, %226 : vector<1x128xf32>
    %229 = arith.divf %227, %228 : vector<1x128xf32>
    %230 = arith.mulf %215, %193 : vector<1x128xf32>
    %231 = arith.mulf %206, %220 : vector<1x128xf32>
    %232 = arith.addf %230, %231 : vector<1x128xf32>
    %233 = math.tanh %232 : vector<1x128xf32>
    %234 = arith.mulf %229, %233 : vector<1x128xf32>
    %c4_162 = arith.constant 4 : index
    %c0_163 = arith.constant 0 : index
    %235 = vector.load %arg11[%c4_162, %c0_163] : memref<8x128xf32, #tpu.memory_space<vmem>>, vector<1x128xf32>
    tpu.vector_store %arg11[%c4_162, %c0_163], %234 {strides = array<i32>} : memref<8x128xf32, #tpu.memory_space<vmem>>, vector<1x128xf32>,
    %236 = arith.truncf %234 : vector<1x128xf32> to vector<1x128xbf16>
    %c5_164 = arith.constant 5 : index
    %c0_165 = arith.constant 0 : index
    %237 = vector.load %arg10[%c5_164, %c0_165] : memref<8x512xf32, #tpu.memory_space<vmem>>, vector<1x128xf32>
    %c0_166 = arith.constant 0 : index
    %c0_167 = arith.constant 0 : index
    %238 = vector.load %arg5[%c0_166, %c0_167] : memref<128x512xbf16, #tpu.memory_space<vmem>>, vector<128x128xbf16>
    %cst_168 = arith.constant dense<0.000000e+00> : vector<1x128xf32>
    %239 = tpu.matmul %236, %238, %cst_168 {dimension_numbers = #tpu.dot_dimension_numbers<[1], [0], [0], [1], [0, 0, 1, 1], [], []>} : vector<1x128xbf16>, vector<128x128xbf16>, vector<1x128xf32> -> vector<1x128xf32>
    %240 = arith.addf %237, %239 : vector<1x128xf32>
    %241 = arith.negf %240 : vector<1x128xf32>
    %242 = math.exp %241 : vector<1x128xf32>
    %cst_169 = arith.constant 1.000000e+00 : f32
    %243 = vector.broadcast %cst_169 : f32 to vector<1x128xf32>
    %244 = arith.addf %243, %242 : vector<1x128xf32>
    %245 = arith.divf %243, %244 : vector<1x128xf32>
    %c5_170 = arith.constant 5 : index
    %c128_171 = arith.constant 128 : index
    %246 = vector.load %arg10[%c5_170, %c128_171] : memref<8x512xf32, #tpu.memory_space<vmem>>, vector<1x128xf32>
    %c0_172 = arith.constant 0 : index
    %c128_173 = arith.constant 128 : index
    %247 = vector.load %arg5[%c0_172, %c128_173] : memref<128x512xbf16, #tpu.memory_space<vmem>>, vector<128x128xbf16>
    %cst_174 = arith.constant dense<0.000000e+00> : vector<1x128xf32>
    %248 = tpu.matmul %236, %247, %cst_174 {dimension_numbers = #tpu.dot_dimension_numbers<[1], [0], [0], [1], [0, 0, 1, 1], [], []>} : vector<1x128xbf16>, vector<128x128xbf16>, vector<1x128xf32> -> vector<1x128xf32>
    %249 = arith.addf %246, %248 : vector<1x128xf32>
    %250 = arith.negf %249 : vector<1x128xf32>
    %251 = math.exp %250 : vector<1x128xf32>
    %cst_175 = arith.constant 1.000000e+00 : f32
    %252 = vector.broadcast %cst_175 : f32 to vector<1x128xf32>
    %253 = arith.addf %252, %251 : vector<1x128xf32>
    %254 = arith.divf %252, %253 : vector<1x128xf32>
    %c5_176 = arith.constant 5 : index
    %c256_177 = arith.constant 256 : index
    %255 = vector.load %arg10[%c5_176, %c256_177] : memref<8x512xf32, #tpu.memory_space<vmem>>, vector<1x128xf32>
    %c0_178 = arith.constant 0 : index
    %c256_179 = arith.constant 256 : index
    %256 = vector.load %arg5[%c0_178, %c256_179] : memref<128x512xbf16, #tpu.memory_space<vmem>>, vector<128x128xbf16>
    %cst_180 = arith.constant dense<0.000000e+00> : vector<1x128xf32>
    %257 = tpu.matmul %236, %256, %cst_180 {dimension_numbers = #tpu.dot_dimension_numbers<[1], [0], [0], [1], [0, 0, 1, 1], [], []>} : vector<1x128xbf16>, vector<128x128xbf16>, vector<1x128xf32> -> vector<1x128xf32>
    %258 = arith.addf %255, %257 : vector<1x128xf32>
    %259 = math.tanh %258 : vector<1x128xf32>
    %c5_181 = arith.constant 5 : index
    %c384_182 = arith.constant 384 : index
    %260 = vector.load %arg10[%c5_181, %c384_182] : memref<8x512xf32, #tpu.memory_space<vmem>>, vector<1x128xf32>
    %c0_183 = arith.constant 0 : index
    %c384_184 = arith.constant 384 : index
    %261 = vector.load %arg5[%c0_183, %c384_184] : memref<128x512xbf16, #tpu.memory_space<vmem>>, vector<128x128xbf16>
    %cst_185 = arith.constant dense<0.000000e+00> : vector<1x128xf32>
    %262 = tpu.matmul %236, %261, %cst_185 {dimension_numbers = #tpu.dot_dimension_numbers<[1], [0], [0], [1], [0, 0, 1, 1], [], []>} : vector<1x128xbf16>, vector<128x128xbf16>, vector<1x128xf32> -> vector<1x128xf32>
    %263 = arith.addf %260, %262 : vector<1x128xf32>
    %264 = arith.negf %263 : vector<1x128xf32>
    %265 = math.exp %264 : vector<1x128xf32>
    %cst_186 = arith.constant 1.000000e+00 : f32
    %266 = vector.broadcast %cst_186 : f32 to vector<1x128xf32>
    %267 = arith.addf %266, %265 : vector<1x128xf32>
    %268 = arith.divf %266, %267 : vector<1x128xf32>
    %269 = arith.mulf %254, %232 : vector<1x128xf32>
    %270 = arith.mulf %245, %259 : vector<1x128xf32>
    %271 = arith.addf %269, %270 : vector<1x128xf32>
    %272 = math.tanh %271 : vector<1x128xf32>
    %273 = arith.mulf %268, %272 : vector<1x128xf32>
    %c5_187 = arith.constant 5 : index
    %c0_188 = arith.constant 0 : index
    %274 = vector.load %arg11[%c5_187, %c0_188] : memref<8x128xf32, #tpu.memory_space<vmem>>, vector<1x128xf32>
    tpu.vector_store %arg11[%c5_187, %c0_188], %273 {strides = array<i32>} : memref<8x128xf32, #tpu.memory_space<vmem>>, vector<1x128xf32>,
    %275 = arith.truncf %273 : vector<1x128xf32> to vector<1x128xbf16>
    %c6_189 = arith.constant 6 : index
    %c0_190 = arith.constant 0 : index
    %276 = vector.load %arg10[%c6_189, %c0_190] : memref<8x512xf32, #tpu.memory_space<vmem>>, vector<1x128xf32>
    %c0_191 = arith.constant 0 : index
    %c0_192 = arith.constant 0 : index
    %277 = vector.load %arg5[%c0_191, %c0_192] : memref<128x512xbf16, #tpu.memory_space<vmem>>, vector<128x128xbf16>
    %cst_193 = arith.constant dense<0.000000e+00> : vector<1x128xf32>
    %278 = tpu.matmul %275, %277, %cst_193 {dimension_numbers = #tpu.dot_dimension_numbers<[1], [0], [0], [1], [0, 0, 1, 1], [], []>} : vector<1x128xbf16>, vector<128x128xbf16>, vector<1x128xf32> -> vector<1x128xf32>
    %279 = arith.addf %276, %278 : vector<1x128xf32>
    %280 = arith.negf %279 : vector<1x128xf32>
    %281 = math.exp %280 : vector<1x128xf32>
    %cst_194 = arith.constant 1.000000e+00 : f32
    %282 = vector.broadcast %cst_194 : f32 to vector<1x128xf32>
    %283 = arith.addf %282, %281 : vector<1x128xf32>
    %284 = arith.divf %282, %283 : vector<1x128xf32>
    %c6_195 = arith.constant 6 : index
    %c128_196 = arith.constant 128 : index
    %285 = vector.load %arg10[%c6_195, %c128_196] : memref<8x512xf32, #tpu.memory_space<vmem>>, vector<1x128xf32>
    %c0_197 = arith.constant 0 : index
    %c128_198 = arith.constant 128 : index
    %286 = vector.load %arg5[%c0_197, %c128_198] : memref<128x512xbf16, #tpu.memory_space<vmem>>, vector<128x128xbf16>
    %cst_199 = arith.constant dense<0.000000e+00> : vector<1x128xf32>
    %287 = tpu.matmul %275, %286, %cst_199 {dimension_numbers = #tpu.dot_dimension_numbers<[1], [0], [0], [1], [0, 0, 1, 1], [], []>} : vector<1x128xbf16>, vector<128x128xbf16>, vector<1x128xf32> -> vector<1x128xf32>
    %288 = arith.addf %285, %287 : vector<1x128xf32>
    %289 = arith.negf %288 : vector<1x128xf32>
    %290 = math.exp %289 : vector<1x128xf32>
    %cst_200 = arith.constant 1.000000e+00 : f32
    %291 = vector.broadcast %cst_200 : f32 to vector<1x128xf32>
    %292 = arith.addf %291, %290 : vector<1x128xf32>
    %293 = arith.divf %291, %292 : vector<1x128xf32>
    %c6_201 = arith.constant 6 : index
    %c256_202 = arith.constant 256 : index
    %294 = vector.load %arg10[%c6_201, %c256_202] : memref<8x512xf32, #tpu.memory_space<vmem>>, vector<1x128xf32>
    %c0_203 = arith.constant 0 : index
    %c256_204 = arith.constant 256 : index
    %295 = vector.load %arg5[%c0_203, %c256_204] : memref<128x512xbf16, #tpu.memory_space<vmem>>, vector<128x128xbf16>
    %cst_205 = arith.constant dense<0.000000e+00> : vector<1x128xf32>
    %296 = tpu.matmul %275, %295, %cst_205 {dimension_numbers = #tpu.dot_dimension_numbers<[1], [0], [0], [1], [0, 0, 1, 1], [], []>} : vector<1x128xbf16>, vector<128x128xbf16>, vector<1x128xf32> -> vector<1x128xf32>
    %297 = arith.addf %294, %296 : vector<1x128xf32>
    %298 = math.tanh %297 : vector<1x128xf32>
    %c6_206 = arith.constant 6 : index
    %c384_207 = arith.constant 384 : index
    %299 = vector.load %arg10[%c6_206, %c384_207] : memref<8x512xf32, #tpu.memory_space<vmem>>, vector<1x128xf32>
    %c0_208 = arith.constant 0 : index
    %c384_209 = arith.constant 384 : index
    %300 = vector.load %arg5[%c0_208, %c384_209] : memref<128x512xbf16, #tpu.memory_space<vmem>>, vector<128x128xbf16>
    %cst_210 = arith.constant dense<0.000000e+00> : vector<1x128xf32>
    %301 = tpu.matmul %275, %300, %cst_210 {dimension_numbers = #tpu.dot_dimension_numbers<[1], [0], [0], [1], [0, 0, 1, 1], [], []>} : vector<1x128xbf16>, vector<128x128xbf16>, vector<1x128xf32> -> vector<1x128xf32>
    %302 = arith.addf %299, %301 : vector<1x128xf32>
    %303 = arith.negf %302 : vector<1x128xf32>
    %304 = math.exp %303 : vector<1x128xf32>
    %cst_211 = arith.constant 1.000000e+00 : f32
    %305 = vector.broadcast %cst_211 : f32 to vector<1x128xf32>
    %306 = arith.addf %305, %304 : vector<1x128xf32>
    %307 = arith.divf %305, %306 : vector<1x128xf32>
    %308 = arith.mulf %293, %271 : vector<1x128xf32>
    %309 = arith.mulf %284, %298 : vector<1x128xf32>
    %310 = arith.addf %308, %309 : vector<1x128xf32>
    %311 = math.tanh %310 : vector<1x128xf32>
    %312 = arith.mulf %307, %311 : vector<1x128xf32>
    %c6_212 = arith.constant 6 : index
    %c0_213 = arith.constant 0 : index
    %313 = vector.load %arg11[%c6_212, %c0_213] : memref<8x128xf32, #tpu.memory_space<vmem>>, vector<1x128xf32>
    tpu.vector_store %arg11[%c6_212, %c0_213], %312 {strides = array<i32>} : memref<8x128xf32, #tpu.memory_space<vmem>>, vector<1x128xf32>,
    %314 = arith.truncf %312 : vector<1x128xf32> to vector<1x128xbf16>
    %c7_214 = arith.constant 7 : index
    %c0_215 = arith.constant 0 : index
    %315 = vector.load %arg10[%c7_214, %c0_215] : memref<8x512xf32, #tpu.memory_space<vmem>>, vector<1x128xf32>
    %c0_216 = arith.constant 0 : index
    %c0_217 = arith.constant 0 : index
    %316 = vector.load %arg5[%c0_216, %c0_217] : memref<128x512xbf16, #tpu.memory_space<vmem>>, vector<128x128xbf16>
    %cst_218 = arith.constant dense<0.000000e+00> : vector<1x128xf32>
    %317 = tpu.matmul %314, %316, %cst_218 {dimension_numbers = #tpu.dot_dimension_numbers<[1], [0], [0], [1], [0, 0, 1, 1], [], []>} : vector<1x128xbf16>, vector<128x128xbf16>, vector<1x128xf32> -> vector<1x128xf32>
    %318 = arith.addf %315, %317 : vector<1x128xf32>
    %319 = arith.negf %318 : vector<1x128xf32>
    %320 = math.exp %319 : vector<1x128xf32>
    %cst_219 = arith.constant 1.000000e+00 : f32
    %321 = vector.broadcast %cst_219 : f32 to vector<1x128xf32>
    %322 = arith.addf %321, %320 : vector<1x128xf32>
    %323 = arith.divf %321, %322 : vector<1x128xf32>
    %c7_220 = arith.constant 7 : index
    %c128_221 = arith.constant 128 : index
    %324 = vector.load %arg10[%c7_220, %c128_221] : memref<8x512xf32, #tpu.memory_space<vmem>>, vector<1x128xf32>
    %c0_222 = arith.constant 0 : index
    %c128_223 = arith.constant 128 : index
    %325 = vector.load %arg5[%c0_222, %c128_223] : memref<128x512xbf16, #tpu.memory_space<vmem>>, vector<128x128xbf16>
    %cst_224 = arith.constant dense<0.000000e+00> : vector<1x128xf32>
    %326 = tpu.matmul %314, %325, %cst_224 {dimension_numbers = #tpu.dot_dimension_numbers<[1], [0], [0], [1], [0, 0, 1, 1], [], []>} : vector<1x128xbf16>, vector<128x128xbf16>, vector<1x128xf32> -> vector<1x128xf32>
    %327 = arith.addf %324, %326 : vector<1x128xf32>
    %328 = arith.negf %327 : vector<1x128xf32>
    %329 = math.exp %328 : vector<1x128xf32>
    %cst_225 = arith.constant 1.000000e+00 : f32
    %330 = vector.broadcast %cst_225 : f32 to vector<1x128xf32>
    %331 = arith.addf %330, %329 : vector<1x128xf32>
    %332 = arith.divf %330, %331 : vector<1x128xf32>
    %c7_226 = arith.constant 7 : index
    %c256_227 = arith.constant 256 : index
    %333 = vector.load %arg10[%c7_226, %c256_227] : memref<8x512xf32, #tpu.memory_space<vmem>>, vector<1x128xf32>
    %c0_228 = arith.constant 0 : index
    %c256_229 = arith.constant 256 : index
    %334 = vector.load %arg5[%c0_228, %c256_229] : memref<128x512xbf16, #tpu.memory_space<vmem>>, vector<128x128xbf16>
    %cst_230 = arith.constant dense<0.000000e+00> : vector<1x128xf32>
    %335 = tpu.matmul %314, %334, %cst_230 {dimension_numbers = #tpu.dot_dimension_numbers<[1], [0], [0], [1], [0, 0, 1, 1], [], []>} : vector<1x128xbf16>, vector<128x128xbf16>, vector<1x128xf32> -> vector<1x128xf32>
    %336 = arith.addf %333, %335 : vector<1x128xf32>
    %337 = math.tanh %336 : vector<1x128xf32>
    %c7_231 = arith.constant 7 : index
    %c384_232 = arith.constant 384 : index
    %338 = vector.load %arg10[%c7_231, %c384_232] : memref<8x512xf32, #tpu.memory_space<vmem>>, vector<1x128xf32>
    %c0_233 = arith.constant 0 : index
    %c384_234 = arith.constant 384 : index
    %339 = vector.load %arg5[%c0_233, %c384_234] : memref<128x512xbf16, #tpu.memory_space<vmem>>, vector<128x128xbf16>
    %cst_235 = arith.constant dense<0.000000e+00> : vector<1x128xf32>
    %340 = tpu.matmul %314, %339, %cst_235 {dimension_numbers = #tpu.dot_dimension_numbers<[1], [0], [0], [1], [0, 0, 1, 1], [], []>} : vector<1x128xbf16>, vector<128x128xbf16>, vector<1x128xf32> -> vector<1x128xf32>
    %341 = arith.addf %338, %340 : vector<1x128xf32>
    %342 = arith.negf %341 : vector<1x128xf32>
    %343 = math.exp %342 : vector<1x128xf32>
    %cst_236 = arith.constant 1.000000e+00 : f32
    %344 = vector.broadcast %cst_236 : f32 to vector<1x128xf32>
    %345 = arith.addf %344, %343 : vector<1x128xf32>
    %346 = arith.divf %344, %345 : vector<1x128xf32>
    %347 = arith.mulf %332, %310 : vector<1x128xf32>
    %348 = arith.mulf %323, %337 : vector<1x128xf32>
    %349 = arith.addf %347, %348 : vector<1x128xf32>
    %350 = math.tanh %349 : vector<1x128xf32>
    %351 = arith.mulf %346, %350 : vector<1x128xf32>
    %c7_237 = arith.constant 7 : index
    %c0_238 = arith.constant 0 : index
    %352 = vector.load %arg11[%c7_237, %c0_238] : memref<8x128xf32, #tpu.memory_space<vmem>>, vector<1x128xf32>
    tpu.vector_store %arg11[%c7_237, %c0_238], %351 {strides = array<i32>} : memref<8x128xf32, #tpu.memory_space<vmem>>, vector<1x128xf32>,
    %c0_239 = arith.constant 0 : index
    %c0_240 = arith.constant 0 : index
    %353 = vector.load %arg11[%c0_239, %c0_240] : memref<8x128xf32, #tpu.memory_space<vmem>>, vector<8x128xf32>
    %354 = arith.truncf %353 : vector<8x128xf32> to vector<8x128xbf16>
    %c0_241 = arith.constant 0 : index
    %c0_242 = arith.constant 0 : index
    %355 = vector.load %arg6[%c0_241, %c0_242] : memref<128x12xbf16, #tpu.memory_space<vmem>>, vector<128x12xbf16>
    %cst_243 = arith.constant dense<0.000000e+00> : vector<8x12xf32>
    %356 = tpu.matmul %354, %355, %cst_243 {dimension_numbers = #tpu.dot_dimension_numbers<[1], [0], [0], [1], [0, 0, 1, 1], [], []>} : vector<8x128xbf16>, vector<128x12xbf16>, vector<8x12xf32> -> vector<8x12xf32>
    %c0_244 = arith.constant 0 : index
    %c0_245 = arith.constant 0 : index
    %357 = vector.load %arg7[%c0_244, %c0_245] : memref<1x12xf32, #tpu.memory_space<vmem>>, vector<1x12xf32>
    %358 = vector.broadcast %357 : vector<1x12xf32> to vector<8x12xf32>
    %359 = arith.addf %356, %358 : vector<8x12xf32>
    %c0_246 = arith.constant 0 : index
    %c0_247 = arith.constant 0 : index
    %360 = vector.load %arg8[%c0_246, %c0_247] : memref<8x12xf32, #tpu.memory_space<vmem>>, vector<8x12xf32>
    tpu.vector_store %arg8[%c0_246, %c0_247], %359 {strides = array<i32>} : memref<8x12xf32, #tpu.memory_space<vmem>>, vector<8x12xf32>,
    return
  }
  func.func @transform_0(%arg0: i32, %arg1: memref<8x2xi32, #tpu.memory_space<smem>>) -> (i32, i32) {
    %c0_i32 = arith.constant 0 : i32
    %c0_i32_0 = arith.constant 0 : i32
    %c0_i32_1 = arith.constant 0 : i32
    return %c0_i32, %c0_i32_0 : i32, i32
  }
  func.func @transform_1(%arg0: i32, %arg1: memref<8x2xi32, #tpu.memory_space<smem>>) -> (i32, i32) {
    %c0_i32 = arith.constant 0 : i32
    %c0_i32_0 = arith.constant 0 : i32
    %c0_i32_1 = arith.constant 0 : i32
    return %c0_i32, %c0_i32_0 : i32, i32
  }
  func.func @transform_2(%arg0: i32, %arg1: memref<8x2xi32, #tpu.memory_space<smem>>) -> (i32, i32) {
    %c0_i32 = arith.constant 0 : i32
    %c0_i32_0 = arith.constant 0 : i32
    %c0_i32_1 = arith.constant 0 : i32
    return %c0_i32, %c0_i32_0 : i32, i32
  }
  func.func @transform_3(%arg0: i32, %arg1: memref<8x2xi32, #tpu.memory_space<smem>>) -> (i32, i32) {
    %c0_i32 = arith.constant 0 : i32
    %c0_i32_0 = arith.constant 0 : i32
    %c0_i32_1 = arith.constant 0 : i32
    return %c0_i32, %c0_i32_0 : i32, i32
  }
  func.func @transform_4(%arg0: i32, %arg1: memref<8x2xi32, #tpu.memory_space<smem>>) -> (i32, i32) {
    %c0_i32 = arith.constant 0 : i32
    %c0_i32_0 = arith.constant 0 : i32
    %c0_i32_1 = arith.constant 0 : i32
    return %c0_i32, %c0_i32_0 : i32, i32
  }
  func.func @transform_5(%arg0: i32, %arg1: memref<8x2xi32, #tpu.memory_space<smem>>) -> (i32, i32) {
    %c0_i32 = arith.constant 0 : i32
    %c0_i32_0 = arith.constant 0 : i32
    %c0_i32_1 = arith.constant 0 : i32
    return %c0_i32, %c0_i32_0 : i32, i32
  }
  func.func @transform_6(%arg0: i32, %arg1: memref<8x2xi32, #tpu.memory_space<smem>>) -> (i32, i32) {
    %c0_i32 = arith.constant 0 : i32
    %c0_i32_0 = arith.constant 0 : i32
    %c0_i32_1 = arith.constant 0 : i32
    return %c0_i32, %c0_i32_0 : i32, i32
  }
}

</mosaic_0001>

<llo_original>
// kernel: forward.1
$region0: #{forward.1}
  #allocation0 [shape = 'u32[]', space=smem, size = 0x4, offset = 0x4, fixed_abs, tag = 'smem constant byte address 0x4 - core index']
  #allocation1 [shape = 'u32[72,128]{1,0:T(1,128)}', space=vmem, size = 0x9000, scoped, tag = 'internal scratch']
  #allocation2 [shape = 'f32[8,128]{1,0:T(8,128)}', space=vmem, size = 0x1000, scoped, tag = 'scratch operand']
  #allocation3 [shape = 'f32[8,512]{1,0:T(8,128)}', space=vmem, size = 0x4000, scoped, tag = 'scratch operand']
  #allocation4 [shape = 'f32[8,128]{1,0:T(8,128)}', space=vmem, size = 0x1000, scoped, tag = 'scratch operand']
  #allocation5 [shape = 's32[1]{0}', space=sflag, size = 0x4, scoped, tag = 'scoped memory for forward.1']
  #allocation6 [shape = 'u8[4096]{0}', space=smem, size = 0x1000, scoped, tag = 'prefetched SMEM operand 0']
  %s0 = inlined_call_operand.vmem [shape: s32[8,2], index: 0, kind: input, shape index: {}]
  %s1 = inlined_call_operand.hbm [shape: f32[504,128], index: 1, kind: input, shape index: {}]
  %s2 = inlined_call_operand.hbm [shape: f32[128,512], index: 2, kind: input, shape index: {}]
  %s3 = inlined_call_operand.vmem [shape: f32[1,512], index: 3, kind: input, shape index: {}]
  %s4 = inlined_call_operand.hbm [shape: bf16[128,512], index: 4, kind: input, shape index: {}]
  %s5 = inlined_call_operand.vmem [shape: bf16[128,12], index: 5, kind: input, shape index: {}]
  %s6 = inlined_call_operand.vmem [shape: f32[1,12], index: 6, kind: input, shape index: {}]
  %s7 = inlined_call_operand.hbm [shape: f32[8,12], index: 7, kind: output, shape index: {}]
  %s8 = sld [smem:[#allocation0]]
  $region46: #{forward.1} parent=0
    _
  %s10 = ssub.s32 1, %s8
  %s11 = scalar_select 0, %s10, %s8
  %s13 = sshll.u32 %s0, 4
  %s14 = int_to_ptr.vmem [resolvable:$true] %s13
  %16 = dma.vmem_to_smem %s14, 128, [#allocation6], [#allocation5]
  %18 = dma.done [#allocation5], 128
  %19 = sfence
  $region1: #{forward.1} parent=0
    #allocation7 [shape = 'u8[258048]{0}', space=vmem, size = 0x3f000, scoped, tag = 'input window, operand 1, single buffered']
    #allocation8 [shape = 's32[1]{0}', space=sflag, size = 0x4, scoped, tag = 'scoped memory for forward.1']
    #allocation9 [shape = 's32[1]{0}', space=sflag, size = 0x4, scoped, tag = 'scoped memory for forward.1']
    #allocation10 [shape = 'u8[262144]{0}', space=vmem, size = 0x40000, scoped, tag = 'input window, operand 2, single buffered']
    #allocation11 [shape = 's32[1]{0}', space=sflag, size = 0x4, scoped, tag = 'scoped memory for forward.1']
    #allocation12 [shape = 'u8[131072]{0}', space=vmem, size = 0x20000, scoped, tag = 'input window, operand 4, single buffered']
    #allocation13 [shape = 'u8[4096]{0}', space=vmem, size = 0x1000, scoped, tag = 'output window, operand 0, single buffered']
    %20 = vsyncpa [#allocation8], 0
    %21 = vsyncpa [#allocation11], 0
    %22 = vsyncpa [#allocation9], 0
    // Predicated region
    $region2: #{forward.1} parent=1 // pred_check
      _
    $region3: #{forward.1} parent=1 // pred_check_branch
      %24 = sbr.rel (0) target = $region5
    $region4: #{forward.1} parent=1 // pred_region
      %26 = vsyncadd [#allocation8], 0
      %s27 = sshll.u32 %s1, 4
      %s28 = int_to_ptr.hbm [resolvable:$true] %s27
      %s29 = sshll.u32 [#allocation7], 4
      %s30 = int_to_ptr.vmem [resolvable:$true] %s29
      %35 = dma.hbm_to_vmem [thread:$0]  %s28, 8064, %s30, [#allocation8], 128, 128, 8
    $region5: #{forward.1} parent=1 // pred_fallthru
      _
    // Predicated region
    $region6: #{forward.1} parent=1 // pred_check
      _
    $region7: #{forward.1} parent=1 // pred_check_branch
      %37 = sbr.rel (0) target = $region9
    $region8: #{forward.1} parent=1 // pred_region
      %39 = vsyncadd [#allocation11], 0
      %s40 = sshll.u32 %s2, 4
      %s41 = int_to_ptr.hbm [resolvable:$true] %s40
      %s42 = sshll.u32 [#allocation10], 4
      %s43 = int_to_ptr.vmem [resolvable:$true] %s42
      %48 = dma.hbm_to_vmem [thread:$0]  %s41, 8192, %s43, [#allocation11], 512, 512, 32
    $region9: #{forward.1} parent=1 // pred_fallthru
      _
    // Predicated region
    $region10: #{forward.1} parent=1 // pred_check
      _
    $region11: #{forward.1} parent=1 // pred_check_branch
      %50 = sbr.rel (0) target = $region13
    $region12: #{forward.1} parent=1 // pred_region
      _
    $region13: #{forward.1} parent=1 // pred_fallthru
      _
    // Predicated region
    $region14: #{forward.1} parent=1 // pred_check
      _
    $region15: #{forward.1} parent=1 // pred_check_branch
      %52 = sbr.rel (0) target = $region17
    $region16: #{forward.1} parent=1 // pred_region
      %54 = vsyncadd [#allocation11], 0
      %s55 = sshll.u32 %s4, 4
      %s56 = int_to_ptr.hbm [resolvable:$true] %s55
      %s57 = sshll.u32 [#allocation12], 4
      %s58 = int_to_ptr.vmem [resolvable:$true] %s57
      %63 = dma.hbm_to_vmem [thread:$0]  %s56, 4096, %s58, [#allocation11], 256, 256, 16
    $region17: #{forward.1} parent=1 // pred_fallthru
      _
    // Predicated region
    $region18: #{forward.1} parent=1 // pred_check
      _
    $region19: #{forward.1} parent=1 // pred_check_branch
      %65 = sbr.rel (0) target = $region21
    $region20: #{forward.1} parent=1 // pred_region
      _
    $region21: #{forward.1} parent=1 // pred_fallthru
      _
    // Predicated region
    $region22: #{forward.1} parent=1 // pred_check
      _
    $region23: #{forward.1} parent=1 // pred_check_branch
      %67 = sbr.rel (0) target = $region25
    $region24: #{forward.1} parent=1 // pred_region
      _
    $region25: #{forward.1} parent=1 // pred_fallthru
      _
    // Predicated region
    $region26: #{forward.1} parent=1 // pred_check
      _
    $region27: #{forward.1} parent=1 // pred_check_branch
      %69 = sbr.rel (0) target = $region29
    $region28: #{forward.1} parent=1 // pred_region
      %71 = dma.done [#allocation8], 8064
    $region29: #{forward.1} parent=1 // pred_fallthru
      _
    // Predicated region
    $region30: #{forward.1} parent=1 // pred_check
      _
    $region31: #{forward.1} parent=1 // pred_check_branch
      %73 = sbr.rel (0) target = $region33
    $region32: #{forward.1} parent=1 // pred_region
      %75 = dma.done [#allocation11], 8192
    $region33: #{forward.1} parent=1 // pred_fallthru
      _
    // Predicated region
    $region34: #{forward.1} parent=1 // pred_check
      _
    $region35: #{forward.1} parent=1 // pred_check_branch
      %77 = sbr.rel (0) target = $region37
    $region36: #{forward.1} parent=1 // pred_region
      %79 = dma.done [#allocation11], 4096
    $region37: #{forward.1} parent=1 // pred_fallthru
      _
    %s81 = sld [smem:[#allocation6 + $0x1]]
    %s82 = scalar_lea.vmem [#allocation7], %s81
    %v83 = vld [vmem:[%s82] sm:$0x1]
    %84 = vst [vmem:[#allocation2] sm:$0x1] %v83
    %s85 = sld [smem:[#allocation6 + $0x81]]
    %s86 = scalar_lea.vmem [#allocation7], %s85
    %v87 = vld [vmem:[%s86] sm:$0x1]
    %88 = vst [vmem:[#allocation2 + $0x1] sm:$0x1] %v87
    %s89 = sld [smem:[#allocation6 + $0x101]]
    %s90 = scalar_lea.vmem [#allocation7], %s89
    %v91 = vld [vmem:[%s90] sm:$0x1]
    %92 = vst [vmem:[#allocation2 + $0x2] sm:$0x1] %v91
    %s93 = sld [smem:[#allocation6 + $0x181]]
    %s94 = scalar_lea.vmem [#allocation7], %s93
    %v95 = vld [vmem:[%s94] sm:$0x1]
    %96 = vst [vmem:[#allocation2 + $0x3] sm:$0x1] %v95
    %s97 = sld [smem:[#allocation6 + $0x201]]
    %s98 = scalar_lea.vmem [#allocation7], %s97
    %v99 = vld [vmem:[%s98] sm:$0x1]
    %100 = vst [vmem:[#allocation2 + $0x4] sm:$0x1] %v99
    %s101 = sld [smem:[#allocation6 + $0x281]]
    %s102 = scalar_lea.vmem [#allocation7], %s101
    %v103 = vld [vmem:[%s102] sm:$0x1]
    %104 = vst [vmem:[#allocation2 + $0x5] sm:$0x1] %v103
    %s105 = sld [smem:[#allocation6 + $0x301]]
    %s106 = scalar_lea.vmem [#allocation7], %s105
    %v107 = vld [vmem:[%s106] sm:$0x1]
    %108 = vst [vmem:[#allocation2 + $0x6] sm:$0x1] %v107
    %s109 = sld [smem:[#allocation6 + $0x381]]
    %s110 = scalar_lea.vmem [#allocation7], %s109
    %v111 = vld [vmem:[%s110] sm:$0x1]
    %112 = vst [vmem:[#allocation2 + $0x7] sm:$0x1] %v111
    %v113 = vld [vmem:[#allocation2] sm:$0xff]
    %v114 = vld [vmem:[#allocation10] sm:$0xff]
    %v115 = vld [vmem:[#allocation10 + $0x8] sm:$0xff]
    %v116 = vld [vmem:[#allocation10 + $0x10] sm:$0xff]
    %v117 = vld [vmem:[#allocation10 + $0x18] sm:$0xff]
    %v118 = vld [vmem:[#allocation10 + $0x20] sm:$0xff]
    %v119 = vld [vmem:[#allocation10 + $0x28] sm:$0xff]
    %v120 = vld [vmem:[#allocation10 + $0x30] sm:$0xff]
    %v121 = vld [vmem:[#allocation10 + $0x38] sm:$0xff]
    %v122 = vld [vmem:[#allocation10 + $0x40] sm:$0xff]
    %v123 = vld [vmem:[#allocation10 + $0x48] sm:$0xff]
    %v124 = vld [vmem:[#allocation10 + $0x50] sm:$0xff]
    %v125 = vld [vmem:[#allocation10 + $0x58] sm:$0xff]
    %v126 = vld [vmem:[#allocation10 + $0x60] sm:$0xff]
    %v127 = vld [vmem:[#allocation10 + $0x68] sm:$0xff]
    %v128 = vld [vmem:[#allocation10 + $0x70] sm:$0xff]
    %v129 = vld [vmem:[#allocation10 + $0x78] sm:$0xff]
    %v130 = vld [vmem:[#allocation10 + $0x80] sm:$0xff]
    %v131 = vld [vmem:[#allocation10 + $0x88] sm:$0xff]
    %v132 = vld [vmem:[#allocation10 + $0x90] sm:$0xff]
    %v133 = vld [vmem:[#allocation10 + $0x98] sm:$0xff]
    %v134 = vld [vmem:[#allocation10 + $0xa0] sm:$0xff]
    %v135 = vld [vmem:[#allocation10 + $0xa8] sm:$0xff]
    %v136 = vld [vmem:[#allocation10 + $0xb0] sm:$0xff]
    %v137 = vld [vmem:[#allocation10 + $0xb8] sm:$0xff]
    %v138 = vld [vmem:[#allocation10 + $0xc0] sm:$0xff]
    %v139 = vld [vmem:[#allocation10 + $0xc8] sm:$0xff]
    %v140 = vld [vmem:[#allocation10 + $0xd0] sm:$0xff]
    %v141 = vld [vmem:[#allocation10 + $0xd8] sm:$0xff]
    %v142 = vld [vmem:[#allocation10 + $0xe0] sm:$0xff]
    %v143 = vld [vmem:[#allocation10 + $0xe8] sm:$0xff]
    %v144 = vld [vmem:[#allocation10 + $0xf0] sm:$0xff]
    %v145 = vld [vmem:[#allocation10 + $0xf8] sm:$0xff]
    %v146 = vld [vmem:[#allocation10 + $0x100] sm:$0xff]
    %v147 = vld [vmem:[#allocation10 + $0x108] sm:$0xff]
    %v148 = vld [vmem:[#allocation10 + $0x110] sm:$0xff]
    %v149 = vld [vmem:[#allocation10 + $0x118] sm:$0xff]
    %v150 = vld [vmem:[#allocation10 + $0x120] sm:$0xff]
    %v151 = vld [vmem:[#allocation10 + $0x128] sm:$0xff]
    %v152 = vld [vmem:[#allocation10 + $0x130] sm:$0xff]
    %v153 = vld [vmem:[#allocation10 + $0x138] sm:$0xff]
    %v154 = vld [vmem:[#allocation10 + $0x140] sm:$0xff]
    %v155 = vld [vmem:[#allocation10 + $0x148] sm:$0xff]
    %v156 = vld [vmem:[#allocation10 + $0x150] sm:$0xff]
    %v157 = vld [vmem:[#allocation10 + $0x158] sm:$0xff]
    %v158 = vld [vmem:[#allocation10 + $0x160] sm:$0xff]
    %v159 = vld [vmem:[#allocation10 + $0x168] sm:$0xff]
    %v160 = vld [vmem:[#allocation10 + $0x170] sm:$0xff]
    %v161 = vld [vmem:[#allocation10 + $0x178] sm:$0xff]
    %v162 = vld [vmem:[#allocation10 + $0x180] sm:$0xff]
    %v163 = vld [vmem:[#allocation10 + $0x188] sm:$0xff]
    %v164 = vld [vmem:[#allocation10 + $0x190] sm:$0xff]
    %v165 = vld [vmem:[#allocation10 + $0x198] sm:$0xff]
    %v166 = vld [vmem:[#allocation10 + $0x1a0] sm:$0xff]
    %v167 = vld [vmem:[#allocation10 + $0x1a8] sm:$0xff]
    %v168 = vld [vmem:[#allocation10 + $0x1b0] sm:$0xff]
    %v169 = vld [vmem:[#allocation10 + $0x1b8] sm:$0xff]
    %v170 = vld [vmem:[#allocation10 + $0x1c0] sm:$0xff]
    %v171 = vld [vmem:[#allocation10 + $0x1c8] sm:$0xff]
    %v172 = vld [vmem:[#allocation10 + $0x1d0] sm:$0xff]
    %v173 = vld [vmem:[#allocation10 + $0x1d8] sm:$0xff]
    %v174 = vld [vmem:[#allocation10 + $0x1e0] sm:$0xff]
    %v175 = vld [vmem:[#allocation10 + $0x1e8] sm:$0xff]
    %v176 = vld [vmem:[#allocation10 + $0x1f0] sm:$0xff]
    %v177 = vld [vmem:[#allocation10 + $0x1f8] sm:$0xff]
    %v178 = vld [vmem:[%s3] sm:$0xf]
    %v180 = vperm.slane %v178, 0
    %v181 = vperm.slane %v178, 1
    %v182 = vperm.slane %v178, 2
    %v183 = vperm.slane %v178, 3
    %188 = vmatpush.msra.mxu0 %v174
    %189 = vmatpush.msra.mxu0 %v170
    %190 = vmatpush.msra.mxu0 %v166
    %191 = vmatpush.msra.mxu0 %v162
    %192 = vmatpush.msra.mxu0 %v158
    %193 = vmatpush.msra.mxu0 %v154
    %194 = vmatpush.msra.mxu0 %v150
    %195 = vmatpush.msra.mxu0 %v146
    %196 = vmatpush.msra.mxu0 %v142
    %197 = vmatpush.msra.mxu0 %v138
    %198 = vmatpush.msra.mxu0 %v134
    %199 = vmatpush.msra.mxu0 %v130
    %200 = vmatpush.msra.mxu0 %v126
    %201 = vmatpush.msra.mxu0 %v122
    %202 = vmatpush.msra.mxu0 %v118
    %203 = vmatpush.msra.mxu0 %v114
    %204 = vmatmul.f32.gmra.mxu0 %v113
    %v205 = vpop.f32.mrf.mxu0
    %v206 = vadd.f32 %v180, %v205
    %207 = vdwg.mxu0
    %208 = vmatpush.msra.mxu0 %v175
    %209 = vmatpush.msra.mxu0 %v171
    %210 = vmatpush.msra.mxu0 %v167
    %211 = vmatpush.msra.mxu0 %v163
    %212 = vmatpush.msra.mxu0 %v159
    %213 = vmatpush.msra.mxu0 %v155
    %214 = vmatpush.msra.mxu0 %v151
    %215 = vmatpush.msra.mxu0 %v147
    %216 = vmatpush.msra.mxu0 %v143
    %217 = vmatpush.msra.mxu0 %v139
    %218 = vmatpush.msra.mxu0 %v135
    %219 = vmatpush.msra.mxu0 %v131
    %220 = vmatpush.msra.mxu0 %v127
    %221 = vmatpush.msra.mxu0 %v123
    %222 = vmatpush.msra.mxu0 %v119
    %223 = vmatpush.msra.mxu0 %v115
    %224 = vmatmul.f32.gmra.mxu0 %v113
    %v225 = vpop.f32.mrf.mxu0
    %v226 = vadd.f32 %v181, %v225
    %227 = vdwg.mxu0
    %228 = vmatpush.msra.mxu0 %v176
    %229 = vmatpush.msra.mxu0 %v172
    %230 = vmatpush.msra.mxu0 %v168
    %231 = vmatpush.msra.mxu0 %v164
    %232 = vmatpush.msra.mxu0 %v160
    %233 = vmatpush.msra.mxu0 %v156
    %234 = vmatpush.msra.mxu0 %v152
    %235 = vmatpush.msra.mxu0 %v148
    %236 = vmatpush.msra.mxu0 %v144
    %237 = vmatpush.msra.mxu0 %v140
    %238 = vmatpush.msra.mxu0 %v136
    %239 = vmatpush.msra.mxu0 %v132
    %240 = vmatpush.msra.mxu0 %v128
    %241 = vmatpush.msra.mxu0 %v124
    %242 = vmatpush.msra.mxu0 %v120
    %243 = vmatpush.msra.mxu0 %v116
    %244 = vmatmul.f32.gmra.mxu0 %v113
    %v245 = vpop.f32.mrf.mxu0
    %v246 = vadd.f32 %v182, %v245
    %247 = vdwg.mxu0
    %248 = vmatpush.msra.mxu0 %v177
    %249 = vmatpush.msra.mxu0 %v173
    %250 = vmatpush.msra.mxu0 %v169
    %251 = vmatpush.msra.mxu0 %v165
    %252 = vmatpush.msra.mxu0 %v161
    %253 = vmatpush.msra.mxu0 %v157
    %254 = vmatpush.msra.mxu0 %v153
    %255 = vmatpush.msra.mxu0 %v149
    %256 = vmatpush.msra.mxu0 %v145
    %257 = vmatpush.msra.mxu0 %v141
    %258 = vmatpush.msra.mxu0 %v137
    %259 = vmatpush.msra.mxu0 %v133
    %260 = vmatpush.msra.mxu0 %v129
    %261 = vmatpush.msra.mxu0 %v125
    %262 = vmatpush.msra.mxu0 %v121
    %263 = vmatpush.msra.mxu0 %v117
    %264 = vmatmul.f32.gmra.mxu0 %v113
    %v265 = vpop.f32.mrf.mxu0
    %v266 = vadd.f32 %v183, %v265
    %267 = vdwg.mxu0
    %268 = vst [vmem:[#allocation3] sm:$0xff] %v206
    %269 = vst [vmem:[#allocation3 + $0x8] sm:$0xff] %v226
    %270 = vst [vmem:[#allocation3 + $0x10] sm:$0xff] %v246
    %271 = vst [vmem:[#allocation3 + $0x18] sm:$0xff] %v266
    %v272 = vld [vmem:[#allocation3] ss:$0 sm:$0xff]
    %v273 = vld [vmem:[#allocation12] sm:$0xf]
    %v274 = vld [vmem:[#allocation12 + $0x10] sm:$0xf]
    %v275 = vld [vmem:[#allocation12 + $0x20] sm:$0xf]
    %v276 = vld [vmem:[#allocation12 + $0x30] sm:$0xf]
    %v277 = vld [vmem:[#allocation12 + $0x40] sm:$0xf]
    %v278 = vld [vmem:[#allocation12 + $0x50] sm:$0xf]
    %v279 = vld [vmem:[#allocation12 + $0x60] sm:$0xf]
    %v280 = vld [vmem:[#allocation12 + $0x70] sm:$0xf]
    %v281 = vld [vmem:[#allocation12 + $0x80] sm:$0xf]
    %v282 = vld [vmem:[#allocation12 + $0x90] sm:$0xf]
    %v283 = vld [vmem:[#allocation12 + $0xa0] sm:$0xf]
    %v284 = vld [vmem:[#allocation12 + $0xb0] sm:$0xf]
    %v285 = vld [vmem:[#allocation12 + $0xc0] sm:$0xf]
    %v286 = vld [vmem:[#allocation12 + $0xd0] sm:$0xf]
    %v287 = vld [vmem:[#allocation12 + $0xe0] sm:$0xf]
    %v288 = vld [vmem:[#allocation12 + $0xf0] sm:$0xf]
    %v305 = vunpack.c.l.b16 %v273
    %v306 = vunpack.c.l.b16 %v274
    %v307 = vunpack.c.l.b16 %v275
    %v308 = vunpack.c.l.b16 %v276
    %v309 = vunpack.c.l.b16 %v277
    %v310 = vunpack.c.l.b16 %v278
    %v311 = vunpack.c.l.b16 %v279
    %v312 = vunpack.c.l.b16 %v280
    %v313 = vunpack.c.l.b16 %v281
    %v314 = vunpack.c.l.b16 %v282
    %v315 = vunpack.c.l.b16 %v283
    %v316 = vunpack.c.l.b16 %v284
    %v317 = vunpack.c.l.b16 %v285
    %v318 = vunpack.c.l.b16 %v286
    %v319 = vunpack.c.l.b16 %v287
    %v320 = vunpack.c.l.b16 %v288
    %v321 = vpack.c.b16 %v306, %v305
    %v322 = vpack.c.b16 %v308, %v307
    %v323 = vpack.c.b16 %v310, %v309
    %v324 = vpack.c.b16 %v312, %v311
    %v325 = vpack.c.b16 %v314, %v313
    %v326 = vpack.c.b16 %v316, %v315
    %v327 = vpack.c.b16 %v318, %v317
    %v328 = vpack.c.b16 %v320, %v319
    %337 = vmatpush.bf16.msra.mxu0 %v328
    %338 = vmatpush.bf16.msra.mxu0 %v327
    %339 = vmatpush.bf16.msra.mxu0 %v326
    %340 = vmatpush.bf16.msra.mxu0 %v325
    %341 = vmatpush.bf16.msra.mxu0 %v324
    %342 = vmatpush.bf16.msra.mxu0 %v323
    %343 = vmatpush.bf16.msra.mxu0 %v322
    %344 = vmatpush.bf16.msra.mxu0 %v321
    %345 = vmatmul.bf16.gmra.mxu0 0
    %v346 = vpop.f32.mrf.mxu0
    %v347 = vadd.f32 0.0, %v346
    %v348 = vpop.f32.mrf.mxu0
    %349 = vdwg.mxu0
    %v350 = vadd.f32 %v272, %v347
    %v351 = vxor.u32 %v350, 2147483648
    %v352 = vmul.f32 %v351, 1.442695
    %v353 = vpow.pop %v352
    %v354 = vadd.f32 %v353, 1.0
    %v355 = vrcp.pop %v354
    %v356 = vmul.f32 %v354, %v355
    %v357 = vsub.f32 1.0, %v356
    %v358 = vmul.f32 %v355, %v357
    %v359 = vadd.f32 %v355, %v358
    %vm360 = vweird.f32 %v354
    %vm361 = vweird.f32 %v355
    %vm362 = vmor %vm360, %vm361
    %v363 = vsel %vm362, %v355, %v359
    %v364 = vand.u32 2147483647, %v354
    %vm365 = vcmp.eq.f32.partialorder %v364, 8.507059e+37
    %v366 = vand.u32 %v354, 2147483648
    %v367 = vor.u32 1.1754944e-38, %v366
    %v368 = vsel %vm365, %v367, %v363
    %v369 = vmul.f32 1.0, %v368
    %v370 = vld [vmem:[#allocation3 + $0x8] ss:$0 sm:$0xff]
    %v371 = vld [vmem:[#allocation12 + $0x4] sm:$0xf]
    %v372 = vld [vmem:[#allocation12 + $0x14] sm:$0xf]
    %v373 = vld [vmem:[#allocation12 + $0x24] sm:$0xf]
    %v374 = vld [vmem:[#allocation12 + $0x34] sm:$0xf]
    %v375 = vld [vmem:[#allocation12 + $0x44] sm:$0xf]
    %v376 = vld [vmem:[#allocation12 + $0x54] sm:$0xf]
    %v377 = vld [vmem:[#allocation12 + $0x64] sm:$0xf]
    %v378 = vld [vmem:[#allocation12 + $0x74] sm:$0xf]
    %v379 = vld [vmem:[#allocation12 + $0x84] sm:$0xf]
    %v380 = vld [vmem:[#allocation12 + $0x94] sm:$0xf]
    %v381 = vld [vmem:[#allocation12 + $0xa4] sm:$0xf]
    %v382 = vld [vmem:[#allocation12 + $0xb4] sm:$0xf]
    %v383 = vld [vmem:[#allocation12 + $0xc4] sm:$0xf]
    %v384 = vld [vmem:[#allocation12 + $0xd4] sm:$0xf]
    %v385 = vld [vmem:[#allocation12 + $0xe4] sm:$0xf]
    %v386 = vld [vmem:[#allocation12 + $0xf4] sm:$0xf]
    %v403 = vunpack.c.l.b16 %v371
    %v404 = vunpack.c.l.b16 %v372
    %v405 = vunpack.c.l.b16 %v373
    %v406 = vunpack.c.l.b16 %v374
    %v407 = vunpack.c.l.b16 %v375
    %v408 = vunpack.c.l.b16 %v376
    %v409 = vunpack.c.l.b16 %v377
    %v410 = vunpack.c.l.b16 %v378
    %v411 = vunpack.c.l.b16 %v379
    %v412 = vunpack.c.l.b16 %v380
    %v413 = vunpack.c.l.b16 %v381
    %v414 = vunpack.c.l.b16 %v382
    %v415 = vunpack.c.l.b16 %v383
    %v416 = vunpack.c.l.b16 %v384
    %v417 = vunpack.c.l.b16 %v385
    %v418 = vunpack.c.l.b16 %v386
    %v419 = vpack.c.b16 %v404, %v403
    %v420 = vpack.c.b16 %v406, %v405
    %v421 = vpack.c.b16 %v408, %v407
    %v422 = vpack.c.b16 %v410, %v409
    %v423 = vpack.c.b16 %v412, %v411
    %v424 = vpack.c.b16 %v414, %v413
    %v425 = vpack.c.b16 %v416, %v415
    %v426 = vpack.c.b16 %v418, %v417
    %435 = vmatpush.bf16.msra.mxu0 %v426
    %436 = vmatpush.bf16.msra.mxu0 %v425
    %437 = vmatpush.bf16.msra.mxu0 %v424
    %438 = vmatpush.bf16.msra.mxu0 %v423
    %439 = vmatpush.bf16.msra.mxu0 %v422
    %440 = vmatpush.bf16.msra.mxu0 %v421
    %441 = vmatpush.bf16.msra.mxu0 %v420
    %442 = vmatpush.bf16.msra.mxu0 %v419
    %443 = vmatmul.bf16.gmra.mxu0 0
    %v444 = vpop.f32.mrf.mxu0
    %v445 = vadd.f32 0.0, %v444
    %v446 = vpop.f32.mrf.mxu0
    %447 = vdwg.mxu0
    %v448 = vadd.f32 %v370, %v445
    %v449 = vxor.u32 %v448, 2147483648
    %v450 = vmul.f32 %v449, 1.442695
    %v451 = vpow.pop %v450
    %v452 = vadd.f32 %v451, 1.0
    %v453 = vrcp.pop %v452
    %v454 = vmul.f32 %v452, %v453
    %v455 = vsub.f32 1.0, %v454
    %v456 = vmul.f32 %v453, %v455
    %v457 = vadd.f32 %v453, %v456
    %vm458 = vweird.f32 %v452
    %vm459 = vweird.f32 %v453
    %vm460 = vmor %vm458, %vm459
    %v461 = vsel %vm460, %v453, %v457
    %v462 = vand.u32 2147483647, %v452
    %vm463 = vcmp.eq.f32.partialorder %v462, 8.507059e+37
    %v464 = vand.u32 %v452, 2147483648
    %v465 = vor.u32 1.1754944e-38, %v464
    %v466 = vsel %vm463, %v465, %v461
    %v467 = vmul.f32 1.0, %v466
    %v468 = vld [vmem:[#allocation3 + $0x10] ss:$0 sm:$0xff]
    %v469 = vld [vmem:[#allocation12 + $0x8] sm:$0xf]
    %v470 = vld [vmem:[#allocation12 + $0x18] sm:$0xf]
    %v471 = vld [vmem:[#allocation12 + $0x28] sm:$0xf]
    %v472 = vld [vmem:[#allocation12 + $0x38] sm:$0xf]
    %v473 = vld [vmem:[#allocation12 + $0x48] sm:$0xf]
    %v474 = vld [vmem:[#allocation12 + $0x58] sm:$0xf]
    %v475 = vld [vmem:[#allocation12 + $0x68] sm:$0xf]
    %v476 = vld [vmem:[#allocation12 + $0x78] sm:$0xf]
    %v477 = vld [vmem:[#allocation12 + $0x88] sm:$0xf]
    %v478 = vld [vmem:[#allocation12 + $0x98] sm:$0xf]
    %v479 = vld [vmem:[#allocation12 + $0xa8] sm:$0xf]
    %v480 = vld [vmem:[#allocation12 + $0xb8] sm:$0xf]
    %v481 = vld [vmem:[#allocation12 + $0xc8] sm:$0xf]
    %v482 = vld [vmem:[#allocation12 + $0xd8] sm:$0xf]
    %v483 = vld [vmem:[#allocation12 + $0xe8] sm:$0xf]
    %v484 = vld [vmem:[#allocation12 + $0xf8] sm:$0xf]
    %v501 = vunpack.c.l.b16 %v469
    %v502 = vunpack.c.l.b16 %v470
    %v503 = vunpack.c.l.b16 %v471
    %v504 = vunpack.c.l.b16 %v472
    %v505 = vunpack.c.l.b16 %v473
    %v506 = vunpack.c.l.b16 %v474
    %v507 = vunpack.c.l.b16 %v475
    %v508 = vunpack.c.l.b16 %v476
    %v509 = vunpack.c.l.b16 %v477
    %v510 = vunpack.c.l.b16 %v478
    %v511 = vunpack.c.l.b16 %v479
    %v512 = vunpack.c.l.b16 %v480
    %v513 = vunpack.c.l.b16 %v481
    %v514 = vunpack.c.l.b16 %v482
    %v515 = vunpack.c.l.b16 %v483
    %v516 = vunpack.c.l.b16 %v484
    %v517 = vpack.c.b16 %v502, %v501
    %v518 = vpack.c.b16 %v504, %v503
    %v519 = vpack.c.b16 %v506, %v505
    %v520 = vpack.c.b16 %v508, %v507
    %v521 = vpack.c.b16 %v510, %v509
    %v522 = vpack.c.b16 %v512, %v511
    %v523 = vpack.c.b16 %v514, %v513
    %v524 = vpack.c.b16 %v516, %v515
    %533 = vmatpush.bf16.msra.mxu0 %v524
    %534 = vmatpush.bf16.msra.mxu0 %v523
    %535 = vmatpush.bf16.msra.mxu0 %v522
    %536 = vmatpush.bf16.msra.mxu0 %v521
    %537 = vmatpush.bf16.msra.mxu0 %v520
    %538 = vmatpush.bf16.msra.mxu0 %v519
    %539 = vmatpush.bf16.msra.mxu0 %v518
    %540 = vmatpush.bf16.msra.mxu0 %v517
    %541 = vmatmul.bf16.gmra.mxu0 0
    %v542 = vpop.f32.mrf.mxu0
    %v543 = vadd.f32 0.0, %v542
    %v544 = vpop.f32.mrf.mxu0
    %545 = vdwg.mxu0
    %v546 = vadd.f32 %v468, %v543
    %v547 = vtanh.pop %v546
    %v548 = vld [vmem:[#allocation3 + $0x18] ss:$0 sm:$0xff]
    %v549 = vld [vmem:[#allocation12 + $0xc] sm:$0xf]
    %v550 = vld [vmem:[#allocation12 + $0x1c] sm:$0xf]
    %v551 = vld [vmem:[#allocation12 + $0x2c] sm:$0xf]
    %v552 = vld [vmem:[#allocation12 + $0x3c] sm:$0xf]
    %v553 = vld [vmem:[#allocation12 + $0x4c] sm:$0xf]
    %v554 = vld [vmem:[#allocation12 + $0x5c] sm:$0xf]
    %v555 = vld [vmem:[#allocation12 + $0x6c] sm:$0xf]
    %v556 = vld [vmem:[#allocation12 + $0x7c] sm:$0xf]
    %v557 = vld [vmem:[#allocation12 + $0x8c] sm:$0xf]
    %v558 = vld [vmem:[#allocation12 + $0x9c] sm:$0xf]
    %v559 = vld [vmem:[#allocation12 + $0xac] sm:$0xf]
    %v560 = vld [vmem:[#allocation12 + $0xbc] sm:$0xf]
    %v561 = vld [vmem:[#allocation12 + $0xcc] sm:$0xf]
    %v562 = vld [vmem:[#allocation12 + $0xdc] sm:$0xf]
    %v563 = vld [vmem:[#allocation12 + $0xec] sm:$0xf]
    %v564 = vld [vmem:[#allocation12 + $0xfc] sm:$0xf]
    %v581 = vunpack.c.l.b16 %v549
    %v582 = vunpack.c.l.b16 %v550
    %v583 = vunpack.c.l.b16 %v551
    %v584 = vunpack.c.l.b16 %v552
    %v585 = vunpack.c.l.b16 %v553
    %v586 = vunpack.c.l.b16 %v554
    %v587 = vunpack.c.l.b16 %v555
    %v588 = vunpack.c.l.b16 %v556
    %v589 = vunpack.c.l.b16 %v557
    %v590 = vunpack.c.l.b16 %v558
    %v591 = vunpack.c.l.b16 %v559
    %v592 = vunpack.c.l.b16 %v560
    %v593 = vunpack.c.l.b16 %v561
    %v594 = vunpack.c.l.b16 %v562
    %v595 = vunpack.c.l.b16 %v563
    %v596 = vunpack.c.l.b16 %v564
    %v597 = vpack.c.b16 %v582, %v581
    %v598 = vpack.c.b16 %v584, %v583
    %v599 = vpack.c.b16 %v586, %v585
    %v600 = vpack.c.b16 %v588, %v587
    %v601 = vpack.c.b16 %v590, %v589
    %v602 = vpack.c.b16 %v592, %v591
    %v603 = vpack.c.b16 %v594, %v593
    %v604 = vpack.c.b16 %v596, %v595
    %613 = vmatpush.bf16.msra.mxu0 %v604
    %614 = vmatpush.bf16.msra.mxu0 %v603
    %615 = vmatpush.bf16.msra.mxu0 %v602
    %616 = vmatpush.bf16.msra.mxu0 %v601
    %617 = vmatpush.bf16.msra.mxu0 %v600
    %618 = vmatpush.bf16.msra.mxu0 %v599
    %619 = vmatpush.bf16.msra.mxu0 %v598
    %620 = vmatpush.bf16.msra.mxu0 %v597
    %621 = vmatmul.bf16.gmra.mxu0 0
    %v622 = vpop.f32.mrf.mxu0
    %v623 = vadd.f32 0.0, %v622
    %v624 = vpop.f32.mrf.mxu0
    %625 = vdwg.mxu0
    %v626 = vadd.f32 %v548, %v623
    %v627 = vxor.u32 %v626, 2147483648
    %v628 = vmul.f32 %v627, 1.442695
    %v629 = vpow.pop %v628
    %v630 = vadd.f32 %v629, 1.0
    %v631 = vrcp.pop %v630
    %v632 = vmul.f32 %v630, %v631
    %v633 = vsub.f32 1.0, %v632
    %v634 = vmul.f32 %v631, %v633
    %v635 = vadd.f32 %v631, %v634
    %vm636 = vweird.f32 %v630
    %vm637 = vweird.f32 %v631
    %vm638 = vmor %vm636, %vm637
    %v639 = vsel %vm638, %v631, %v635
    %v640 = vand.u32 2147483647, %v630
    %vm641 = vcmp.eq.f32.partialorder %v640, 8.507059e+37
    %v642 = vand.u32 %v630, 2147483648
    %v643 = vor.u32 1.1754944e-38, %v642
    %v644 = vsel %vm641, %v643, %v639
    %v645 = vmul.f32 1.0, %v644
    %v646 = vmul.f32 %v467, 0.0
    %v647 = vmul.f32 %v369, %v547
    %v648 = vadd.f32 %v646, %v647
    %v649 = vtanh.pop %v648
    %v650 = vmul.f32 %v645, %v649
    %651 = vst [vmem:[#allocation4] sm:$0x1] %v650
    %v652 = vpack.c.bf16 %v650, %v650
    %v653 = vld [vmem:[#allocation3 + $0x1] ss:$0 sm:$0xff]
    %v654 = vld [vmem:[#allocation12] sm:$0xf]
    %v655 = vld [vmem:[#allocation12 + $0x10] sm:$0xf]
    %v656 = vld [vmem:[#allocation12 + $0x20] sm:$0xf]
    %v657 = vld [vmem:[#allocation12 + $0x30] sm:$0xf]
    %v658 = vld [vmem:[#allocation12 + $0x40] sm:$0xf]
    %v659 = vld [vmem:[#allocation12 + $0x50] sm:$0xf]
    %v660 = vld [vmem:[#allocation12 + $0x60] sm:$0xf]
    %v661 = vld [vmem:[#allocation12 + $0x70] sm:$0xf]
    %v662 = vld [vmem:[#allocation12 + $0x80] sm:$0xf]
    %v663 = vld [vmem:[#allocation12 + $0x90] sm:$0xf]
    %v664 = vld [vmem:[#allocation12 + $0xa0] sm:$0xf]
    %v665 = vld [vmem:[#allocation12 + $0xb0] sm:$0xf]
    %v666 = vld [vmem:[#allocation12 + $0xc0] sm:$0xf]
    %v667 = vld [vmem:[#allocation12 + $0xd0] sm:$0xf]
    %v668 = vld [vmem:[#allocation12 + $0xe0] sm:$0xf]
    %v669 = vld [vmem:[#allocation12 + $0xf0] sm:$0xf]
    %v686 = vunpack.c.l.b16 %v654
    %v687 = vunpack.c.l.b16 %v655
    %v688 = vunpack.c.l.b16 %v656
    %v689 = vunpack.c.l.b16 %v657
    %v690 = vunpack.c.l.b16 %v658
    %v691 = vunpack.c.l.b16 %v659
    %v692 = vunpack.c.l.b16 %v660
    %v693 = vunpack.c.l.b16 %v661
    %v694 = vunpack.c.l.b16 %v662
    %v695 = vunpack.c.l.b16 %v663
    %v696 = vunpack.c.l.b16 %v664
    %v697 = vunpack.c.l.b16 %v665
    %v698 = vunpack.c.l.b16 %v666
    %v699 = vunpack.c.l.b16 %v667
    %v700 = vunpack.c.l.b16 %v668
    %v701 = vunpack.c.l.b16 %v669
    %v702 = vpack.c.b16 %v687, %v686
    %v703 = vpack.c.b16 %v689, %v688
    %v704 = vpack.c.b16 %v691, %v690
    %v705 = vpack.c.b16 %v693, %v692
    %v706 = vpack.c.b16 %v695, %v694
    %v707 = vpack.c.b16 %v697, %v696
    %v708 = vpack.c.b16 %v699, %v698
    %v709 = vpack.c.b16 %v701, %v700
    %718 = vmatpush.bf16.msra.mxu0 %v709
    %719 = vmatpush.bf16.msra.mxu0 %v708
    %720 = vmatpush.bf16.msra.mxu0 %v707
    %721 = vmatpush.bf16.msra.mxu0 %v706
    %722 = vmatpush.bf16.msra.mxu0 %v705
    %723 = vmatpush.bf16.msra.mxu0 %v704
    %724 = vmatpush.bf16.msra.mxu0 %v703
    %725 = vmatpush.bf16.msra.mxu0 %v702
    %726 = vmatmul.bf16.gmra.mxu0 %v652
    %v727 = vpop.f32.mrf.mxu0
    %v728 = vadd.f32 0.0, %v727
    %v729 = vpop.f32.mrf.mxu0
    %730 = vdwg.mxu0
    %v731 = vadd.f32 %v653, %v728
    %v732 = vxor.u32 %v731, 2147483648
    %v733 = vmul.f32 %v732, 1.442695
    %v734 = vpow.pop %v733
    %v735 = vadd.f32 %v734, 1.0
    %v736 = vrcp.pop %v735
    %v737 = vmul.f32 %v735, %v736
    %v738 = vsub.f32 1.0, %v737
    %v739 = vmul.f32 %v736, %v738
    %v740 = vadd.f32 %v736, %v739
    %vm741 = vweird.f32 %v735
    %vm742 = vweird.f32 %v736
    %vm743 = vmor %vm741, %vm742
    %v744 = vsel %vm743, %v736, %v740
    %v745 = vand.u32 2147483647, %v735
    %vm746 = vcmp.eq.f32.partialorder %v745, 8.507059e+37
    %v747 = vand.u32 %v735, 2147483648
    %v748 = vor.u32 1.1754944e-38, %v747
    %v749 = vsel %vm746, %v748, %v744
    %v750 = vmul.f32 1.0, %v749
    %v751 = vld [vmem:[#allocation3 + $0x9] ss:$0 sm:$0xff]
    %v752 = vld [vmem:[#allocation12 + $0x4] sm:$0xf]
    %v753 = vld [vmem:[#allocation12 + $0x14] sm:$0xf]
    %v754 = vld [vmem:[#allocation12 + $0x24] sm:$0xf]
    %v755 = vld [vmem:[#allocation12 + $0x34] sm:$0xf]
    %v756 = vld [vmem:[#allocation12 + $0x44] sm:$0xf]
    %v757 = vld [vmem:[#allocation12 + $0x54] sm:$0xf]
    %v758 = vld [vmem:[#allocation12 + $0x64] sm:$0xf]
    %v759 = vld [vmem:[#allocation12 + $0x74] sm:$0xf]
    %v760 = vld [vmem:[#allocation12 + $0x84] sm:$0xf]
    %v761 = vld [vmem:[#allocation12 + $0x94] sm:$0xf]
    %v762 = vld [vmem:[#allocation12 + $0xa4] sm:$0xf]
    %v763 = vld [vmem:[#allocation12 + $0xb4] sm:$0xf]
    %v764 = vld [vmem:[#allocation12 + $0xc4] sm:$0xf]
    %v765 = vld [vmem:[#allocation12 + $0xd4] sm:$0xf]
    %v766 = vld [vmem:[#allocation12 + $0xe4] sm:$0xf]
    %v767 = vld [vmem:[#allocation12 + $0xf4] sm:$0xf]
    %v784 = vunpack.c.l.b16 %v752
    %v785 = vunpack.c.l.b16 %v753
    %v786 = vunpack.c.l.b16 %v754
    %v787 = vunpack.c.l.b16 %v755
    %v788 = vunpack.c.l.b16 %v756
    %v789 = vunpack.c.l.b16 %v757
    %v790 = vunpack.c.l.b16 %v758
    %v791 = vunpack.c.l.b16 %v759
    %v792 = vunpack.c.l.b16 %v760
    %v793 = vunpack.c.l.b16 %v761
    %v794 = vunpack.c.l.b16 %v762
    %v795 = vunpack.c.l.b16 %v763
    %v796 = vunpack.c.l.b16 %v764
    %v797 = vunpack.c.l.b16 %v765
    %v798 = vunpack.c.l.b16 %v766
    %v799 = vunpack.c.l.b16 %v767
    %v800 = vpack.c.b16 %v785, %v784
    %v801 = vpack.c.b16 %v787, %v786
    %v802 = vpack.c.b16 %v789, %v788
    %v803 = vpack.c.b16 %v791, %v790
    %v804 = vpack.c.b16 %v793, %v792
    %v805 = vpack.c.b16 %v795, %v794
    %v806 = vpack.c.b16 %v797, %v796
    %v807 = vpack.c.b16 %v799, %v798
    %816 = vmatpush.bf16.msra.mxu0 %v807
    %817 = vmatpush.bf16.msra.mxu0 %v806
    %818 = vmatpush.bf16.msra.mxu0 %v805
    %819 = vmatpush.bf16.msra.mxu0 %v804
    %820 = vmatpush.bf16.msra.mxu0 %v803
    %821 = vmatpush.bf16.msra.mxu0 %v802
    %822 = vmatpush.bf16.msra.mxu0 %v801
    %823 = vmatpush.bf16.msra.mxu0 %v800
    %824 = vmatmul.bf16.gmra.mxu0 %v652
    %v825 = vpop.f32.mrf.mxu0
    %v826 = vadd.f32 0.0, %v825
    %v827 = vpop.f32.mrf.mxu0
    %828 = vdwg.mxu0
    %v829 = vadd.f32 %v751, %v826
    %v830 = vxor.u32 %v829, 2147483648
    %v831 = vmul.f32 %v830, 1.442695
    %v832 = vpow.pop %v831
    %v833 = vadd.f32 %v832, 1.0
    %v834 = vrcp.pop %v833
    %v835 = vmul.f32 %v833, %v834
    %v836 = vsub.f32 1.0, %v835
    %v837 = vmul.f32 %v834, %v836
    %v838 = vadd.f32 %v834, %v837
    %vm839 = vweird.f32 %v833
    %vm840 = vweird.f32 %v834
    %vm841 = vmor %vm839, %vm840
    %v842 = vsel %vm841, %v834, %v838
    %v843 = vand.u32 2147483647, %v833
    %vm844 = vcmp.eq.f32.partialorder %v843, 8.507059e+37
    %v845 = vand.u32 %v833, 2147483648
    %v846 = vor.u32 1.1754944e-38, %v845
    %v847 = vsel %vm844, %v846, %v842
    %v848 = vmul.f32 1.0, %v847
    %v849 = vld [vmem:[#allocation3 + $0x11] ss:$0 sm:$0xff]
    %v850 = vld [vmem:[#allocation12 + $0x8] sm:$0xf]
    %v851 = vld [vmem:[#allocation12 + $0x18] sm:$0xf]
    %v852 = vld [vmem:[#allocation12 + $0x28] sm:$0xf]
    %v853 = vld [vmem:[#allocation12 + $0x38] sm:$0xf]
    %v854 = vld [vmem:[#allocation12 + $0x48] sm:$0xf]
    %v855 = vld [vmem:[#allocation12 + $0x58] sm:$0xf]
    %v856 = vld [vmem:[#allocation12 + $0x68] sm:$0xf]
    %v857 = vld [vmem:[#allocation12 + $0x78] sm:$0xf]
    %v858 = vld [vmem:[#allocation12 + $0x88] sm:$0xf]
    %v859 = vld [vmem:[#allocation12 + $0x98] sm:$0xf]
    %v860 = vld [vmem:[#allocation12 + $0xa8] sm:$0xf]
    %v861 = vld [vmem:[#allocation12 + $0xb8] sm:$0xf]
    %v862 = vld [vmem:[#allocation12 + $0xc8] sm:$0xf]
    %v863 = vld [vmem:[#allocation12 + $0xd8] sm:$0xf]
    %v864 = vld [vmem:[#allocation12 + $0xe8] sm:$0xf]
    %v865 = vld [vmem:[#allocation12 + $0xf8] sm:$0xf]
    %v882 = vunpack.c.l.b16 %v850
    %v883 = vunpack.c.l.b16 %v851
    %v884 = vunpack.c.l.b16 %v852
    %v885 = vunpack.c.l.b16 %v853
    %v886 = vunpack.c.l.b16 %v854
    %v887 = vunpack.c.l.b16 %v855
    %v888 = vunpack.c.l.b16 %v856
    %v889 = vunpack.c.l.b16 %v857
    %v890 = vunpack.c.l.b16 %v858
    %v891 = vunpack.c.l.b16 %v859
    %v892 = vunpack.c.l.b16 %v860
    %v893 = vunpack.c.l.b16 %v861
    %v894 = vunpack.c.l.b16 %v862
    %v895 = vunpack.c.l.b16 %v863
    %v896 = vunpack.c.l.b16 %v864
    %v897 = vunpack.c.l.b16 %v865
    %v898 = vpack.c.b16 %v883, %v882
    %v899 = vpack.c.b16 %v885, %v884
    %v900 = vpack.c.b16 %v887, %v886
    %v901 = vpack.c.b16 %v889, %v888
    %v902 = vpack.c.b16 %v891, %v890
    %v903 = vpack.c.b16 %v893, %v892
    %v904 = vpack.c.b16 %v895, %v894
    %v905 = vpack.c.b16 %v897, %v896
    %914 = vmatpush.bf16.msra.mxu0 %v905
    %915 = vmatpush.bf16.msra.mxu0 %v904
    %916 = vmatpush.bf16.msra.mxu0 %v903
    %917 = vmatpush.bf16.msra.mxu0 %v902
    %918 = vmatpush.bf16.msra.mxu0 %v901
    %919 = vmatpush.bf16.msra.mxu0 %v900
    %920 = vmatpush.bf16.msra.mxu0 %v899
    %921 = vmatpush.bf16.msra.mxu0 %v898
    %922 = vmatmul.bf16.gmra.mxu0 %v652
    %v923 = vpop.f32.mrf.mxu0
    %v924 = vadd.f32 0.0, %v923
    %v925 = vpop.f32.mrf.mxu0
    %926 = vdwg.mxu0
    %v927 = vadd.f32 %v849, %v924
    %v928 = vtanh.pop %v927
    %v929 = vld [vmem:[#allocation3 + $0x19] ss:$0 sm:$0xff]
    %v930 = vld [vmem:[#allocation12 + $0xc] sm:$0xf]
    %v931 = vld [vmem:[#allocation12 + $0x1c] sm:$0xf]
    %v932 = vld [vmem:[#allocation12 + $0x2c] sm:$0xf]
    %v933 = vld [vmem:[#allocation12 + $0x3c] sm:$0xf]
    %v934 = vld [vmem:[#allocation12 + $0x4c] sm:$0xf]
    %v935 = vld [vmem:[#allocation12 + $0x5c] sm:$0xf]
    %v936 = vld [vmem:[#allocation12 + $0x6c] sm:$0xf]
    %v937 = vld [vmem:[#allocation12 + $0x7c] sm:$0xf]
    %v938 = vld [vmem:[#allocation12 + $0x8c] sm:$0xf]
    %v939 = vld [vmem:[#allocation12 + $0x9c] sm:$0xf]
    %v940 = vld [vmem:[#allocation12 + $0xac] sm:$0xf]
    %v941 = vld [vmem:[#allocation12 + $0xbc] sm:$0xf]
    %v942 = vld [vmem:[#allocation12 + $0xcc] sm:$0xf]
    %v943 = vld [vmem:[#allocation12 + $0xdc] sm:$0xf]
    %v944 = vld [vmem:[#allocation12 + $0xec] sm:$0xf]
    %v945 = vld [vmem:[#allocation12 + $0xfc] sm:$0xf]
    %v962 = vunpack.c.l.b16 %v930
    %v963 = vunpack.c.l.b16 %v931
    %v964 = vunpack.c.l.b16 %v932
    %v965 = vunpack.c.l.b16 %v933
    %v966 = vunpack.c.l.b16 %v934
    %v967 = vunpack.c.l.b16 %v935
    %v968 = vunpack.c.l.b16 %v936
    %v969 = vunpack.c.l.b16 %v937
    %v970 = vunpack.c.l.b16 %v938
    %v971 = vunpack.c.l.b16 %v939
    %v972 = vunpack.c.l.b16 %v940
    %v973 = vunpack.c.l.b16 %v941
    %v974 = vunpack.c.l.b16 %v942
    %v975 = vunpack.c.l.b16 %v943
    %v976 = vunpack.c.l.b16 %v944
    %v977 = vunpack.c.l.b16 %v945
    %v978 = vpack.c.b16 %v963, %v962
    %v979 = vpack.c.b16 %v965, %v964
    %v980 = vpack.c.b16 %v967, %v966
    %v981 = vpack.c.b16 %v969, %v968
    %v982 = vpack.c.b16 %v971, %v970
    %v983 = vpack.c.b16 %v973, %v972
    %v984 = vpack.c.b16 %v975, %v974
    %v985 = vpack.c.b16 %v977, %v976
    %994 = vmatpush.bf16.msra.mxu0 %v985
    %995 = vmatpush.bf16.msra.mxu0 %v984
    %996 = vmatpush.bf16.msra.mxu0 %v983
    %997 = vmatpush.bf16.msra.mxu0 %v982
    %998 = vmatpush.bf16.msra.mxu0 %v981
    %999 = vmatpush.bf16.msra.mxu0 %v980
    %1000 = vmatpush.bf16.msra.mxu0 %v979
    %1001 = vmatpush.bf16.msra.mxu0 %v978
    %1002 = vmatmul.bf16.gmra.mxu0 %v652
    %v1003 = vpop.f32.mrf.mxu0
    %v1004 = vadd.f32 0.0, %v1003
    %v1005 = vpop.f32.mrf.mxu0
    %1006 = vdwg.mxu0
    %v1007 = vadd.f32 %v929, %v1004
    %v1008 = vxor.u32 %v1007, 2147483648
    %v1009 = vmul.f32 %v1008, 1.442695
    %v1010 = vpow.pop %v1009
    %v1011 = vadd.f32 %v1010, 1.0
    %v1012 = vrcp.pop %v1011
    %v1013 = vmul.f32 %v1011, %v1012
    %v1014 = vsub.f32 1.0, %v1013
    %v1015 = vmul.f32 %v1012, %v1014
    %v1016 = vadd.f32 %v1012, %v1015
    %vm1017 = vweird.f32 %v1011
    %vm1018 = vweird.f32 %v1012
    %vm1019 = vmor %vm1017, %vm1018
    %v1020 = vsel %vm1019, %v1012, %v1016
    %v1021 = vand.u32 2147483647, %v1011
    %vm1022 = vcmp.eq.f32.partialorder %v1021, 8.507059e+37
    %v1023 = vand.u32 %v1011, 2147483648
    %v1024 = vor.u32 1.1754944e-38, %v1023
    %v1025 = vsel %vm1022, %v1024, %v1020
    %v1026 = vmul.f32 1.0, %v1025
    %v1027 = vmul.f32 %v848, %v648
    %v1028 = vmul.f32 %v750, %v928
    %v1029 = vadd.f32 %v1027, %v1028
    %v1030 = vtanh.pop %v1029
    %v1031 = vmul.f32 %v1026, %v1030
    %1032 = vst [vmem:[#allocation4 + $0x1] sm:$0x1] %v1031
    %v1033 = vpack.c.bf16 %v1031, %v1031
    %v1034 = vld [vmem:[#allocation3 + $0x2] ss:$0 sm:$0xff]
    %v1035 = vld [vmem:[#allocation12] sm:$0xf]
    %v1036 = vld [vmem:[#allocation12 + $0x10] sm:$0xf]
    %v1037 = vld [vmem:[#allocation12 + $0x20] sm:$0xf]
    %v1038 = vld [vmem:[#allocation12 + $0x30] sm:$0xf]
    %v1039 = vld [vmem:[#allocation12 + $0x40] sm:$0xf]
    %v1040 = vld [vmem:[#allocation12 + $0x50] sm:$0xf]
    %v1041 = vld [vmem:[#allocation12 + $0x60] sm:$0xf]
    %v1042 = vld [vmem:[#allocation12 + $0x70] sm:$0xf]
    %v1043 = vld [vmem:[#allocation12 + $0x80] sm:$0xf]
    %v1044 = vld [vmem:[#allocation12 + $0x90] sm:$0xf]
    %v1045 = vld [vmem:[#allocation12 + $0xa0] sm:$0xf]
    %v1046 = vld [vmem:[#allocation12 + $0xb0] sm:$0xf]
    %v1047 = vld [vmem:[#allocation12 + $0xc0] sm:$0xf]
    %v1048 = vld [vmem:[#allocation12 + $0xd0] sm:$0xf]
    %v1049 = vld [vmem:[#allocation12 + $0xe0] sm:$0xf]
    %v1050 = vld [vmem:[#allocation12 + $0xf0] sm:$0xf]
    %v1067 = vunpack.c.l.b16 %v1035
    %v1068 = vunpack.c.l.b16 %v1036
    %v1069 = vunpack.c.l.b16 %v1037
    %v1070 = vunpack.c.l.b16 %v1038
    %v1071 = vunpack.c.l.b16 %v1039
    %v1072 = vunpack.c.l.b16 %v1040
    %v1073 = vunpack.c.l.b16 %v1041
    %v1074 = vunpack.c.l.b16 %v1042
    %v1075 = vunpack.c.l.b16 %v1043
    %v1076 = vunpack.c.l.b16 %v1044
    %v1077 = vunpack.c.l.b16 %v1045
    %v1078 = vunpack.c.l.b16 %v1046
    %v1079 = vunpack.c.l.b16 %v1047
    %v1080 = vunpack.c.l.b16 %v1048
    %v1081 = vunpack.c.l.b16 %v1049
    %v1082 = vunpack.c.l.b16 %v1050
    %v1083 = vpack.c.b16 %v1068, %v1067
    %v1084 = vpack.c.b16 %v1070, %v1069
    %v1085 = vpack.c.b16 %v1072, %v1071
    %v1086 = vpack.c.b16 %v1074, %v1073
    %v1087 = vpack.c.b16 %v1076, %v1075
    %v1088 = vpack.c.b16 %v1078, %v1077
    %v1089 = vpack.c.b16 %v1080, %v1079
    %v1090 = vpack.c.b16 %v1082, %v1081
    %1099 = vmatpush.bf16.msra.mxu0 %v1090
    %1100 = vmatpush.bf16.msra.mxu0 %v1089
    %1101 = vmatpush.bf16.msra.mxu0 %v1088
    %1102 = vmatpush.bf16.msra.mxu0 %v1087
    %1103 = vmatpush.bf16.msra.mxu0 %v1086
    %1104 = vmatpush.bf16.msra.mxu0 %v1085
    %1105 = vmatpush.bf16.msra.mxu0 %v1084
    %1106 = vmatpush.bf16.msra.mxu0 %v1083
    %1107 = vmatmul.bf16.gmra.mxu0 %v1033
    %v1108 = vpop.f32.mrf.mxu0
    %v1109 = vadd.f32 0.0, %v1108
    %v1110 = vpop.f32.mrf.mxu0
    %1111 = vdwg.mxu0
    %v1112 = vadd.f32 %v1034, %v1109
    %v1113 = vxor.u32 %v1112, 2147483648
    %v1114 = vmul.f32 %v1113, 1.442695
    %v1115 = vpow.pop %v1114
    %v1116 = vadd.f32 %v1115, 1.0
    %v1117 = vrcp.pop %v1116
    %v1118 = vmul.f32 %v1116, %v1117
    %v1119 = vsub.f32 1.0, %v1118
    %v1120 = vmul.f32 %v1117, %v1119
    %v1121 = vadd.f32 %v1117, %v1120
    %vm1122 = vweird.f32 %v1116
    %vm1123 = vweird.f32 %v1117
    %vm1124 = vmor %vm1122, %vm1123
    %v1125 = vsel %vm1124, %v1117, %v1121
    %v1126 = vand.u32 2147483647, %v1116
    %vm1127 = vcmp.eq.f32.partialorder %v1126, 8.507059e+37
    %v1128 = vand.u32 %v1116, 2147483648
    %v1129 = vor.u32 1.1754944e-38, %v1128
    %v1130 = vsel %vm1127, %v1129, %v1125
    %v1131 = vmul.f32 1.0, %v1130
    %v1132 = vld [vmem:[#allocation3 + $0xa] ss:$0 sm:$0xff]
    %v1133 = vld [vmem:[#allocation12 + $0x4] sm:$0xf]
    %v1134 = vld [vmem:[#allocation12 + $0x14] sm:$0xf]
    %v1135 = vld [vmem:[#allocation12 + $0x24] sm:$0xf]
    %v1136 = vld [vmem:[#allocation12 + $0x34] sm:$0xf]
    %v1137 = vld [vmem:[#allocation12 + $0x44] sm:$0xf]
    %v1138 = vld [vmem:[#allocation12 + $0x54] sm:$0xf]
    %v1139 = vld [vmem:[#allocation12 + $0x64] sm:$0xf]
    %v1140 = vld [vmem:[#allocation12 + $0x74] sm:$0xf]
    %v1141 = vld [vmem:[#allocation12 + $0x84] sm:$0xf]
    %v1142 = vld [vmem:[#allocation12 + $0x94] sm:$0xf]
    %v1143 = vld [vmem:[#allocation12 + $0xa4] sm:$0xf]
    %v1144 = vld [vmem:[#allocation12 + $0xb4] sm:$0xf]
    %v1145 = vld [vmem:[#allocation12 + $0xc4] sm:$0xf]
    %v1146 = vld [vmem:[#allocation12 + $0xd4] sm:$0xf]
    %v1147 = vld [vmem:[#allocation12 + $0xe4] sm:$0xf]
    %v1148 = vld [vmem:[#allocation12 + $0xf4] sm:$0xf]
    %v1165 = vunpack.c.l.b16 %v1133
    %v1166 = vunpack.c.l.b16 %v1134
    %v1167 = vunpack.c.l.b16 %v1135
    %v1168 = vunpack.c.l.b16 %v1136
    %v1169 = vunpack.c.l.b16 %v1137
    %v1170 = vunpack.c.l.b16 %v1138
    %v1171 = vunpack.c.l.b16 %v1139
    %v1172 = vunpack.c.l.b16 %v1140
    %v1173 = vunpack.c.l.b16 %v1141
    %v1174 = vunpack.c.l.b16 %v1142
    %v1175 = vunpack.c.l.b16 %v1143
    %v1176 = vunpack.c.l.b16 %v1144
    %v1177 = vunpack.c.l.b16 %v1145
    %v1178 = vunpack.c.l.b16 %v1146
    %v1179 = vunpack.c.l.b16 %v1147
    %v1180 = vunpack.c.l.b16 %v1148
    %v1181 = vpack.c.b16 %v1166, %v1165
    %v1182 = vpack.c.b16 %v1168, %v1167
    %v1183 = vpack.c.b16 %v1170, %v1169
    %v1184 = vpack.c.b16 %v1172, %v1171
    %v1185 = vpack.c.b16 %v1174, %v1173
    %v1186 = vpack.c.b16 %v1176, %v1175
    %v1187 = vpack.c.b16 %v1178, %v1177
    %v1188 = vpack.c.b16 %v1180, %v1179
    %1197 = vmatpush.bf16.msra.mxu0 %v1188
    %1198 = vmatpush.bf16.msra.mxu0 %v1187
    %1199 = vmatpush.bf16.msra.mxu0 %v1186
    %1200 = vmatpush.bf16.msra.mxu0 %v1185
    %1201 = vmatpush.bf16.msra.mxu0 %v1184
    %1202 = vmatpush.bf16.msra.mxu0 %v1183
    %1203 = vmatpush.bf16.msra.mxu0 %v1182
    %1204 = vmatpush.bf16.msra.mxu0 %v1181
    %1205 = vmatmul.bf16.gmra.mxu0 %v1033
    %v1206 = vpop.f32.mrf.mxu0
    %v1207 = vadd.f32 0.0, %v1206
    %v1208 = vpop.f32.mrf.mxu0
    %1209 = vdwg.mxu0
    %v1210 = vadd.f32 %v1132, %v1207
    %v1211 = vxor.u32 %v1210, 2147483648
    %v1212 = vmul.f32 %v1211, 1.442695
    %v1213 = vpow.pop %v1212
    %v1214 = vadd.f32 %v1213, 1.0
    %v1215 = vrcp.pop %v1214
    %v1216 = vmul.f32 %v1214, %v1215
    %v1217 = vsub.f32 1.0, %v1216
    %v1218 = vmul.f32 %v1215, %v1217
    %v1219 = vadd.f32 %v1215, %v1218
    %vm1220 = vweird.f32 %v1214
    %vm1221 = vweird.f32 %v1215
    %vm1222 = vmor %vm1220, %vm1221
    %v1223 = vsel %vm1222, %v1215, %v1219
    %v1224 = vand.u32 2147483647, %v1214
    %vm1225 = vcmp.eq.f32.partialorder %v1224, 8.507059e+37
    %v1226 = vand.u32 %v1214, 2147483648
    %v1227 = vor.u32 1.1754944e-38, %v1226
    %v1228 = vsel %vm1225, %v1227, %v1223
    %v1229 = vmul.f32 1.0, %v1228
    %v1230 = vld [vmem:[#allocation3 + $0x12] ss:$0 sm:$0xff]
    %v1231 = vld [vmem:[#allocation12 + $0x8] sm:$0xf]
    %v1232 = vld [vmem:[#allocation12 + $0x18] sm:$0xf]
    %v1233 = vld [vmem:[#allocation12 + $0x28] sm:$0xf]
    %v1234 = vld [vmem:[#allocation12 + $0x38] sm:$0xf]
    %v1235 = vld [vmem:[#allocation12 + $0x48] sm:$0xf]
    %v1236 = vld [vmem:[#allocation12 + $0x58] sm:$0xf]
    %v1237 = vld [vmem:[#allocation12 + $0x68] sm:$0xf]
    %v1238 = vld [vmem:[#allocation12 + $0x78] sm:$0xf]
    %v1239 = vld [vmem:[#allocation12 + $0x88] sm:$0xf]
    %v1240 = vld [vmem:[#allocation12 + $0x98] sm:$0xf]
    %v1241 = vld [vmem:[#allocation12 + $0xa8] sm:$0xf]
    %v1242 = vld [vmem:[#allocation12 + $0xb8] sm:$0xf]
    %v1243 = vld [vmem:[#allocation12 + $0xc8] sm:$0xf]
    %v1244 = vld [vmem:[#allocation12 + $0xd8] sm:$0xf]
    %v1245 = vld [vmem:[#allocation12 + $0xe8] sm:$0xf]
    %v1246 = vld [vmem:[#allocation12 + $0xf8] sm:$0xf]
    %v1263 = vunpack.c.l.b16 %v1231
    %v1264 = vunpack.c.l.b16 %v1232
    %v1265 = vunpack.c.l.b16 %v1233
    %v1266 = vunpack.c.l.b16 %v1234
    %v1267 = vunpack.c.l.b16 %v1235
    %v1268 = vunpack.c.l.b16 %v1236
    %v1269 = vunpack.c.l.b16 %v1237
    %v1270 = vunpack.c.l.b16 %v1238
    %v1271 = vunpack.c.l.b16 %v1239
    %v1272 = vunpack.c.l.b16 %v1240
    %v1273 = vunpack.c.l.b16 %v1241
    %v1274 = vunpack.c.l.b16 %v1242
    %v1275 = vunpack.c.l.b16 %v1243
    %v1276 = vunpack.c.l.b16 %v1244
    %v1277 = vunpack.c.l.b16 %v1245
    %v1278 = vunpack.c.l.b16 %v1246
    %v1279 = vpack.c.b16 %v1264, %v1263
    %v1280 = vpack.c.b16 %v1266, %v1265
    %v1281 = vpack.c.b16 %v1268, %v1267
    %v1282 = vpack.c.b16 %v1270, %v1269
    %v1283 = vpack.c.b16 %v1272, %v1271
    %v1284 = vpack.c.b16 %v1274, %v1273
    %v1285 = vpack.c.b16 %v1276, %v1275
    %v1286 = vpack.c.b16 %v1278, %v1277
    %1295 = vmatpush.bf16.msra.mxu0 %v1286
    %1296 = vmatpush.bf16.msra.mxu0 %v1285
    %1297 = vmatpush.bf16.msra.mxu0 %v1284
    %1298 = vmatpush.bf16.msra.mxu0 %v1283
    %1299 = vmatpush.bf16.msra.mxu0 %v1282
    %1300 = vmatpush.bf16.msra.mxu0 %v1281
    %1301 = vmatpush.bf16.msra.mxu0 %v1280
    %1302 = vmatpush.bf16.msra.mxu0 %v1279
    %1303 = vmatmul.bf16.gmra.mxu0 %v1033
    %v1304 = vpop.f32.mrf.mxu0
    %v1305 = vadd.f32 0.0, %v1304
    %v1306 = vpop.f32.mrf.mxu0
    %1307 = vdwg.mxu0
    %v1308 = vadd.f32 %v1230, %v1305
    %v1309 = vtanh.pop %v1308
    %v1310 = vld [vmem:[#allocation3 + $0x1a] ss:$0 sm:$0xff]
    %v1311 = vld [vmem:[#allocation12 + $0xc] sm:$0xf]
    %v1312 = vld [vmem:[#allocation12 + $0x1c] sm:$0xf]
    %v1313 = vld [vmem:[#allocation12 + $0x2c] sm:$0xf]
    %v1314 = vld [vmem:[#allocation12 + $0x3c] sm:$0xf]
    %v1315 = vld [vmem:[#allocation12 + $0x4c] sm:$0xf]
    %v1316 = vld [vmem:[#allocation12 + $0x5c] sm:$0xf]
    %v1317 = vld [vmem:[#allocation12 + $0x6c] sm:$0xf]
    %v1318 = vld [vmem:[#allocation12 + $0x7c] sm:$0xf]
    %v1319 = vld [vmem:[#allocation12 + $0x8c] sm:$0xf]
    %v1320 = vld [vmem:[#allocation12 + $0x9c] sm:$0xf]
    %v1321 = vld [vmem:[#allocation12 + $0xac] sm:$0xf]
    %v1322 = vld [vmem:[#allocation12 + $0xbc] sm:$0xf]
    %v1323 = vld [vmem:[#allocation12 + $0xcc] sm:$0xf]
    %v1324 = vld [vmem:[#allocation12 + $0xdc] sm:$0xf]
    %v1325 = vld [vmem:[#allocation12 + $0xec] sm:$0xf]
    %v1326 = vld [vmem:[#allocation12 + $0xfc] sm:$0xf]
    %v1343 = vunpack.c.l.b16 %v1311
    %v1344 = vunpack.c.l.b16 %v1312
    %v1345 = vunpack.c.l.b16 %v1313
    %v1346 = vunpack.c.l.b16 %v1314
    %v1347 = vunpack.c.l.b16 %v1315
    %v1348 = vunpack.c.l.b16 %v1316
    %v1349 = vunpack.c.l.b16 %v1317
    %v1350 = vunpack.c.l.b16 %v1318
    %v1351 = vunpack.c.l.b16 %v1319
    %v1352 = vunpack.c.l.b16 %v1320
    %v1353 = vunpack.c.l.b16 %v1321
    %v1354 = vunpack.c.l.b16 %v1322
    %v1355 = vunpack.c.l.b16 %v1323
    %v1356 = vunpack.c.l.b16 %v1324
    %v1357 = vunpack.c.l.b16 %v1325
    %v1358 = vunpack.c.l.b16 %v1326
    %v1359 = vpack.c.b16 %v1344, %v1343
    %v1360 = vpack.c.b16 %v1346, %v1345
    %v1361 = vpack.c.b16 %v1348, %v1347
    %v1362 = vpack.c.b16 %v1350, %v1349
    %v1363 = vpack.c.b16 %v1352, %v1351
    %v1364 = vpack.c.b16 %v1354, %v1353
    %v1365 = vpack.c.b16 %v1356, %v1355
    %v1366 = vpack.c.b16 %v1358, %v1357
    %1375 = vmatpush.bf16.msra.mxu0 %v1366
    %1376 = vmatpush.bf16.msra.mxu0 %v1365
    %1377 = vmatpush.bf16.msra.mxu0 %v1364
    %1378 = vmatpush.bf16.msra.mxu0 %v1363
    %1379 = vmatpush.bf16.msra.mxu0 %v1362
    %1380 = vmatpush.bf16.msra.mxu0 %v1361
    %1381 = vmatpush.bf16.msra.mxu0 %v1360
    %1382 = vmatpush.bf16.msra.mxu0 %v1359
    %1383 = vmatmul.bf16.gmra.mxu0 %v1033
    %v1384 = vpop.f32.mrf.mxu0
    %v1385 = vadd.f32 0.0, %v1384
    %v1386 = vpop.f32.mrf.mxu0
    %1387 = vdwg.mxu0
    %v1388 = vadd.f32 %v1310, %v1385
    %v1389 = vxor.u32 %v1388, 2147483648
    %v1390 = vmul.f32 %v1389, 1.442695
    %v1391 = vpow.pop %v1390
    %v1392 = vadd.f32 %v1391, 1.0
    %v1393 = vrcp.pop %v1392
    %v1394 = vmul.f32 %v1392, %v1393
    %v1395 = vsub.f32 1.0, %v1394
    %v1396 = vmul.f32 %v1393, %v1395
    %v1397 = vadd.f32 %v1393, %v1396
    %vm1398 = vweird.f32 %v1392
    %vm1399 = vweird.f32 %v1393
    %vm1400 = vmor %vm1398, %vm1399
    %v1401 = vsel %vm1400, %v1393, %v1397
    %v1402 = vand.u32 2147483647, %v1392
    %vm1403 = vcmp.eq.f32.partialorder %v1402, 8.507059e+37
    %v1404 = vand.u32 %v1392, 2147483648
    %v1405 = vor.u32 1.1754944e-38, %v1404
    %v1406 = vsel %vm1403, %v1405, %v1401
    %v1407 = vmul.f32 1.0, %v1406
    %v1408 = vmul.f32 %v1229, %v1029
    %v1409 = vmul.f32 %v1131, %v1309
    %v1410 = vadd.f32 %v1408, %v1409
    %v1411 = vtanh.pop %v1410
    %v1412 = vmul.f32 %v1407, %v1411
    %1413 = vst [vmem:[#allocation4 + $0x2] sm:$0x1] %v1412
    %v1414 = vpack.c.bf16 %v1412, %v1412
    %v1415 = vld [vmem:[#allocation3 + $0x3] ss:$0 sm:$0xff]
    %v1416 = vld [vmem:[#allocation12] sm:$0xf]
    %v1417 = vld [vmem:[#allocation12 + $0x10] sm:$0xf]
    %v1418 = vld [vmem:[#allocation12 + $0x20] sm:$0xf]
    %v1419 = vld [vmem:[#allocation12 + $0x30] sm:$0xf]
    %v1420 = vld [vmem:[#allocation12 + $0x40] sm:$0xf]
    %v1421 = vld [vmem:[#allocation12 + $0x50] sm:$0xf]
    %v1422 = vld [vmem:[#allocation12 + $0x60] sm:$0xf]
    %v1423 = vld [vmem:[#allocation12 + $0x70] sm:$0xf]
    %v1424 = vld [vmem:[#allocation12 + $0x80] sm:$0xf]
    %v1425 = vld [vmem:[#allocation12 + $0x90] sm:$0xf]
    %v1426 = vld [vmem:[#allocation12 + $0xa0] sm:$0xf]
    %v1427 = vld [vmem:[#allocation12 + $0xb0] sm:$0xf]
    %v1428 = vld [vmem:[#allocation12 + $0xc0] sm:$0xf]
    %v1429 = vld [vmem:[#allocation12 + $0xd0] sm:$0xf]
    %v1430 = vld [vmem:[#allocation12 + $0xe0] sm:$0xf]
    %v1431 = vld [vmem:[#allocation12 + $0xf0] sm:$0xf]
    %v1448 = vunpack.c.l.b16 %v1416
    %v1449 = vunpack.c.l.b16 %v1417
    %v1450 = vunpack.c.l.b16 %v1418
    %v1451 = vunpack.c.l.b16 %v1419
    %v1452 = vunpack.c.l.b16 %v1420
    %v1453 = vunpack.c.l.b16 %v1421
    %v1454 = vunpack.c.l.b16 %v1422
    %v1455 = vunpack.c.l.b16 %v1423
    %v1456 = vunpack.c.l.b16 %v1424
    %v1457 = vunpack.c.l.b16 %v1425
    %v1458 = vunpack.c.l.b16 %v1426
    %v1459 = vunpack.c.l.b16 %v1427
    %v1460 = vunpack.c.l.b16 %v1428
    %v1461 = vunpack.c.l.b16 %v1429
    %v1462 = vunpack.c.l.b16 %v1430
    %v1463 = vunpack.c.l.b16 %v1431
    %v1464 = vpack.c.b16 %v1449, %v1448
    %v1465 = vpack.c.b16 %v1451, %v1450
    %v1466 = vpack.c.b16 %v1453, %v1452
    %v1467 = vpack.c.b16 %v1455, %v1454
    %v1468 = vpack.c.b16 %v1457, %v1456
    %v1469 = vpack.c.b16 %v1459, %v1458
    %v1470 = vpack.c.b16 %v1461, %v1460
    %v1471 = vpack.c.b16 %v1463, %v1462
    %1480 = vmatpush.bf16.msra.mxu0 %v1471
    %1481 = vmatpush.bf16.msra.mxu0 %v1470
    %1482 = vmatpush.bf16.msra.mxu0 %v1469
    %1483 = vmatpush.bf16.msra.mxu0 %v1468
    %1484 = vmatpush.bf16.msra.mxu0 %v1467
    %1485 = vmatpush.bf16.msra.mxu0 %v1466
    %1486 = vmatpush.bf16.msra.mxu0 %v1465
    %1487 = vmatpush.bf16.msra.mxu0 %v1464
    %1488 = vmatmul.bf16.gmra.mxu0 %v1414
    %v1489 = vpop.f32.mrf.mxu0
    %v1490 = vadd.f32 0.0, %v1489
    %v1491 = vpop.f32.mrf.mxu0
    %1492 = vdwg.mxu0
    %v1493 = vadd.f32 %v1415, %v1490
    %v1494 = vxor.u32 %v1493, 2147483648
    %v1495 = vmul.f32 %v1494, 1.442695
    %v1496 = vpow.pop %v1495
    %v1497 = vadd.f32 %v1496, 1.0
    %v1498 = vrcp.pop %v1497
    %v1499 = vmul.f32 %v1497, %v1498
    %v1500 = vsub.f32 1.0, %v1499
    %v1501 = vmul.f32 %v1498, %v1500
    %v1502 = vadd.f32 %v1498, %v1501
    %vm1503 = vweird.f32 %v1497
    %vm1504 = vweird.f32 %v1498
    %vm1505 = vmor %vm1503, %vm1504
    %v1506 = vsel %vm1505, %v1498, %v1502
    %v1507 = vand.u32 2147483647, %v1497
    %vm1508 = vcmp.eq.f32.partialorder %v1507, 8.507059e+37
    %v1509 = vand.u32 %v1497, 2147483648
    %v1510 = vor.u32 1.1754944e-38, %v1509
    %v1511 = vsel %vm1508, %v1510, %v1506
    %v1512 = vmul.f32 1.0, %v1511
    %v1513 = vld [vmem:[#allocation3 + $0xb] ss:$0 sm:$0xff]
    %v1514 = vld [vmem:[#allocation12 + $0x4] sm:$0xf]
    %v1515 = vld [vmem:[#allocation12 + $0x14] sm:$0xf]
    %v1516 = vld [vmem:[#allocation12 + $0x24] sm:$0xf]
    %v1517 = vld [vmem:[#allocation12 + $0x34] sm:$0xf]
    %v1518 = vld [vmem:[#allocation12 + $0x44] sm:$0xf]
    %v1519 = vld [vmem:[#allocation12 + $0x54] sm:$0xf]
    %v1520 = vld [vmem:[#allocation12 + $0x64] sm:$0xf]
    %v1521 = vld [vmem:[#allocation12 + $0x74] sm:$0xf]
    %v1522 = vld [vmem:[#allocation12 + $0x84] sm:$0xf]
    %v1523 = vld [vmem:[#allocation12 + $0x94] sm:$0xf]
    %v1524 = vld [vmem:[#allocation12 + $0xa4] sm:$0xf]
    %v1525 = vld [vmem:[#allocation12 + $0xb4] sm:$0xf]
    %v1526 = vld [vmem:[#allocation12 + $0xc4] sm:$0xf]
    %v1527 = vld [vmem:[#allocation12 + $0xd4] sm:$0xf]
    %v1528 = vld [vmem:[#allocation12 + $0xe4] sm:$0xf]
    %v1529 = vld [vmem:[#allocation12 + $0xf4] sm:$0xf]
    %v1546 = vunpack.c.l.b16 %v1514
    %v1547 = vunpack.c.l.b16 %v1515
    %v1548 = vunpack.c.l.b16 %v1516
    %v1549 = vunpack.c.l.b16 %v1517
    %v1550 = vunpack.c.l.b16 %v1518
    %v1551 = vunpack.c.l.b16 %v1519
    %v1552 = vunpack.c.l.b16 %v1520
    %v1553 = vunpack.c.l.b16 %v1521
    %v1554 = vunpack.c.l.b16 %v1522
    %v1555 = vunpack.c.l.b16 %v1523
    %v1556 = vunpack.c.l.b16 %v1524
    %v1557 = vunpack.c.l.b16 %v1525
    %v1558 = vunpack.c.l.b16 %v1526
    %v1559 = vunpack.c.l.b16 %v1527
    %v1560 = vunpack.c.l.b16 %v1528
    %v1561 = vunpack.c.l.b16 %v1529
    %v1562 = vpack.c.b16 %v1547, %v1546
    %v1563 = vpack.c.b16 %v1549, %v1548
    %v1564 = vpack.c.b16 %v1551, %v1550
    %v1565 = vpack.c.b16 %v1553, %v1552
    %v1566 = vpack.c.b16 %v1555, %v1554
    %v1567 = vpack.c.b16 %v1557, %v1556
    %v1568 = vpack.c.b16 %v1559, %v1558
    %v1569 = vpack.c.b16 %v1561, %v1560
    %1578 = vmatpush.bf16.msra.mxu0 %v1569
    %1579 = vmatpush.bf16.msra.mxu0 %v1568
    %1580 = vmatpush.bf16.msra.mxu0 %v1567
    %1581 = vmatpush.bf16.msra.mxu0 %v1566
    %1582 = vmatpush.bf16.msra.mxu0 %v1565
    %1583 = vmatpush.bf16.msra.mxu0 %v1564
    %1584 = vmatpush.bf16.msra.mxu0 %v1563
    %1585 = vmatpush.bf16.msra.mxu0 %v1562
    %1586 = vmatmul.bf16.gmra.mxu0 %v1414
    %v1587 = vpop.f32.mrf.mxu0
    %v1588 = vadd.f32 0.0, %v1587
    %v1589 = vpop.f32.mrf.mxu0
    %1590 = vdwg.mxu0
    %v1591 = vadd.f32 %v1513, %v1588
    %v1592 = vxor.u32 %v1591, 2147483648
    %v1593 = vmul.f32 %v1592, 1.442695
    %v1594 = vpow.pop %v1593
    %v1595 = vadd.f32 %v1594, 1.0
    %v1596 = vrcp.pop %v1595
    %v1597 = vmul.f32 %v1595, %v1596
    %v1598 = vsub.f32 1.0, %v1597
    %v1599 = vmul.f32 %v1596, %v1598
    %v1600 = vadd.f32 %v1596, %v1599
    %vm1601 = vweird.f32 %v1595
    %vm1602 = vweird.f32 %v1596
    %vm1603 = vmor %vm1601, %vm1602
    %v1604 = vsel %vm1603, %v1596, %v1600
    %v1605 = vand.u32 2147483647, %v1595
    %vm1606 = vcmp.eq.f32.partialorder %v1605, 8.507059e+37
    %v1607 = vand.u32 %v1595, 2147483648
    %v1608 = vor.u32 1.1754944e-38, %v1607
    %v1609 = vsel %vm1606, %v1608, %v1604
    %v1610 = vmul.f32 1.0, %v1609
    %v1611 = vld [vmem:[#allocation3 + $0x13] ss:$0 sm:$0xff]
    %v1612 = vld [vmem:[#allocation12 + $0x8] sm:$0xf]
    %v1613 = vld [vmem:[#allocation12 + $0x18] sm:$0xf]
    %v1614 = vld [vmem:[#allocation12 + $0x28] sm:$0xf]
    %v1615 = vld [vmem:[#allocation12 + $0x38] sm:$0xf]
    %v1616 = vld [vmem:[#allocation12 + $0x48] sm:$0xf]
    %v1617 = vld [vmem:[#allocation12 + $0x58] sm:$0xf]
    %v1618 = vld [vmem:[#allocation12 + $0x68] sm:$0xf]
    %v1619 = vld [vmem:[#allocation12 + $0x78] sm:$0xf]
    %v1620 = vld [vmem:[#allocation12 + $0x88] sm:$0xf]
    %v1621 = vld [vmem:[#allocation12 + $0x98] sm:$0xf]
    %v1622 = vld [vmem:[#allocation12 + $0xa8] sm:$0xf]
    %v1623 = vld [vmem:[#allocation12 + $0xb8] sm:$0xf]
    %v1624 = vld [vmem:[#allocation12 + $0xc8] sm:$0xf]
    %v1625 = vld [vmem:[#allocation12 + $0xd8] sm:$0xf]
    %v1626 = vld [vmem:[#allocation12 + $0xe8] sm:$0xf]
    %v1627 = vld [vmem:[#allocation12 + $0xf8] sm:$0xf]
    %v1644 = vunpack.c.l.b16 %v1612
    %v1645 = vunpack.c.l.b16 %v1613
    %v1646 = vunpack.c.l.b16 %v1614
    %v1647 = vunpack.c.l.b16 %v1615
    %v1648 = vunpack.c.l.b16 %v1616
    %v1649 = vunpack.c.l.b16 %v1617
    %v1650 = vunpack.c.l.b16 %v1618
    %v1651 = vunpack.c.l.b16 %v1619
    %v1652 = vunpack.c.l.b16 %v1620
    %v1653 = vunpack.c.l.b16 %v1621
    %v1654 = vunpack.c.l.b16 %v1622
    %v1655 = vunpack.c.l.b16 %v1623
    %v1656 = vunpack.c.l.b16 %v1624
    %v1657 = vunpack.c.l.b16 %v1625
    %v1658 = vunpack.c.l.b16 %v1626
    %v1659 = vunpack.c.l.b16 %v1627
    %v1660 = vpack.c.b16 %v1645, %v1644
    %v1661 = vpack.c.b16 %v1647, %v1646
    %v1662 = vpack.c.b16 %v1649, %v1648
    %v1663 = vpack.c.b16 %v1651, %v1650
    %v1664 = vpack.c.b16 %v1653, %v1652
    %v1665 = vpack.c.b16 %v1655, %v1654
    %v1666 = vpack.c.b16 %v1657, %v1656
    %v1667 = vpack.c.b16 %v1659, %v1658
    %1676 = vmatpush.bf16.msra.mxu0 %v1667
    %1677 = vmatpush.bf16.msra.mxu0 %v1666
    %1678 = vmatpush.bf16.msra.mxu0 %v1665
    %1679 = vmatpush.bf16.msra.mxu0 %v1664
    %1680 = vmatpush.bf16.msra.mxu0 %v1663
    %1681 = vmatpush.bf16.msra.mxu0 %v1662
    %1682 = vmatpush.bf16.msra.mxu0 %v1661
    %1683 = vmatpush.bf16.msra.mxu0 %v1660
    %1684 = vmatmul.bf16.gmra.mxu0 %v1414
    %v1685 = vpop.f32.mrf.mxu0
    %v1686 = vadd.f32 0.0, %v1685
    %v1687 = vpop.f32.mrf.mxu0
    %1688 = vdwg.mxu0
    %v1689 = vadd.f32 %v1611, %v1686
    %v1690 = vtanh.pop %v1689
    %v1691 = vld [vmem:[#allocation3 + $0x1b] ss:$0 sm:$0xff]
    %v1692 = vld [vmem:[#allocation12 + $0xc] sm:$0xf]
    %v1693 = vld [vmem:[#allocation12 + $0x1c] sm:$0xf]
    %v1694 = vld [vmem:[#allocation12 + $0x2c] sm:$0xf]
    %v1695 = vld [vmem:[#allocation12 + $0x3c] sm:$0xf]
    %v1696 = vld [vmem:[#allocation12 + $0x4c] sm:$0xf]
    %v1697 = vld [vmem:[#allocation12 + $0x5c] sm:$0xf]
    %v1698 = vld [vmem:[#allocation12 + $0x6c] sm:$0xf]
    %v1699 = vld [vmem:[#allocation12 + $0x7c] sm:$0xf]
    %v1700 = vld [vmem:[#allocation12 + $0x8c] sm:$0xf]
    %v1701 = vld [vmem:[#allocation12 + $0x9c] sm:$0xf]
    %v1702 = vld [vmem:[#allocation12 + $0xac] sm:$0xf]
    %v1703 = vld [vmem:[#allocation12 + $0xbc] sm:$0xf]
    %v1704 = vld [vmem:[#allocation12 + $0xcc] sm:$0xf]
    %v1705 = vld [vmem:[#allocation12 + $0xdc] sm:$0xf]
    %v1706 = vld [vmem:[#allocation12 + $0xec] sm:$0xf]
    %v1707 = vld [vmem:[#allocation12 + $0xfc] sm:$0xf]
    %v1724 = vunpack.c.l.b16 %v1692
    %v1725 = vunpack.c.l.b16 %v1693
    %v1726 = vunpack.c.l.b16 %v1694
    %v1727 = vunpack.c.l.b16 %v1695
    %v1728 = vunpack.c.l.b16 %v1696
    %v1729 = vunpack.c.l.b16 %v1697
    %v1730 = vunpack.c.l.b16 %v1698
    %v1731 = vunpack.c.l.b16 %v1699
    %v1732 = vunpack.c.l.b16 %v1700
    %v1733 = vunpack.c.l.b16 %v1701
    %v1734 = vunpack.c.l.b16 %v1702
    %v1735 = vunpack.c.l.b16 %v1703
    %v1736 = vunpack.c.l.b16 %v1704
    %v1737 = vunpack.c.l.b16 %v1705
    %v1738 = vunpack.c.l.b16 %v1706
    %v1739 = vunpack.c.l.b16 %v1707
    %v1740 = vpack.c.b16 %v1725, %v1724
    %v1741 = vpack.c.b16 %v1727, %v1726
    %v1742 = vpack.c.b16 %v1729, %v1728
    %v1743 = vpack.c.b16 %v1731, %v1730
    %v1744 = vpack.c.b16 %v1733, %v1732
    %v1745 = vpack.c.b16 %v1735, %v1734
    %v1746 = vpack.c.b16 %v1737, %v1736
    %v1747 = vpack.c.b16 %v1739, %v1738
    %1756 = vmatpush.bf16.msra.mxu0 %v1747
    %1757 = vmatpush.bf16.msra.mxu0 %v1746
    %1758 = vmatpush.bf16.msra.mxu0 %v1745
    %1759 = vmatpush.bf16.msra.mxu0 %v1744
    %1760 = vmatpush.bf16.msra.mxu0 %v1743
    %1761 = vmatpush.bf16.msra.mxu0 %v1742
    %1762 = vmatpush.bf16.msra.mxu0 %v1741
    %1763 = vmatpush.bf16.msra.mxu0 %v1740
    %1764 = vmatmul.bf16.gmra.mxu0 %v1414
    %v1765 = vpop.f32.mrf.mxu0
    %v1766 = vadd.f32 0.0, %v1765
    %v1767 = vpop.f32.mrf.mxu0
    %1768 = vdwg.mxu0
    %v1769 = vadd.f32 %v1691, %v1766
    %v1770 = vxor.u32 %v1769, 2147483648
    %v1771 = vmul.f32 %v1770, 1.442695
    %v1772 = vpow.pop %v1771
    %v1773 = vadd.f32 %v1772, 1.0
    %v1774 = vrcp.pop %v1773
    %v1775 = vmul.f32 %v1773, %v1774
    %v1776 = vsub.f32 1.0, %v1775
    %v1777 = vmul.f32 %v1774, %v1776
    %v1778 = vadd.f32 %v1774, %v1777
    %vm1779 = vweird.f32 %v1773
    %vm1780 = vweird.f32 %v1774
    %vm1781 = vmor %vm1779, %vm1780
    %v1782 = vsel %vm1781, %v1774, %v1778
    %v1783 = vand.u32 2147483647, %v1773
    %vm1784 = vcmp.eq.f32.partialorder %v1783, 8.507059e+37
    %v1785 = vand.u32 %v1773, 2147483648
    %v1786 = vor.u32 1.1754944e-38, %v1785
    %v1787 = vsel %vm1784, %v1786, %v1782
    %v1788 = vmul.f32 1.0, %v1787
    %v1789 = vmul.f32 %v1610, %v1410
    %v1790 = vmul.f32 %v1512, %v1690
    %v1791 = vadd.f32 %v1789, %v1790
    %v1792 = vtanh.pop %v1791
    %v1793 = vmul.f32 %v1788, %v1792
    %1794 = vst [vmem:[#allocation4 + $0x3] sm:$0x1] %v1793
    %v1795 = vpack.c.bf16 %v1793, %v1793
    %v1796 = vld [vmem:[#allocation3 + $0x4] ss:$0 sm:$0xff]
    %v1797 = vld [vmem:[#allocation12] sm:$0xf]
    %v1798 = vld [vmem:[#allocation12 + $0x10] sm:$0xf]
    %v1799 = vld [vmem:[#allocation12 + $0x20] sm:$0xf]
    %v1800 = vld [vmem:[#allocation12 + $0x30] sm:$0xf]
    %v1801 = vld [vmem:[#allocation12 + $0x40] sm:$0xf]
    %v1802 = vld [vmem:[#allocation12 + $0x50] sm:$0xf]
    %v1803 = vld [vmem:[#allocation12 + $0x60] sm:$0xf]
    %v1804 = vld [vmem:[#allocation12 + $0x70] sm:$0xf]
    %v1805 = vld [vmem:[#allocation12 + $0x80] sm:$0xf]
    %v1806 = vld [vmem:[#allocation12 + $0x90] sm:$0xf]
    %v1807 = vld [vmem:[#allocation12 + $0xa0] sm:$0xf]
    %v1808 = vld [vmem:[#allocation12 + $0xb0] sm:$0xf]
    %v1809 = vld [vmem:[#allocation12 + $0xc0] sm:$0xf]
    %v1810 = vld [vmem:[#allocation12 + $0xd0] sm:$0xf]
    %v1811 = vld [vmem:[#allocation12 + $0xe0] sm:$0xf]
    %v1812 = vld [vmem:[#allocation12 + $0xf0] sm:$0xf]
    %v1829 = vunpack.c.l.b16 %v1797
    %v1830 = vunpack.c.l.b16 %v1798
    %v1831 = vunpack.c.l.b16 %v1799
    %v1832 = vunpack.c.l.b16 %v1800
    %v1833 = vunpack.c.l.b16 %v1801
    %v1834 = vunpack.c.l.b16 %v1802
    %v1835 = vunpack.c.l.b16 %v1803
    %v1836 = vunpack.c.l.b16 %v1804
    %v1837 = vunpack.c.l.b16 %v1805
    %v1838 = vunpack.c.l.b16 %v1806
    %v1839 = vunpack.c.l.b16 %v1807
    %v1840 = vunpack.c.l.b16 %v1808
    %v1841 = vunpack.c.l.b16 %v1809
    %v1842 = vunpack.c.l.b16 %v1810
    %v1843 = vunpack.c.l.b16 %v1811
    %v1844 = vunpack.c.l.b16 %v1812
    %v1845 = vpack.c.b16 %v1830, %v1829
    %v1846 = vpack.c.b16 %v1832, %v1831
    %v1847 = vpack.c.b16 %v1834, %v1833
    %v1848 = vpack.c.b16 %v1836, %v1835
    %v1849 = vpack.c.b16 %v1838, %v1837
    %v1850 = vpack.c.b16 %v1840, %v1839
    %v1851 = vpack.c.b16 %v1842, %v1841
    %v1852 = vpack.c.b16 %v1844, %v1843
    %1861 = vmatpush.bf16.msra.mxu0 %v1852
    %1862 = vmatpush.bf16.msra.mxu0 %v1851
    %1863 = vmatpush.bf16.msra.mxu0 %v1850
    %1864 = vmatpush.bf16.msra.mxu0 %v1849
    %1865 = vmatpush.bf16.msra.mxu0 %v1848
    %1866 = vmatpush.bf16.msra.mxu0 %v1847
    %1867 = vmatpush.bf16.msra.mxu0 %v1846
    %1868 = vmatpush.bf16.msra.mxu0 %v1845
    %1869 = vmatmul.bf16.gmra.mxu0 %v1795
    %v1870 = vpop.f32.mrf.mxu0
    %v1871 = vadd.f32 0.0, %v1870
    %v1872 = vpop.f32.mrf.mxu0
    %1873 = vdwg.mxu0
    %v1874 = vadd.f32 %v1796, %v1871
    %v1875 = vxor.u32 %v1874, 2147483648
    %v1876 = vmul.f32 %v1875, 1.442695
    %v1877 = vpow.pop %v1876
    %v1878 = vadd.f32 %v1877, 1.0
    %v1879 = vrcp.pop %v1878
    %v1880 = vmul.f32 %v1878, %v1879
    %v1881 = vsub.f32 1.0, %v1880
    %v1882 = vmul.f32 %v1879, %v1881
    %v1883 = vadd.f32 %v1879, %v1882
    %vm1884 = vweird.f32 %v1878
    %vm1885 = vweird.f32 %v1879
    %vm1886 = vmor %vm1884, %vm1885
    %v1887 = vsel %vm1886, %v1879, %v1883
    %v1888 = vand.u32 2147483647, %v1878
    %vm1889 = vcmp.eq.f32.partialorder %v1888, 8.507059e+37
    %v1890 = vand.u32 %v1878, 2147483648
    %v1891 = vor.u32 1.1754944e-38, %v1890
    %v1892 = vsel %vm1889, %v1891, %v1887
    %v1893 = vmul.f32 1.0, %v1892
    %v1894 = vld [vmem:[#allocation3 + $0xc] ss:$0 sm:$0xff]
    %v1895 = vld [vmem:[#allocation12 + $0x4] sm:$0xf]
    %v1896 = vld [vmem:[#allocation12 + $0x14] sm:$0xf]
    %v1897 = vld [vmem:[#allocation12 + $0x24] sm:$0xf]
    %v1898 = vld [vmem:[#allocation12 + $0x34] sm:$0xf]
    %v1899 = vld [vmem:[#allocation12 + $0x44] sm:$0xf]
    %v1900 = vld [vmem:[#allocation12 + $0x54] sm:$0xf]
    %v1901 = vld [vmem:[#allocation12 + $0x64] sm:$0xf]
    %v1902 = vld [vmem:[#allocation12 + $0x74] sm:$0xf]
    %v1903 = vld [vmem:[#allocation12 + $0x84] sm:$0xf]
    %v1904 = vld [vmem:[#allocation12 + $0x94] sm:$0xf]
    %v1905 = vld [vmem:[#allocation12 + $0xa4] sm:$0xf]
    %v1906 = vld [vmem:[#allocation12 + $0xb4] sm:$0xf]
    %v1907 = vld [vmem:[#allocation12 + $0xc4] sm:$0xf]
    %v1908 = vld [vmem:[#allocation12 + $0xd4] sm:$0xf]
    %v1909 = vld [vmem:[#allocation12 + $0xe4] sm:$0xf]
    %v1910 = vld [vmem:[#allocation12 + $0xf4] sm:$0xf]
    %v1927 = vunpack.c.l.b16 %v1895
    %v1928 = vunpack.c.l.b16 %v1896
    %v1929 = vunpack.c.l.b16 %v1897
    %v1930 = vunpack.c.l.b16 %v1898
    %v1931 = vunpack.c.l.b16 %v1899
    %v1932 = vunpack.c.l.b16 %v1900
    %v1933 = vunpack.c.l.b16 %v1901
    %v1934 = vunpack.c.l.b16 %v1902
    %v1935 = vunpack.c.l.b16 %v1903
    %v1936 = vunpack.c.l.b16 %v1904
    %v1937 = vunpack.c.l.b16 %v1905
    %v1938 = vunpack.c.l.b16 %v1906
    %v1939 = vunpack.c.l.b16 %v1907
    %v1940 = vunpack.c.l.b16 %v1908
    %v1941 = vunpack.c.l.b16 %v1909
    %v1942 = vunpack.c.l.b16 %v1910
    %v1943 = vpack.c.b16 %v1928, %v1927
    %v1944 = vpack.c.b16 %v1930, %v1929
    %v1945 = vpack.c.b16 %v1932, %v1931
    %v1946 = vpack.c.b16 %v1934, %v1933
    %v1947 = vpack.c.b16 %v1936, %v1935
    %v1948 = vpack.c.b16 %v1938, %v1937
    %v1949 = vpack.c.b16 %v1940, %v1939
    %v1950 = vpack.c.b16 %v1942, %v1941
    %1959 = vmatpush.bf16.msra.mxu0 %v1950
    %1960 = vmatpush.bf16.msra.mxu0 %v1949
    %1961 = vmatpush.bf16.msra.mxu0 %v1948
    %1962 = vmatpush.bf16.msra.mxu0 %v1947
    %1963 = vmatpush.bf16.msra.mxu0 %v1946
    %1964 = vmatpush.bf16.msra.mxu0 %v1945
    %1965 = vmatpush.bf16.msra.mxu0 %v1944
    %1966 = vmatpush.bf16.msra.mxu0 %v1943
    %1967 = vmatmul.bf16.gmra.mxu0 %v1795
    %v1968 = vpop.f32.mrf.mxu0
    %v1969 = vadd.f32 0.0, %v1968
    %v1970 = vpop.f32.mrf.mxu0
    %1971 = vdwg.mxu0
    %v1972 = vadd.f32 %v1894, %v1969
    %v1973 = vxor.u32 %v1972, 2147483648
    %v1974 = vmul.f32 %v1973, 1.442695
    %v1975 = vpow.pop %v1974
    %v1976 = vadd.f32 %v1975, 1.0
    %v1977 = vrcp.pop %v1976
    %v1978 = vmul.f32 %v1976, %v1977
    %v1979 = vsub.f32 1.0, %v1978
    %v1980 = vmul.f32 %v1977, %v1979
    %v1981 = vadd.f32 %v1977, %v1980
    %vm1982 = vweird.f32 %v1976
    %vm1983 = vweird.f32 %v1977
    %vm1984 = vmor %vm1982, %vm1983
    %v1985 = vsel %vm1984, %v1977, %v1981
    %v1986 = vand.u32 2147483647, %v1976
    %vm1987 = vcmp.eq.f32.partialorder %v1986, 8.507059e+37
    %v1988 = vand.u32 %v1976, 2147483648
    %v1989 = vor.u32 1.1754944e-38, %v1988
    %v1990 = vsel %vm1987, %v1989, %v1985
    %v1991 = vmul.f32 1.0, %v1990
    %v1992 = vld [vmem:[#allocation3 + $0x14] ss:$0 sm:$0xff]
    %v1993 = vld [vmem:[#allocation12 + $0x8] sm:$0xf]
    %v1994 = vld [vmem:[#allocation12 + $0x18] sm:$0xf]
    %v1995 = vld [vmem:[#allocation12 + $0x28] sm:$0xf]
    %v1996 = vld [vmem:[#allocation12 + $0x38] sm:$0xf]
    %v1997 = vld [vmem:[#allocation12 + $0x48] sm:$0xf]
    %v1998 = vld [vmem:[#allocation12 + $0x58] sm:$0xf]
    %v1999 = vld [vmem:[#allocation12 + $0x68] sm:$0xf]
    %v2000 = vld [vmem:[#allocation12 + $0x78] sm:$0xf]
    %v2001 = vld [vmem:[#allocation12 + $0x88] sm:$0xf]
    %v2002 = vld [vmem:[#allocation12 + $0x98] sm:$0xf]
    %v2003 = vld [vmem:[#allocation12 + $0xa8] sm:$0xf]
    %v2004 = vld [vmem:[#allocation12 + $0xb8] sm:$0xf]
    %v2005 = vld [vmem:[#allocation12 + $0xc8] sm:$0xf]
    %v2006 = vld [vmem:[#allocation12 + $0xd8] sm:$0xf]
    %v2007 = vld [vmem:[#allocation12 + $0xe8] sm:$0xf]
    %v2008 = vld [vmem:[#allocation12 + $0xf8] sm:$0xf]
    %v2025 = vunpack.c.l.b16 %v1993
    %v2026 = vunpack.c.l.b16 %v1994
    %v2027 = vunpack.c.l.b16 %v1995
    %v2028 = vunpack.c.l.b16 %v1996
    %v2029 = vunpack.c.l.b16 %v1997
    %v2030 = vunpack.c.l.b16 %v1998
    %v2031 = vunpack.c.l.b16 %v1999
    %v2032 = vunpack.c.l.b16 %v2000
    %v2033 = vunpack.c.l.b16 %v2001
    %v2034 = vunpack.c.l.b16 %v2002
    %v2035 = vunpack.c.l.b16 %v2003
    %v2036 = vunpack.c.l.b16 %v2004
    %v2037 = vunpack.c.l.b16 %v2005
    %v2038 = vunpack.c.l.b16 %v2006
    %v2039 = vunpack.c.l.b16 %v2007
    %v2040 = vunpack.c.l.b16 %v2008
    %v2041 = vpack.c.b16 %v2026, %v2025
    %v2042 = vpack.c.b16 %v2028, %v2027
    %v2043 = vpack.c.b16 %v2030, %v2029
    %v2044 = vpack.c.b16 %v2032, %v2031
    %v2045 = vpack.c.b16 %v2034, %v2033
    %v2046 = vpack.c.b16 %v2036, %v2035
    %v2047 = vpack.c.b16 %v2038, %v2037
    %v2048 = vpack.c.b16 %v2040, %v2039
    %2057 = vmatpush.bf16.msra.mxu0 %v2048
    %2058 = vmatpush.bf16.msra.mxu0 %v2047
    %2059 = vmatpush.bf16.msra.mxu0 %v2046
    %2060 = vmatpush.bf16.msra.mxu0 %v2045
    %2061 = vmatpush.bf16.msra.mxu0 %v2044
    %2062 = vmatpush.bf16.msra.mxu0 %v2043
    %2063 = vmatpush.bf16.msra.mxu0 %v2042
    %2064 = vmatpush.bf16.msra.mxu0 %v2041
    %2065 = vmatmul.bf16.gmra.mxu0 %v1795
    %v2066 = vpop.f32.mrf.mxu0
    %v2067 = vadd.f32 0.0, %v2066
    %v2068 = vpop.f32.mrf.mxu0
    %2069 = vdwg.mxu0
    %v2070 = vadd.f32 %v1992, %v2067
    %v2071 = vtanh.pop %v2070
    %v2072 = vld [vmem:[#allocation3 + $0x1c] ss:$0 sm:$0xff]
    %v2073 = vld [vmem:[#allocation12 + $0xc] sm:$0xf]
    %v2074 = vld [vmem:[#allocation12 + $0x1c] sm:$0xf]
    %v2075 = vld [vmem:[#allocation12 + $0x2c] sm:$0xf]
    %v2076 = vld [vmem:[#allocation12 + $0x3c] sm:$0xf]
    %v2077 = vld [vmem:[#allocation12 + $0x4c] sm:$0xf]
    %v2078 = vld [vmem:[#allocation12 + $0x5c] sm:$0xf]
    %v2079 = vld [vmem:[#allocation12 + $0x6c] sm:$0xf]
    %v2080 = vld [vmem:[#allocation12 + $0x7c] sm:$0xf]
    %v2081 = vld [vmem:[#allocation12 + $0x8c] sm:$0xf]
    %v2082 = vld [vmem:[#allocation12 + $0x9c] sm:$0xf]
    %v2083 = vld [vmem:[#allocation12 + $0xac] sm:$0xf]
    %v2084 = vld [vmem:[#allocation12 + $0xbc] sm:$0xf]
    %v2085 = vld [vmem:[#allocation12 + $0xcc] sm:$0xf]
    %v2086 = vld [vmem:[#allocation12 + $0xdc] sm:$0xf]
    %v2087 = vld [vmem:[#allocation12 + $0xec] sm:$0xf]
    %v2088 = vld [vmem:[#allocation12 + $0xfc] sm:$0xf]
    %v2105 = vunpack.c.l.b16 %v2073
    %v2106 = vunpack.c.l.b16 %v2074
    %v2107 = vunpack.c.l.b16 %v2075
    %v2108 = vunpack.c.l.b16 %v2076
    %v2109 = vunpack.c.l.b16 %v2077
    %v2110 = vunpack.c.l.b16 %v2078
    %v2111 = vunpack.c.l.b16 %v2079
    %v2112 = vunpack.c.l.b16 %v2080
    %v2113 = vunpack.c.l.b16 %v2081
    %v2114 = vunpack.c.l.b16 %v2082
    %v2115 = vunpack.c.l.b16 %v2083
    %v2116 = vunpack.c.l.b16 %v2084
    %v2117 = vunpack.c.l.b16 %v2085
    %v2118 = vunpack.c.l.b16 %v2086
    %v2119 = vunpack.c.l.b16 %v2087
    %v2120 = vunpack.c.l.b16 %v2088
    %v2121 = vpack.c.b16 %v2106, %v2105
    %v2122 = vpack.c.b16 %v2108, %v2107
    %v2123 = vpack.c.b16 %v2110, %v2109
    %v2124 = vpack.c.b16 %v2112, %v2111
    %v2125 = vpack.c.b16 %v2114, %v2113
    %v2126 = vpack.c.b16 %v2116, %v2115
    %v2127 = vpack.c.b16 %v2118, %v2117
    %v2128 = vpack.c.b16 %v2120, %v2119
    %2137 = vmatpush.bf16.msra.mxu0 %v2128
    %2138 = vmatpush.bf16.msra.mxu0 %v2127
    %2139 = vmatpush.bf16.msra.mxu0 %v2126
    %2140 = vmatpush.bf16.msra.mxu0 %v2125
    %2141 = vmatpush.bf16.msra.mxu0 %v2124
    %2142 = vmatpush.bf16.msra.mxu0 %v2123
    %2143 = vmatpush.bf16.msra.mxu0 %v2122
    %2144 = vmatpush.bf16.msra.mxu0 %v2121
    %2145 = vmatmul.bf16.gmra.mxu0 %v1795
    %v2146 = vpop.f32.mrf.mxu0
    %v2147 = vadd.f32 0.0, %v2146
    %v2148 = vpop.f32.mrf.mxu0
    %2149 = vdwg.mxu0
    %v2150 = vadd.f32 %v2072, %v2147
    %v2151 = vxor.u32 %v2150, 2147483648
    %v2152 = vmul.f32 %v2151, 1.442695
    %v2153 = vpow.pop %v2152
    %v2154 = vadd.f32 %v2153, 1.0
    %v2155 = vrcp.pop %v2154
    %v2156 = vmul.f32 %v2154, %v2155
    %v2157 = vsub.f32 1.0, %v2156
    %v2158 = vmul.f32 %v2155, %v2157
    %v2159 = vadd.f32 %v2155, %v2158
    %vm2160 = vweird.f32 %v2154
    %vm2161 = vweird.f32 %v2155
    %vm2162 = vmor %vm2160, %vm2161
    %v2163 = vsel %vm2162, %v2155, %v2159
    %v2164 = vand.u32 2147483647, %v2154
    %vm2165 = vcmp.eq.f32.partialorder %v2164, 8.507059e+37
    %v2166 = vand.u32 %v2154, 2147483648
    %v2167 = vor.u32 1.1754944e-38, %v2166
    %v2168 = vsel %vm2165, %v2167, %v2163
    %v2169 = vmul.f32 1.0, %v2168
    %v2170 = vmul.f32 %v1991, %v1791
    %v2171 = vmul.f32 %v1893, %v2071
    %v2172 = vadd.f32 %v2170, %v2171
    %v2173 = vtanh.pop %v2172
    %v2174 = vmul.f32 %v2169, %v2173
    %2175 = vst [vmem:[#allocation4 + $0x4] sm:$0x1] %v2174
    %v2176 = vpack.c.bf16 %v2174, %v2174
    %v2177 = vld [vmem:[#allocation3 + $0x5] ss:$0 sm:$0xff]
    %v2178 = vld [vmem:[#allocation12] sm:$0xf]
    %v2179 = vld [vmem:[#allocation12 + $0x10] sm:$0xf]
    %v2180 = vld [vmem:[#allocation12 + $0x20] sm:$0xf]
    %v2181 = vld [vmem:[#allocation12 + $0x30] sm:$0xf]
    %v2182 = vld [vmem:[#allocation12 + $0x40] sm:$0xf]
    %v2183 = vld [vmem:[#allocation12 + $0x50] sm:$0xf]
    %v2184 = vld [vmem:[#allocation12 + $0x60] sm:$0xf]
    %v2185 = vld [vmem:[#allocation12 + $0x70] sm:$0xf]
    %v2186 = vld [vmem:[#allocation12 + $0x80] sm:$0xf]
    %v2187 = vld [vmem:[#allocation12 + $0x90] sm:$0xf]
    %v2188 = vld [vmem:[#allocation12 + $0xa0] sm:$0xf]
    %v2189 = vld [vmem:[#allocation12 + $0xb0] sm:$0xf]
    %v2190 = vld [vmem:[#allocation12 + $0xc0] sm:$0xf]
    %v2191 = vld [vmem:[#allocation12 + $0xd0] sm:$0xf]
    %v2192 = vld [vmem:[#allocation12 + $0xe0] sm:$0xf]
    %v2193 = vld [vmem:[#allocation12 + $0xf0] sm:$0xf]
    %v2210 = vunpack.c.l.b16 %v2178
    %v2211 = vunpack.c.l.b16 %v2179
    %v2212 = vunpack.c.l.b16 %v2180
    %v2213 = vunpack.c.l.b16 %v2181
    %v2214 = vunpack.c.l.b16 %v2182
    %v2215 = vunpack.c.l.b16 %v2183
    %v2216 = vunpack.c.l.b16 %v2184
    %v2217 = vunpack.c.l.b16 %v2185
    %v2218 = vunpack.c.l.b16 %v2186
    %v2219 = vunpack.c.l.b16 %v2187
    %v2220 = vunpack.c.l.b16 %v2188
    %v2221 = vunpack.c.l.b16 %v2189
    %v2222 = vunpack.c.l.b16 %v2190
    %v2223 = vunpack.c.l.b16 %v2191
    %v2224 = vunpack.c.l.b16 %v2192
    %v2225 = vunpack.c.l.b16 %v2193
    %v2226 = vpack.c.b16 %v2211, %v2210
    %v2227 = vpack.c.b16 %v2213, %v2212
    %v2228 = vpack.c.b16 %v2215, %v2214
    %v2229 = vpack.c.b16 %v2217, %v2216
    %v2230 = vpack.c.b16 %v2219, %v2218
    %v2231 = vpack.c.b16 %v2221, %v2220
    %v2232 = vpack.c.b16 %v2223, %v2222
    %v2233 = vpack.c.b16 %v2225, %v2224
    %2242 = vmatpush.bf16.msra.mxu0 %v2233
    %2243 = vmatpush.bf16.msra.mxu0 %v2232
    %2244 = vmatpush.bf16.msra.mxu0 %v2231
    %2245 = vmatpush.bf16.msra.mxu0 %v2230
    %2246 = vmatpush.bf16.msra.mxu0 %v2229
    %2247 = vmatpush.bf16.msra.mxu0 %v2228
    %2248 = vmatpush.bf16.msra.mxu0 %v2227
    %2249 = vmatpush.bf16.msra.mxu0 %v2226
    %2250 = vmatmul.bf16.gmra.mxu0 %v2176
    %v2251 = vpop.f32.mrf.mxu0
    %v2252 = vadd.f32 0.0, %v2251
    %v2253 = vpop.f32.mrf.mxu0
    %2254 = vdwg.mxu0
    %v2255 = vadd.f32 %v2177, %v2252
    %v2256 = vxor.u32 %v2255, 2147483648
    %v2257 = vmul.f32 %v2256, 1.442695
    %v2258 = vpow.pop %v2257
    %v2259 = vadd.f32 %v2258, 1.0
    %v2260 = vrcp.pop %v2259
    %v2261 = vmul.f32 %v2259, %v2260
    %v2262 = vsub.f32 1.0, %v2261
    %v2263 = vmul.f32 %v2260, %v2262
    %v2264 = vadd.f32 %v2260, %v2263
    %vm2265 = vweird.f32 %v2259
    %vm2266 = vweird.f32 %v2260
    %vm2267 = vmor %vm2265, %vm2266
    %v2268 = vsel %vm2267, %v2260, %v2264
    %v2269 = vand.u32 2147483647, %v2259
    %vm2270 = vcmp.eq.f32.partialorder %v2269, 8.507059e+37
    %v2271 = vand.u32 %v2259, 2147483648
    %v2272 = vor.u32 1.1754944e-38, %v2271
    %v2273 = vsel %vm2270, %v2272, %v2268
    %v2274 = vmul.f32 1.0, %v2273
    %v2275 = vld [vmem:[#allocation3 + $0xd] ss:$0 sm:$0xff]
    %v2276 = vld [vmem:[#allocation12 + $0x4] sm:$0xf]
    %v2277 = vld [vmem:[#allocation12 + $0x14] sm:$0xf]
    %v2278 = vld [vmem:[#allocation12 + $0x24] sm:$0xf]
    %v2279 = vld [vmem:[#allocation12 + $0x34] sm:$0xf]
    %v2280 = vld [vmem:[#allocation12 + $0x44] sm:$0xf]
    %v2281 = vld [vmem:[#allocation12 + $0x54] sm:$0xf]
    %v2282 = vld [vmem:[#allocation12 + $0x64] sm:$0xf]
    %v2283 = vld [vmem:[#allocation12 + $0x74] sm:$0xf]
    %v2284 = vld [vmem:[#allocation12 + $0x84] sm:$0xf]
    %v2285 = vld [vmem:[#allocation12 + $0x94] sm:$0xf]
    %v2286 = vld [vmem:[#allocation12 + $0xa4] sm:$0xf]
    %v2287 = vld [vmem:[#allocation12 + $0xb4] sm:$0xf]
    %v2288 = vld [vmem:[#allocation12 + $0xc4] sm:$0xf]
    %v2289 = vld [vmem:[#allocation12 + $0xd4] sm:$0xf]
    %v2290 = vld [vmem:[#allocation12 + $0xe4] sm:$0xf]
    %v2291 = vld [vmem:[#allocation12 + $0xf4] sm:$0xf]
    %v2308 = vunpack.c.l.b16 %v2276
    %v2309 = vunpack.c.l.b16 %v2277
    %v2310 = vunpack.c.l.b16 %v2278
    %v2311 = vunpack.c.l.b16 %v2279
    %v2312 = vunpack.c.l.b16 %v2280
    %v2313 = vunpack.c.l.b16 %v2281
    %v2314 = vunpack.c.l.b16 %v2282
    %v2315 = vunpack.c.l.b16 %v2283
    %v2316 = vunpack.c.l.b16 %v2284
    %v2317 = vunpack.c.l.b16 %v2285
    %v2318 = vunpack.c.l.b16 %v2286
    %v2319 = vunpack.c.l.b16 %v2287
    %v2320 = vunpack.c.l.b16 %v2288
    %v2321 = vunpack.c.l.b16 %v2289
    %v2322 = vunpack.c.l.b16 %v2290
    %v2323 = vunpack.c.l.b16 %v2291
    %v2324 = vpack.c.b16 %v2309, %v2308
    %v2325 = vpack.c.b16 %v2311, %v2310
    %v2326 = vpack.c.b16 %v2313, %v2312
    %v2327 = vpack.c.b16 %v2315, %v2314
    %v2328 = vpack.c.b16 %v2317, %v2316
    %v2329 = vpack.c.b16 %v2319, %v2318
    %v2330 = vpack.c.b16 %v2321, %v2320
    %v2331 = vpack.c.b16 %v2323, %v2322
    %2340 = vmatpush.bf16.msra.mxu0 %v2331
    %2341 = vmatpush.bf16.msra.mxu0 %v2330
    %2342 = vmatpush.bf16.msra.mxu0 %v2329
    %2343 = vmatpush.bf16.msra.mxu0 %v2328
    %2344 = vmatpush.bf16.msra.mxu0 %v2327
    %2345 = vmatpush.bf16.msra.mxu0 %v2326
    %2346 = vmatpush.bf16.msra.mxu0 %v2325
    %2347 = vmatpush.bf16.msra.mxu0 %v2324
    %2348 = vmatmul.bf16.gmra.mxu0 %v2176
    %v2349 = vpop.f32.mrf.mxu0
    %v2350 = vadd.f32 0.0, %v2349
    %v2351 = vpop.f32.mrf.mxu0
    %2352 = vdwg.mxu0
    %v2353 = vadd.f32 %v2275, %v2350
    %v2354 = vxor.u32 %v2353, 2147483648
    %v2355 = vmul.f32 %v2354, 1.442695
    %v2356 = vpow.pop %v2355
    %v2357 = vadd.f32 %v2356, 1.0
    %v2358 = vrcp.pop %v2357
    %v2359 = vmul.f32 %v2357, %v2358
    %v2360 = vsub.f32 1.0, %v2359
    %v2361 = vmul.f32 %v2358, %v2360
    %v2362 = vadd.f32 %v2358, %v2361
    %vm2363 = vweird.f32 %v2357
    %vm2364 = vweird.f32 %v2358
    %vm2365 = vmor %vm2363, %vm2364
    %v2366 = vsel %vm2365, %v2358, %v2362
    %v2367 = vand.u32 2147483647, %v2357
    %vm2368 = vcmp.eq.f32.partialorder %v2367, 8.507059e+37
    %v2369 = vand.u32 %v2357, 2147483648
    %v2370 = vor.u32 1.1754944e-38, %v2369
    %v2371 = vsel %vm2368, %v2370, %v2366
    %v2372 = vmul.f32 1.0, %v2371
    %v2373 = vld [vmem:[#allocation3 + $0x15] ss:$0 sm:$0xff]
    %v2374 = vld [vmem:[#allocation12 + $0x8] sm:$0xf]
    %v2375 = vld [vmem:[#allocation12 + $0x18] sm:$0xf]
    %v2376 = vld [vmem:[#allocation12 + $0x28] sm:$0xf]
    %v2377 = vld [vmem:[#allocation12 + $0x38] sm:$0xf]
    %v2378 = vld [vmem:[#allocation12 + $0x48] sm:$0xf]
    %v2379 = vld [vmem:[#allocation12 + $0x58] sm:$0xf]
    %v2380 = vld [vmem:[#allocation12 + $0x68] sm:$0xf]
    %v2381 = vld [vmem:[#allocation12 + $0x78] sm:$0xf]
    %v2382 = vld [vmem:[#allocation12 + $0x88] sm:$0xf]
    %v2383 = vld [vmem:[#allocation12 + $0x98] sm:$0xf]
    %v2384 = vld [vmem:[#allocation12 + $0xa8] sm:$0xf]
    %v2385 = vld [vmem:[#allocation12 + $0xb8] sm:$0xf]
    %v2386 = vld [vmem:[#allocation12 + $0xc8] sm:$0xf]
    %v2387 = vld [vmem:[#allocation12 + $0xd8] sm:$0xf]
    %v2388 = vld [vmem:[#allocation12 + $0xe8] sm:$0xf]
    %v2389 = vld [vmem:[#allocation12 + $0xf8] sm:$0xf]
    %v2406 = vunpack.c.l.b16 %v2374
    %v2407 = vunpack.c.l.b16 %v2375
    %v2408 = vunpack.c.l.b16 %v2376
    %v2409 = vunpack.c.l.b16 %v2377
    %v2410 = vunpack.c.l.b16 %v2378
    %v2411 = vunpack.c.l.b16 %v2379
    %v2412 = vunpack.c.l.b16 %v2380
    %v2413 = vunpack.c.l.b16 %v2381
    %v2414 = vunpack.c.l.b16 %v2382
    %v2415 = vunpack.c.l.b16 %v2383
    %v2416 = vunpack.c.l.b16 %v2384
    %v2417 = vunpack.c.l.b16 %v2385
    %v2418 = vunpack.c.l.b16 %v2386
    %v2419 = vunpack.c.l.b16 %v2387
    %v2420 = vunpack.c.l.b16 %v2388
    %v2421 = vunpack.c.l.b16 %v2389
    %v2422 = vpack.c.b16 %v2407, %v2406
    %v2423 = vpack.c.b16 %v2409, %v2408
    %v2424 = vpack.c.b16 %v2411, %v2410
    %v2425 = vpack.c.b16 %v2413, %v2412
    %v2426 = vpack.c.b16 %v2415, %v2414
    %v2427 = vpack.c.b16 %v2417, %v2416
    %v2428 = vpack.c.b16 %v2419, %v2418
    %v2429 = vpack.c.b16 %v2421, %v2420
    %2438 = vmatpush.bf16.msra.mxu0 %v2429
    %2439 = vmatpush.bf16.msra.mxu0 %v2428
    %2440 = vmatpush.bf16.msra.mxu0 %v2427
    %2441 = vmatpush.bf16.msra.mxu0 %v2426
    %2442 = vmatpush.bf16.msra.mxu0 %v2425
    %2443 = vmatpush.bf16.msra.mxu0 %v2424
    %2444 = vmatpush.bf16.msra.mxu0 %v2423
    %2445 = vmatpush.bf16.msra.mxu0 %v2422
    %2446 = vmatmul.bf16.gmra.mxu0 %v2176
    %v2447 = vpop.f32.mrf.mxu0
    %v2448 = vadd.f32 0.0, %v2447
    %v2449 = vpop.f32.mrf.mxu0
    %2450 = vdwg.mxu0
    %v2451 = vadd.f32 %v2373, %v2448
    %v2452 = vtanh.pop %v2451
    %v2453 = vld [vmem:[#allocation3 + $0x1d] ss:$0 sm:$0xff]
    %v2454 = vld [vmem:[#allocation12 + $0xc] sm:$0xf]
    %v2455 = vld [vmem:[#allocation12 + $0x1c] sm:$0xf]
    %v2456 = vld [vmem:[#allocation12 + $0x2c] sm:$0xf]
    %v2457 = vld [vmem:[#allocation12 + $0x3c] sm:$0xf]
    %v2458 = vld [vmem:[#allocation12 + $0x4c] sm:$0xf]
    %v2459 = vld [vmem:[#allocation12 + $0x5c] sm:$0xf]
    %v2460 = vld [vmem:[#allocation12 + $0x6c] sm:$0xf]
    %v2461 = vld [vmem:[#allocation12 + $0x7c] sm:$0xf]
    %v2462 = vld [vmem:[#allocation12 + $0x8c] sm:$0xf]
    %v2463 = vld [vmem:[#allocation12 + $0x9c] sm:$0xf]
    %v2464 = vld [vmem:[#allocation12 + $0xac] sm:$0xf]
    %v2465 = vld [vmem:[#allocation12 + $0xbc] sm:$0xf]
    %v2466 = vld [vmem:[#allocation12 + $0xcc] sm:$0xf]
    %v2467 = vld [vmem:[#allocation12 + $0xdc] sm:$0xf]
    %v2468 = vld [vmem:[#allocation12 + $0xec] sm:$0xf]
    %v2469 = vld [vmem:[#allocation12 + $0xfc] sm:$0xf]
    %v2486 = vunpack.c.l.b16 %v2454
    %v2487 = vunpack.c.l.b16 %v2455
    %v2488 = vunpack.c.l.b16 %v2456
    %v2489 = vunpack.c.l.b16 %v2457
    %v2490 = vunpack.c.l.b16 %v2458
    %v2491 = vunpack.c.l.b16 %v2459
    %v2492 = vunpack.c.l.b16 %v2460
    %v2493 = vunpack.c.l.b16 %v2461
    %v2494 = vunpack.c.l.b16 %v2462
    %v2495 = vunpack.c.l.b16 %v2463
    %v2496 = vunpack.c.l.b16 %v2464
    %v2497 = vunpack.c.l.b16 %v2465
    %v2498 = vunpack.c.l.b16 %v2466
    %v2499 = vunpack.c.l.b16 %v2467
    %v2500 = vunpack.c.l.b16 %v2468
    %v2501 = vunpack.c.l.b16 %v2469
    %v2502 = vpack.c.b16 %v2487, %v2486
    %v2503 = vpack.c.b16 %v2489, %v2488
    %v2504 = vpack.c.b16 %v2491, %v2490
    %v2505 = vpack.c.b16 %v2493, %v2492
    %v2506 = vpack.c.b16 %v2495, %v2494
    %v2507 = vpack.c.b16 %v2497, %v2496
    %v2508 = vpack.c.b16 %v2499, %v2498
    %v2509 = vpack.c.b16 %v2501, %v2500
    %2518 = vmatpush.bf16.msra.mxu0 %v2509
    %2519 = vmatpush.bf16.msra.mxu0 %v2508
    %2520 = vmatpush.bf16.msra.mxu0 %v2507
    %2521 = vmatpush.bf16.msra.mxu0 %v2506
    %2522 = vmatpush.bf16.msra.mxu0 %v2505
    %2523 = vmatpush.bf16.msra.mxu0 %v2504
    %2524 = vmatpush.bf16.msra.mxu0 %v2503
    %2525 = vmatpush.bf16.msra.mxu0 %v2502
    %2526 = vmatmul.bf16.gmra.mxu0 %v2176
    %v2527 = vpop.f32.mrf.mxu0
    %v2528 = vadd.f32 0.0, %v2527
    %v2529 = vpop.f32.mrf.mxu0
    %2530 = vdwg.mxu0
    %v2531 = vadd.f32 %v2453, %v2528
    %v2532 = vxor.u32 %v2531, 2147483648
    %v2533 = vmul.f32 %v2532, 1.442695
    %v2534 = vpow.pop %v2533
    %v2535 = vadd.f32 %v2534, 1.0
    %v2536 = vrcp.pop %v2535
    %v2537 = vmul.f32 %v2535, %v2536
    %v2538 = vsub.f32 1.0, %v2537
    %v2539 = vmul.f32 %v2536, %v2538
    %v2540 = vadd.f32 %v2536, %v2539
    %vm2541 = vweird.f32 %v2535
    %vm2542 = vweird.f32 %v2536
    %vm2543 = vmor %vm2541, %vm2542
    %v2544 = vsel %vm2543, %v2536, %v2540
    %v2545 = vand.u32 2147483647, %v2535
    %vm2546 = vcmp.eq.f32.partialorder %v2545, 8.507059e+37
    %v2547 = vand.u32 %v2535, 2147483648
    %v2548 = vor.u32 1.1754944e-38, %v2547
    %v2549 = vsel %vm2546, %v2548, %v2544
    %v2550 = vmul.f32 1.0, %v2549
    %v2551 = vmul.f32 %v2372, %v2172
    %v2552 = vmul.f32 %v2274, %v2452
    %v2553 = vadd.f32 %v2551, %v2552
    %v2554 = vtanh.pop %v2553
    %v2555 = vmul.f32 %v2550, %v2554
    %2556 = vst [vmem:[#allocation4 + $0x5] sm:$0x1] %v2555
    %v2557 = vpack.c.bf16 %v2555, %v2555
    %v2558 = vld [vmem:[#allocation3 + $0x6] ss:$0 sm:$0xff]
    %v2559 = vld [vmem:[#allocation12] sm:$0xf]
    %v2560 = vld [vmem:[#allocation12 + $0x10] sm:$0xf]
    %v2561 = vld [vmem:[#allocation12 + $0x20] sm:$0xf]
    %v2562 = vld [vmem:[#allocation12 + $0x30] sm:$0xf]
    %v2563 = vld [vmem:[#allocation12 + $0x40] sm:$0xf]
    %v2564 = vld [vmem:[#allocation12 + $0x50] sm:$0xf]
    %v2565 = vld [vmem:[#allocation12 + $0x60] sm:$0xf]
    %v2566 = vld [vmem:[#allocation12 + $0x70] sm:$0xf]
    %v2567 = vld [vmem:[#allocation12 + $0x80] sm:$0xf]
    %v2568 = vld [vmem:[#allocation12 + $0x90] sm:$0xf]
    %v2569 = vld [vmem:[#allocation12 + $0xa0] sm:$0xf]
    %v2570 = vld [vmem:[#allocation12 + $0xb0] sm:$0xf]
    %v2571 = vld [vmem:[#allocation12 + $0xc0] sm:$0xf]
    %v2572 = vld [vmem:[#allocation12 + $0xd0] sm:$0xf]
    %v2573 = vld [vmem:[#allocation12 + $0xe0] sm:$0xf]
    %v2574 = vld [vmem:[#allocation12 + $0xf0] sm:$0xf]
    %v2591 = vunpack.c.l.b16 %v2559
    %v2592 = vunpack.c.l.b16 %v2560
    %v2593 = vunpack.c.l.b16 %v2561
    %v2594 = vunpack.c.l.b16 %v2562
    %v2595 = vunpack.c.l.b16 %v2563
    %v2596 = vunpack.c.l.b16 %v2564
    %v2597 = vunpack.c.l.b16 %v2565
    %v2598 = vunpack.c.l.b16 %v2566
    %v2599 = vunpack.c.l.b16 %v2567
    %v2600 = vunpack.c.l.b16 %v2568
    %v2601 = vunpack.c.l.b16 %v2569
    %v2602 = vunpack.c.l.b16 %v2570
    %v2603 = vunpack.c.l.b16 %v2571
    %v2604 = vunpack.c.l.b16 %v2572
    %v2605 = vunpack.c.l.b16 %v2573
    %v2606 = vunpack.c.l.b16 %v2574
    %v2607 = vpack.c.b16 %v2592, %v2591
    %v2608 = vpack.c.b16 %v2594, %v2593
    %v2609 = vpack.c.b16 %v2596, %v2595
    %v2610 = vpack.c.b16 %v2598, %v2597
    %v2611 = vpack.c.b16 %v2600, %v2599
    %v2612 = vpack.c.b16 %v2602, %v2601
    %v2613 = vpack.c.b16 %v2604, %v2603
    %v2614 = vpack.c.b16 %v2606, %v2605
    %2623 = vmatpush.bf16.msra.mxu0 %v2614
    %2624 = vmatpush.bf16.msra.mxu0 %v2613
    %2625 = vmatpush.bf16.msra.mxu0 %v2612
    %2626 = vmatpush.bf16.msra.mxu0 %v2611
    %2627 = vmatpush.bf16.msra.mxu0 %v2610
    %2628 = vmatpush.bf16.msra.mxu0 %v2609
    %2629 = vmatpush.bf16.msra.mxu0 %v2608
    %2630 = vmatpush.bf16.msra.mxu0 %v2607
    %2631 = vmatmul.bf16.gmra.mxu0 %v2557
    %v2632 = vpop.f32.mrf.mxu0
    %v2633 = vadd.f32 0.0, %v2632
    %v2634 = vpop.f32.mrf.mxu0
    %2635 = vdwg.mxu0
    %v2636 = vadd.f32 %v2558, %v2633
    %v2637 = vxor.u32 %v2636, 2147483648
    %v2638 = vmul.f32 %v2637, 1.442695
    %v2639 = vpow.pop %v2638
    %v2640 = vadd.f32 %v2639, 1.0
    %v2641 = vrcp.pop %v2640
    %v2642 = vmul.f32 %v2640, %v2641
    %v2643 = vsub.f32 1.0, %v2642
    %v2644 = vmul.f32 %v2641, %v2643
    %v2645 = vadd.f32 %v2641, %v2644
    %vm2646 = vweird.f32 %v2640
    %vm2647 = vweird.f32 %v2641
    %vm2648 = vmor %vm2646, %vm2647
    %v2649 = vsel %vm2648, %v2641, %v2645
    %v2650 = vand.u32 2147483647, %v2640
    %vm2651 = vcmp.eq.f32.partialorder %v2650, 8.507059e+37
    %v2652 = vand.u32 %v2640, 2147483648
    %v2653 = vor.u32 1.1754944e-38, %v2652
    %v2654 = vsel %vm2651, %v2653, %v2649
    %v2655 = vmul.f32 1.0, %v2654
    %v2656 = vld [vmem:[#allocation3 + $0xe] ss:$0 sm:$0xff]
    %v2657 = vld [vmem:[#allocation12 + $0x4] sm:$0xf]
    %v2658 = vld [vmem:[#allocation12 + $0x14] sm:$0xf]
    %v2659 = vld [vmem:[#allocation12 + $0x24] sm:$0xf]
    %v2660 = vld [vmem:[#allocation12 + $0x34] sm:$0xf]
    %v2661 = vld [vmem:[#allocation12 + $0x44] sm:$0xf]
    %v2662 = vld [vmem:[#allocation12 + $0x54] sm:$0xf]
    %v2663 = vld [vmem:[#allocation12 + $0x64] sm:$0xf]
    %v2664 = vld [vmem:[#allocation12 + $0x74] sm:$0xf]
    %v2665 = vld [vmem:[#allocation12 + $0x84] sm:$0xf]
    %v2666 = vld [vmem:[#allocation12 + $0x94] sm:$0xf]
    %v2667 = vld [vmem:[#allocation12 + $0xa4] sm:$0xf]
    %v2668 = vld [vmem:[#allocation12 + $0xb4] sm:$0xf]
    %v2669 = vld [vmem:[#allocation12 + $0xc4] sm:$0xf]
    %v2670 = vld [vmem:[#allocation12 + $0xd4] sm:$0xf]
    %v2671 = vld [vmem:[#allocation12 + $0xe4] sm:$0xf]
    %v2672 = vld [vmem:[#allocation12 + $0xf4] sm:$0xf]
    %v2689 = vunpack.c.l.b16 %v2657
    %v2690 = vunpack.c.l.b16 %v2658
    %v2691 = vunpack.c.l.b16 %v2659
    %v2692 = vunpack.c.l.b16 %v2660
    %v2693 = vunpack.c.l.b16 %v2661
    %v2694 = vunpack.c.l.b16 %v2662
    %v2695 = vunpack.c.l.b16 %v2663
    %v2696 = vunpack.c.l.b16 %v2664
    %v2697 = vunpack.c.l.b16 %v2665
    %v2698 = vunpack.c.l.b16 %v2666
    %v2699 = vunpack.c.l.b16 %v2667
    %v2700 = vunpack.c.l.b16 %v2668
    %v2701 = vunpack.c.l.b16 %v2669
    %v2702 = vunpack.c.l.b16 %v2670
    %v2703 = vunpack.c.l.b16 %v2671
    %v2704 = vunpack.c.l.b16 %v2672
    %v2705 = vpack.c.b16 %v2690, %v2689
    %v2706 = vpack.c.b16 %v2692, %v2691
    %v2707 = vpack.c.b16 %v2694, %v2693
    %v2708 = vpack.c.b16 %v2696, %v2695
    %v2709 = vpack.c.b16 %v2698, %v2697
    %v2710 = vpack.c.b16 %v2700, %v2699
    %v2711 = vpack.c.b16 %v2702, %v2701
    %v2712 = vpack.c.b16 %v2704, %v2703
    %2721 = vmatpush.bf16.msra.mxu0 %v2712
    %2722 = vmatpush.bf16.msra.mxu0 %v2711
    %2723 = vmatpush.bf16.msra.mxu0 %v2710
    %2724 = vmatpush.bf16.msra.mxu0 %v2709
    %2725 = vmatpush.bf16.msra.mxu0 %v2708
    %2726 = vmatpush.bf16.msra.mxu0 %v2707
    %2727 = vmatpush.bf16.msra.mxu0 %v2706
    %2728 = vmatpush.bf16.msra.mxu0 %v2705
    %2729 = vmatmul.bf16.gmra.mxu0 %v2557
    %v2730 = vpop.f32.mrf.mxu0
    %v2731 = vadd.f32 0.0, %v2730
    %v2732 = vpop.f32.mrf.mxu0
    %2733 = vdwg.mxu0
    %v2734 = vadd.f32 %v2656, %v2731
    %v2735 = vxor.u32 %v2734, 2147483648
    %v2736 = vmul.f32 %v2735, 1.442695
    %v2737 = vpow.pop %v2736
    %v2738 = vadd.f32 %v2737, 1.0
    %v2739 = vrcp.pop %v2738
    %v2740 = vmul.f32 %v2738, %v2739
    %v2741 = vsub.f32 1.0, %v2740
    %v2742 = vmul.f32 %v2739, %v2741
    %v2743 = vadd.f32 %v2739, %v2742
    %vm2744 = vweird.f32 %v2738
    %vm2745 = vweird.f32 %v2739
    %vm2746 = vmor %vm2744, %vm2745
    %v2747 = vsel %vm2746, %v2739, %v2743
    %v2748 = vand.u32 2147483647, %v2738
    %vm2749 = vcmp.eq.f32.partialorder %v2748, 8.507059e+37
    %v2750 = vand.u32 %v2738, 2147483648
    %v2751 = vor.u32 1.1754944e-38, %v2750
    %v2752 = vsel %vm2749, %v2751, %v2747
    %v2753 = vmul.f32 1.0, %v2752
    %v2754 = vld [vmem:[#allocation3 + $0x16] ss:$0 sm:$0xff]
    %v2755 = vld [vmem:[#allocation12 + $0x8] sm:$0xf]
    %v2756 = vld [vmem:[#allocation12 + $0x18] sm:$0xf]
    %v2757 = vld [vmem:[#allocation12 + $0x28] sm:$0xf]
    %v2758 = vld [vmem:[#allocation12 + $0x38] sm:$0xf]
    %v2759 = vld [vmem:[#allocation12 + $0x48] sm:$0xf]
    %v2760 = vld [vmem:[#allocation12 + $0x58] sm:$0xf]
    %v2761 = vld [vmem:[#allocation12 + $0x68] sm:$0xf]
    %v2762 = vld [vmem:[#allocation12 + $0x78] sm:$0xf]
    %v2763 = vld [vmem:[#allocation12 + $0x88] sm:$0xf]
    %v2764 = vld [vmem:[#allocation12 + $0x98] sm:$0xf]
    %v2765 = vld [vmem:[#allocation12 + $0xa8] sm:$0xf]
    %v2766 = vld [vmem:[#allocation12 + $0xb8] sm:$0xf]
    %v2767 = vld [vmem:[#allocation12 + $0xc8] sm:$0xf]
    %v2768 = vld [vmem:[#allocation12 + $0xd8] sm:$0xf]
    %v2769 = vld [vmem:[#allocation12 + $0xe8] sm:$0xf]
    %v2770 = vld [vmem:[#allocation12 + $0xf8] sm:$0xf]
    %v2787 = vunpack.c.l.b16 %v2755
    %v2788 = vunpack.c.l.b16 %v2756
    %v2789 = vunpack.c.l.b16 %v2757
    %v2790 = vunpack.c.l.b16 %v2758
    %v2791 = vunpack.c.l.b16 %v2759
    %v2792 = vunpack.c.l.b16 %v2760
    %v2793 = vunpack.c.l.b16 %v2761
    %v2794 = vunpack.c.l.b16 %v2762
    %v2795 = vunpack.c.l.b16 %v2763
    %v2796 = vunpack.c.l.b16 %v2764
    %v2797 = vunpack.c.l.b16 %v2765
    %v2798 = vunpack.c.l.b16 %v2766
    %v2799 = vunpack.c.l.b16 %v2767
    %v2800 = vunpack.c.l.b16 %v2768
    %v2801 = vunpack.c.l.b16 %v2769
    %v2802 = vunpack.c.l.b16 %v2770
    %v2803 = vpack.c.b16 %v2788, %v2787
    %v2804 = vpack.c.b16 %v2790, %v2789
    %v2805 = vpack.c.b16 %v2792, %v2791
    %v2806 = vpack.c.b16 %v2794, %v2793
    %v2807 = vpack.c.b16 %v2796, %v2795
    %v2808 = vpack.c.b16 %v2798, %v2797
    %v2809 = vpack.c.b16 %v2800, %v2799
    %v2810 = vpack.c.b16 %v2802, %v2801
    %2819 = vmatpush.bf16.msra.mxu0 %v2810
    %2820 = vmatpush.bf16.msra.mxu0 %v2809
    %2821 = vmatpush.bf16.msra.mxu0 %v2808
    %2822 = vmatpush.bf16.msra.mxu0 %v2807
    %2823 = vmatpush.bf16.msra.mxu0 %v2806
    %2824 = vmatpush.bf16.msra.mxu0 %v2805
    %2825 = vmatpush.bf16.msra.mxu0 %v2804
    %2826 = vmatpush.bf16.msra.mxu0 %v2803
    %2827 = vmatmul.bf16.gmra.mxu0 %v2557
    %v2828 = vpop.f32.mrf.mxu0
    %v2829 = vadd.f32 0.0, %v2828
    %v2830 = vpop.f32.mrf.mxu0
    %2831 = vdwg.mxu0
    %v2832 = vadd.f32 %v2754, %v2829
    %v2833 = vtanh.pop %v2832
    %v2834 = vld [vmem:[#allocation3 + $0x1e] ss:$0 sm:$0xff]
    %v2835 = vld [vmem:[#allocation12 + $0xc] sm:$0xf]
    %v2836 = vld [vmem:[#allocation12 + $0x1c] sm:$0xf]
    %v2837 = vld [vmem:[#allocation12 + $0x2c] sm:$0xf]
    %v2838 = vld [vmem:[#allocation12 + $0x3c] sm:$0xf]
    %v2839 = vld [vmem:[#allocation12 + $0x4c] sm:$0xf]
    %v2840 = vld [vmem:[#allocation12 + $0x5c] sm:$0xf]
    %v2841 = vld [vmem:[#allocation12 + $0x6c] sm:$0xf]
    %v2842 = vld [vmem:[#allocation12 + $0x7c] sm:$0xf]
    %v2843 = vld [vmem:[#allocation12 + $0x8c] sm:$0xf]
    %v2844 = vld [vmem:[#allocation12 + $0x9c] sm:$0xf]
    %v2845 = vld [vmem:[#allocation12 + $0xac] sm:$0xf]
    %v2846 = vld [vmem:[#allocation12 + $0xbc] sm:$0xf]
    %v2847 = vld [vmem:[#allocation12 + $0xcc] sm:$0xf]
    %v2848 = vld [vmem:[#allocation12 + $0xdc] sm:$0xf]
    %v2849 = vld [vmem:[#allocation12 + $0xec] sm:$0xf]
    %v2850 = vld [vmem:[#allocation12 + $0xfc] sm:$0xf]
    %v2867 = vunpack.c.l.b16 %v2835
    %v2868 = vunpack.c.l.b16 %v2836
    %v2869 = vunpack.c.l.b16 %v2837
    %v2870 = vunpack.c.l.b16 %v2838
    %v2871 = vunpack.c.l.b16 %v2839
    %v2872 = vunpack.c.l.b16 %v2840
    %v2873 = vunpack.c.l.b16 %v2841
    %v2874 = vunpack.c.l.b16 %v2842
    %v2875 = vunpack.c.l.b16 %v2843
    %v2876 = vunpack.c.l.b16 %v2844
    %v2877 = vunpack.c.l.b16 %v2845
    %v2878 = vunpack.c.l.b16 %v2846
    %v2879 = vunpack.c.l.b16 %v2847
    %v2880 = vunpack.c.l.b16 %v2848
    %v2881 = vunpack.c.l.b16 %v2849
    %v2882 = vunpack.c.l.b16 %v2850
    %v2883 = vpack.c.b16 %v2868, %v2867
    %v2884 = vpack.c.b16 %v2870, %v2869
    %v2885 = vpack.c.b16 %v2872, %v2871
    %v2886 = vpack.c.b16 %v2874, %v2873
    %v2887 = vpack.c.b16 %v2876, %v2875
    %v2888 = vpack.c.b16 %v2878, %v2877
    %v2889 = vpack.c.b16 %v2880, %v2879
    %v2890 = vpack.c.b16 %v2882, %v2881
    %2899 = vmatpush.bf16.msra.mxu0 %v2890
    %2900 = vmatpush.bf16.msra.mxu0 %v2889
    %2901 = vmatpush.bf16.msra.mxu0 %v2888
    %2902 = vmatpush.bf16.msra.mxu0 %v2887
    %2903 = vmatpush.bf16.msra.mxu0 %v2886
    %2904 = vmatpush.bf16.msra.mxu0 %v2885
    %2905 = vmatpush.bf16.msra.mxu0 %v2884
    %2906 = vmatpush.bf16.msra.mxu0 %v2883
    %2907 = vmatmul.bf16.gmra.mxu0 %v2557
    %v2908 = vpop.f32.mrf.mxu0
    %v2909 = vadd.f32 0.0, %v2908
    %v2910 = vpop.f32.mrf.mxu0
    %2911 = vdwg.mxu0
    %v2912 = vadd.f32 %v2834, %v2909
    %v2913 = vxor.u32 %v2912, 2147483648
    %v2914 = vmul.f32 %v2913, 1.442695
    %v2915 = vpow.pop %v2914
    %v2916 = vadd.f32 %v2915, 1.0
    %v2917 = vrcp.pop %v2916
    %v2918 = vmul.f32 %v2916, %v2917
    %v2919 = vsub.f32 1.0, %v2918
    %v2920 = vmul.f32 %v2917, %v2919
    %v2921 = vadd.f32 %v2917, %v2920
    %vm2922 = vweird.f32 %v2916
    %vm2923 = vweird.f32 %v2917
    %vm2924 = vmor %vm2922, %vm2923
    %v2925 = vsel %vm2924, %v2917, %v2921
    %v2926 = vand.u32 2147483647, %v2916
    %vm2927 = vcmp.eq.f32.partialorder %v2926, 8.507059e+37
    %v2928 = vand.u32 %v2916, 2147483648
    %v2929 = vor.u32 1.1754944e-38, %v2928
    %v2930 = vsel %vm2927, %v2929, %v2925
    %v2931 = vmul.f32 1.0, %v2930
    %v2932 = vmul.f32 %v2753, %v2553
    %v2933 = vmul.f32 %v2655, %v2833
    %v2934 = vadd.f32 %v2932, %v2933
    %v2935 = vtanh.pop %v2934
    %v2936 = vmul.f32 %v2931, %v2935
    %2937 = vst [vmem:[#allocation4 + $0x6] sm:$0x1] %v2936
    %v2938 = vpack.c.bf16 %v2936, %v2936
    %v2939 = vld [vmem:[#allocation3 + $0x7] ss:$0 sm:$0xff]
    %v2940 = vld [vmem:[#allocation12] sm:$0xf]
    %v2941 = vld [vmem:[#allocation12 + $0x10] sm:$0xf]
    %v2942 = vld [vmem:[#allocation12 + $0x20] sm:$0xf]
    %v2943 = vld [vmem:[#allocation12 + $0x30] sm:$0xf]
    %v2944 = vld [vmem:[#allocation12 + $0x40] sm:$0xf]
    %v2945 = vld [vmem:[#allocation12 + $0x50] sm:$0xf]
    %v2946 = vld [vmem:[#allocation12 + $0x60] sm:$0xf]
    %v2947 = vld [vmem:[#allocation12 + $0x70] sm:$0xf]
    %v2948 = vld [vmem:[#allocation12 + $0x80] sm:$0xf]
    %v2949 = vld [vmem:[#allocation12 + $0x90] sm:$0xf]
    %v2950 = vld [vmem:[#allocation12 + $0xa0] sm:$0xf]
    %v2951 = vld [vmem:[#allocation12 + $0xb0] sm:$0xf]
    %v2952 = vld [vmem:[#allocation12 + $0xc0] sm:$0xf]
    %v2953 = vld [vmem:[#allocation12 + $0xd0] sm:$0xf]
    %v2954 = vld [vmem:[#allocation12 + $0xe0] sm:$0xf]
    %v2955 = vld [vmem:[#allocation12 + $0xf0] sm:$0xf]
    %v2972 = vunpack.c.l.b16 %v2940
    %v2973 = vunpack.c.l.b16 %v2941
    %v2974 = vunpack.c.l.b16 %v2942
    %v2975 = vunpack.c.l.b16 %v2943
    %v2976 = vunpack.c.l.b16 %v2944
    %v2977 = vunpack.c.l.b16 %v2945
    %v2978 = vunpack.c.l.b16 %v2946
    %v2979 = vunpack.c.l.b16 %v2947
    %v2980 = vunpack.c.l.b16 %v2948
    %v2981 = vunpack.c.l.b16 %v2949
    %v2982 = vunpack.c.l.b16 %v2950
    %v2983 = vunpack.c.l.b16 %v2951
    %v2984 = vunpack.c.l.b16 %v2952
    %v2985 = vunpack.c.l.b16 %v2953
    %v2986 = vunpack.c.l.b16 %v2954
    %v2987 = vunpack.c.l.b16 %v2955
    %v2988 = vpack.c.b16 %v2973, %v2972
    %v2989 = vpack.c.b16 %v2975, %v2974
    %v2990 = vpack.c.b16 %v2977, %v2976
    %v2991 = vpack.c.b16 %v2979, %v2978
    %v2992 = vpack.c.b16 %v2981, %v2980
    %v2993 = vpack.c.b16 %v2983, %v2982
    %v2994 = vpack.c.b16 %v2985, %v2984
    %v2995 = vpack.c.b16 %v2987, %v2986
    %3004 = vmatpush.bf16.msra.mxu0 %v2995
    %3005 = vmatpush.bf16.msra.mxu0 %v2994
    %3006 = vmatpush.bf16.msra.mxu0 %v2993
    %3007 = vmatpush.bf16.msra.mxu0 %v2992
    %3008 = vmatpush.bf16.msra.mxu0 %v2991
    %3009 = vmatpush.bf16.msra.mxu0 %v2990
    %3010 = vmatpush.bf16.msra.mxu0 %v2989
    %3011 = vmatpush.bf16.msra.mxu0 %v2988
    %3012 = vmatmul.bf16.gmra.mxu0 %v2938
    %v3013 = vpop.f32.mrf.mxu0
    %v3014 = vadd.f32 0.0, %v3013
    %v3015 = vpop.f32.mrf.mxu0
    %3016 = vdwg.mxu0
    %v3017 = vadd.f32 %v2939, %v3014
    %v3018 = vxor.u32 %v3017, 2147483648
    %v3019 = vmul.f32 %v3018, 1.442695
    %v3020 = vpow.pop %v3019
    %v3021 = vadd.f32 %v3020, 1.0
    %v3022 = vrcp.pop %v3021
    %v3023 = vmul.f32 %v3021, %v3022
    %v3024 = vsub.f32 1.0, %v3023
    %v3025 = vmul.f32 %v3022, %v3024
    %v3026 = vadd.f32 %v3022, %v3025
    %vm3027 = vweird.f32 %v3021
    %vm3028 = vweird.f32 %v3022
    %vm3029 = vmor %vm3027, %vm3028
    %v3030 = vsel %vm3029, %v3022, %v3026
    %v3031 = vand.u32 2147483647, %v3021
    %vm3032 = vcmp.eq.f32.partialorder %v3031, 8.507059e+37
    %v3033 = vand.u32 %v3021, 2147483648
    %v3034 = vor.u32 1.1754944e-38, %v3033
    %v3035 = vsel %vm3032, %v3034, %v3030
    %v3036 = vmul.f32 1.0, %v3035
    %v3037 = vld [vmem:[#allocation3 + $0xf] ss:$0 sm:$0xff]
    %v3038 = vld [vmem:[#allocation12 + $0x4] sm:$0xf]
    %v3039 = vld [vmem:[#allocation12 + $0x14] sm:$0xf]
    %v3040 = vld [vmem:[#allocation12 + $0x24] sm:$0xf]
    %v3041 = vld [vmem:[#allocation12 + $0x34] sm:$0xf]
    %v3042 = vld [vmem:[#allocation12 + $0x44] sm:$0xf]
    %v3043 = vld [vmem:[#allocation12 + $0x54] sm:$0xf]
    %v3044 = vld [vmem:[#allocation12 + $0x64] sm:$0xf]
    %v3045 = vld [vmem:[#allocation12 + $0x74] sm:$0xf]
    %v3046 = vld [vmem:[#allocation12 + $0x84] sm:$0xf]
    %v3047 = vld [vmem:[#allocation12 + $0x94] sm:$0xf]
    %v3048 = vld [vmem:[#allocation12 + $0xa4] sm:$0xf]
    %v3049 = vld [vmem:[#allocation12 + $0xb4] sm:$0xf]
    %v3050 = vld [vmem:[#allocation12 + $0xc4] sm:$0xf]
    %v3051 = vld [vmem:[#allocation12 + $0xd4] sm:$0xf]
    %v3052 = vld [vmem:[#allocation12 + $0xe4] sm:$0xf]
    %v3053 = vld [vmem:[#allocation12 + $0xf4] sm:$0xf]
    %v3070 = vunpack.c.l.b16 %v3038
    %v3071 = vunpack.c.l.b16 %v3039
    %v3072 = vunpack.c.l.b16 %v3040
    %v3073 = vunpack.c.l.b16 %v3041
    %v3074 = vunpack.c.l.b16 %v3042
    %v3075 = vunpack.c.l.b16 %v3043
    %v3076 = vunpack.c.l.b16 %v3044
    %v3077 = vunpack.c.l.b16 %v3045
    %v3078 = vunpack.c.l.b16 %v3046
    %v3079 = vunpack.c.l.b16 %v3047
    %v3080 = vunpack.c.l.b16 %v3048
    %v3081 = vunpack.c.l.b16 %v3049
    %v3082 = vunpack.c.l.b16 %v3050
    %v3083 = vunpack.c.l.b16 %v3051
    %v3084 = vunpack.c.l.b16 %v3052
    %v3085 = vunpack.c.l.b16 %v3053
    %v3086 = vpack.c.b16 %v3071, %v3070
    %v3087 = vpack.c.b16 %v3073, %v3072
    %v3088 = vpack.c.b16 %v3075, %v3074
    %v3089 = vpack.c.b16 %v3077, %v3076
    %v3090 = vpack.c.b16 %v3079, %v3078
    %v3091 = vpack.c.b16 %v3081, %v3080
    %v3092 = vpack.c.b16 %v3083, %v3082
    %v3093 = vpack.c.b16 %v3085, %v3084
    %3102 = vmatpush.bf16.msra.mxu0 %v3093
    %3103 = vmatpush.bf16.msra.mxu0 %v3092
    %3104 = vmatpush.bf16.msra.mxu0 %v3091
    %3105 = vmatpush.bf16.msra.mxu0 %v3090
    %3106 = vmatpush.bf16.msra.mxu0 %v3089
    %3107 = vmatpush.bf16.msra.mxu0 %v3088
    %3108 = vmatpush.bf16.msra.mxu0 %v3087
    %3109 = vmatpush.bf16.msra.mxu0 %v3086
    %3110 = vmatmul.bf16.gmra.mxu0 %v2938
    %v3111 = vpop.f32.mrf.mxu0
    %v3112 = vadd.f32 0.0, %v3111
    %v3113 = vpop.f32.mrf.mxu0
    %3114 = vdwg.mxu0
    %v3115 = vadd.f32 %v3037, %v3112
    %v3116 = vxor.u32 %v3115, 2147483648
    %v3117 = vmul.f32 %v3116, 1.442695
    %v3118 = vpow.pop %v3117
    %v3119 = vadd.f32 %v3118, 1.0
    %v3120 = vrcp.pop %v3119
    %v3121 = vmul.f32 %v3119, %v3120
    %v3122 = vsub.f32 1.0, %v3121
    %v3123 = vmul.f32 %v3120, %v3122
    %v3124 = vadd.f32 %v3120, %v3123
    %vm3125 = vweird.f32 %v3119
    %vm3126 = vweird.f32 %v3120
    %vm3127 = vmor %vm3125, %vm3126
    %v3128 = vsel %vm3127, %v3120, %v3124
    %v3129 = vand.u32 2147483647, %v3119
    %vm3130 = vcmp.eq.f32.partialorder %v3129, 8.507059e+37
    %v3131 = vand.u32 %v3119, 2147483648
    %v3132 = vor.u32 1.1754944e-38, %v3131
    %v3133 = vsel %vm3130, %v3132, %v3128
    %v3134 = vmul.f32 1.0, %v3133
    %v3135 = vld [vmem:[#allocation3 + $0x17] ss:$0 sm:$0xff]
    %v3136 = vld [vmem:[#allocation12 + $0x8] sm:$0xf]
    %v3137 = vld [vmem:[#allocation12 + $0x18] sm:$0xf]
    %v3138 = vld [vmem:[#allocation12 + $0x28] sm:$0xf]
    %v3139 = vld [vmem:[#allocation12 + $0x38] sm:$0xf]
    %v3140 = vld [vmem:[#allocation12 + $0x48] sm:$0xf]
    %v3141 = vld [vmem:[#allocation12 + $0x58] sm:$0xf]
    %v3142 = vld [vmem:[#allocation12 + $0x68] sm:$0xf]
    %v3143 = vld [vmem:[#allocation12 + $0x78] sm:$0xf]
    %v3144 = vld [vmem:[#allocation12 + $0x88] sm:$0xf]
    %v3145 = vld [vmem:[#allocation12 + $0x98] sm:$0xf]
    %v3146 = vld [vmem:[#allocation12 + $0xa8] sm:$0xf]
    %v3147 = vld [vmem:[#allocation12 + $0xb8] sm:$0xf]
    %v3148 = vld [vmem:[#allocation12 + $0xc8] sm:$0xf]
    %v3149 = vld [vmem:[#allocation12 + $0xd8] sm:$0xf]
    %v3150 = vld [vmem:[#allocation12 + $0xe8] sm:$0xf]
    %v3151 = vld [vmem:[#allocation12 + $0xf8] sm:$0xf]
    %v3168 = vunpack.c.l.b16 %v3136
    %v3169 = vunpack.c.l.b16 %v3137
    %v3170 = vunpack.c.l.b16 %v3138
    %v3171 = vunpack.c.l.b16 %v3139
    %v3172 = vunpack.c.l.b16 %v3140
    %v3173 = vunpack.c.l.b16 %v3141
    %v3174 = vunpack.c.l.b16 %v3142
    %v3175 = vunpack.c.l.b16 %v3143
    %v3176 = vunpack.c.l.b16 %v3144
    %v3177 = vunpack.c.l.b16 %v3145
    %v3178 = vunpack.c.l.b16 %v3146
    %v3179 = vunpack.c.l.b16 %v3147
    %v3180 = vunpack.c.l.b16 %v3148
    %v3181 = vunpack.c.l.b16 %v3149
    %v3182 = vunpack.c.l.b16 %v3150
    %v3183 = vunpack.c.l.b16 %v3151
    %v3184 = vpack.c.b16 %v3169, %v3168
    %v3185 = vpack.c.b16 %v3171, %v3170
    %v3186 = vpack.c.b16 %v3173, %v3172
    %v3187 = vpack.c.b16 %v3175, %v3174
    %v3188 = vpack.c.b16 %v3177, %v3176
    %v3189 = vpack.c.b16 %v3179, %v3178
    %v3190 = vpack.c.b16 %v3181, %v3180
    %v3191 = vpack.c.b16 %v3183, %v3182
    %3200 = vmatpush.bf16.msra.mxu0 %v3191
    %3201 = vmatpush.bf16.msra.mxu0 %v3190
    %3202 = vmatpush.bf16.msra.mxu0 %v3189
    %3203 = vmatpush.bf16.msra.mxu0 %v3188
    %3204 = vmatpush.bf16.msra.mxu0 %v3187
    %3205 = vmatpush.bf16.msra.mxu0 %v3186
    %3206 = vmatpush.bf16.msra.mxu0 %v3185
    %3207 = vmatpush.bf16.msra.mxu0 %v3184
    %3208 = vmatmul.bf16.gmra.mxu0 %v2938
    %v3209 = vpop.f32.mrf.mxu0
    %v3210 = vadd.f32 0.0, %v3209
    %v3211 = vpop.f32.mrf.mxu0
    %3212 = vdwg.mxu0
    %v3213 = vadd.f32 %v3135, %v3210
    %v3214 = vtanh.pop %v3213
    %v3215 = vld [vmem:[#allocation3 + $0x1f] ss:$0 sm:$0xff]
    %v3216 = vld [vmem:[#allocation12 + $0xc] sm:$0xf]
    %v3217 = vld [vmem:[#allocation12 + $0x1c] sm:$0xf]
    %v3218 = vld [vmem:[#allocation12 + $0x2c] sm:$0xf]
    %v3219 = vld [vmem:[#allocation12 + $0x3c] sm:$0xf]
    %v3220 = vld [vmem:[#allocation12 + $0x4c] sm:$0xf]
    %v3221 = vld [vmem:[#allocation12 + $0x5c] sm:$0xf]
    %v3222 = vld [vmem:[#allocation12 + $0x6c] sm:$0xf]
    %v3223 = vld [vmem:[#allocation12 + $0x7c] sm:$0xf]
    %v3224 = vld [vmem:[#allocation12 + $0x8c] sm:$0xf]
    %v3225 = vld [vmem:[#allocation12 + $0x9c] sm:$0xf]
    %v3226 = vld [vmem:[#allocation12 + $0xac] sm:$0xf]
    %v3227 = vld [vmem:[#allocation12 + $0xbc] sm:$0xf]
    %v3228 = vld [vmem:[#allocation12 + $0xcc] sm:$0xf]
    %v3229 = vld [vmem:[#allocation12 + $0xdc] sm:$0xf]
    %v3230 = vld [vmem:[#allocation12 + $0xec] sm:$0xf]
    %v3231 = vld [vmem:[#allocation12 + $0xfc] sm:$0xf]
    %v3248 = vunpack.c.l.b16 %v3216
    %v3249 = vunpack.c.l.b16 %v3217
    %v3250 = vunpack.c.l.b16 %v3218
    %v3251 = vunpack.c.l.b16 %v3219
    %v3252 = vunpack.c.l.b16 %v3220
    %v3253 = vunpack.c.l.b16 %v3221
    %v3254 = vunpack.c.l.b16 %v3222
    %v3255 = vunpack.c.l.b16 %v3223
    %v3256 = vunpack.c.l.b16 %v3224
    %v3257 = vunpack.c.l.b16 %v3225
    %v3258 = vunpack.c.l.b16 %v3226
    %v3259 = vunpack.c.l.b16 %v3227
    %v3260 = vunpack.c.l.b16 %v3228
    %v3261 = vunpack.c.l.b16 %v3229
    %v3262 = vunpack.c.l.b16 %v3230
    %v3263 = vunpack.c.l.b16 %v3231
    %v3264 = vpack.c.b16 %v3249, %v3248
    %v3265 = vpack.c.b16 %v3251, %v3250
    %v3266 = vpack.c.b16 %v3253, %v3252
    %v3267 = vpack.c.b16 %v3255, %v3254
    %v3268 = vpack.c.b16 %v3257, %v3256
    %v3269 = vpack.c.b16 %v3259, %v3258
    %v3270 = vpack.c.b16 %v3261, %v3260
    %v3271 = vpack.c.b16 %v3263, %v3262
    %3280 = vmatpush.bf16.msra.mxu0 %v3271
    %3281 = vmatpush.bf16.msra.mxu0 %v3270
    %3282 = vmatpush.bf16.msra.mxu0 %v3269
    %3283 = vmatpush.bf16.msra.mxu0 %v3268
    %3284 = vmatpush.bf16.msra.mxu0 %v3267
    %3285 = vmatpush.bf16.msra.mxu0 %v3266
    %3286 = vmatpush.bf16.msra.mxu0 %v3265
    %3287 = vmatpush.bf16.msra.mxu0 %v3264
    %3288 = vmatmul.bf16.gmra.mxu0 %v2938
    %v3289 = vpop.f32.mrf.mxu0
    %v3290 = vadd.f32 0.0, %v3289
    %v3291 = vpop.f32.mrf.mxu0
    %3292 = vdwg.mxu0
    %v3293 = vadd.f32 %v3215, %v3290
    %v3294 = vxor.u32 %v3293, 2147483648
    %v3295 = vmul.f32 %v3294, 1.442695
    %v3296 = vpow.pop %v3295
    %v3297 = vadd.f32 %v3296, 1.0
    %v3298 = vrcp.pop %v3297
    %v3299 = vmul.f32 %v3297, %v3298
    %v3300 = vsub.f32 1.0, %v3299
    %v3301 = vmul.f32 %v3298, %v3300
    %v3302 = vadd.f32 %v3298, %v3301
    %vm3303 = vweird.f32 %v3297
    %vm3304 = vweird.f32 %v3298
    %vm3305 = vmor %vm3303, %vm3304
    %v3306 = vsel %vm3305, %v3298, %v3302
    %v3307 = vand.u32 2147483647, %v3297
    %vm3308 = vcmp.eq.f32.partialorder %v3307, 8.507059e+37
    %v3309 = vand.u32 %v3297, 2147483648
    %v3310 = vor.u32 1.1754944e-38, %v3309
    %v3311 = vsel %vm3308, %v3310, %v3306
    %v3312 = vmul.f32 1.0, %v3311
    %v3313 = vmul.f32 %v3134, %v2934
    %v3314 = vmul.f32 %v3036, %v3214
    %v3315 = vadd.f32 %v3313, %v3314
    %v3316 = vtanh.pop %v3315
    %v3317 = vmul.f32 %v3312, %v3316
    %3318 = vst [vmem:[#allocation4 + $0x7] sm:$0x1] %v3317
    %v3319 = vld [vmem:[#allocation4] sm:$0xff]
    %v3320 = vpack.c.bf16 %v3319, %v3319
    %v3321 = vld [vmem:[%s5] sm:$0xf]
    %v3322 = vld [vmem:[%s5 + $0x4] sm:$0xf]
    %v3323 = vld [vmem:[%s5 + $0x8] sm:$0xf]
    %v3324 = vld [vmem:[%s5 + $0xc] sm:$0xf]
    %v3325 = vld [vmem:[%s5 + $0x10] sm:$0xf]
    %v3326 = vld [vmem:[%s5 + $0x14] sm:$0xf]
    %v3327 = vld [vmem:[%s5 + $0x18] sm:$0xf]
    %v3328 = vld [vmem:[%s5 + $0x1c] sm:$0xf]
    %v3329 = vld [vmem:[%s5 + $0x20] sm:$0xf]
    %v3330 = vld [vmem:[%s5 + $0x24] sm:$0xf]
    %v3331 = vld [vmem:[%s5 + $0x28] sm:$0xf]
    %v3332 = vld [vmem:[%s5 + $0x2c] sm:$0xf]
    %v3333 = vld [vmem:[%s5 + $0x30] sm:$0xf]
    %v3334 = vld [vmem:[%s5 + $0x34] sm:$0xf]
    %v3335 = vld [vmem:[%s5 + $0x38] sm:$0xf]
    %v3336 = vld [vmem:[%s5 + $0x3c] sm:$0xf]
    %v3337 = vld [vmem:[%s6] sm:$0x1]
    %v3339 = vperm.slane %v3337, 0
    %v3357 = vunpack.c.l.b16 %v3321
    %v3358 = vunpack.c.l.b16 %v3322
    %v3359 = vunpack.c.l.b16 %v3323
    %v3360 = vunpack.c.l.b16 %v3324
    %v3361 = vunpack.c.l.b16 %v3325
    %v3362 = vunpack.c.l.b16 %v3326
    %v3363 = vunpack.c.l.b16 %v3327
    %v3364 = vunpack.c.l.b16 %v3328
    %v3365 = vunpack.c.l.b16 %v3329
    %v3366 = vunpack.c.l.b16 %v3330
    %v3367 = vunpack.c.l.b16 %v3331
    %v3368 = vunpack.c.l.b16 %v3332
    %v3369 = vunpack.c.l.b16 %v3333
    %v3370 = vunpack.c.l.b16 %v3334
    %v3371 = vunpack.c.l.b16 %v3335
    %v3372 = vunpack.c.l.b16 %v3336
    %v3373 = vpack.c.b16 %v3358, %v3357
    %v3374 = vpack.c.b16 %v3360, %v3359
    %v3375 = vpack.c.b16 %v3362, %v3361
    %v3376 = vpack.c.b16 %v3364, %v3363
    %v3377 = vpack.c.b16 %v3366, %v3365
    %v3378 = vpack.c.b16 %v3368, %v3367
    %v3379 = vpack.c.b16 %v3370, %v3369
    %v3380 = vpack.c.b16 %v3372, %v3371
    %3389 = vmatpush.bf16.msra.mxu0 %v3380
    %3390 = vmatpush.bf16.msra.mxu0 %v3379
    %3391 = vmatpush.bf16.msra.mxu0 %v3378
    %3392 = vmatpush.bf16.msra.mxu0 %v3377
    %3393 = vmatpush.bf16.msra.mxu0 %v3376
    %3394 = vmatpush.bf16.msra.mxu0 %v3375
    %3395 = vmatpush.bf16.msra.mxu0 %v3374
    %3396 = vmatpush.bf16.msra.mxu0 %v3373
    %3397 = vmatmul.bf16.gmra.mxu0 %v3320
    %v3398 = vpop.f32.mrf.mxu0
    %v3399 = vadd.f32 %v3339, %v3398
    %v3400 = vpop.f32.mrf.mxu0
    %3401 = vdwg.mxu0
    %vm3402 = vcmask 97280
    %3403 = vst.msk [vmem:[#allocation13] sm:$0xff] %vm3402, %v3399
    // Predicated region
    $region38: #{forward.1} parent=1 // pred_check
      _
    $region39: #{forward.1} parent=1 // pred_check_branch
      %3405 = sbr.rel (0) target = $region41
    $region40: #{forward.1} parent=1 // pred_region
      %3407 = vsyncadd [#allocation9], 0
      %s3409 = sshll.u32 [#allocation13], 4
      %s3410 = int_to_ptr.vmem [resolvable:$true] %s3409
      %s3411 = sshll.u32 %s7, 4
      %s3412 = int_to_ptr.hbm [resolvable:$true] %s3411
      %3414 = dma.vmem_to_hbm [thread:$0]  %s3410, 128, %s3412, [#allocation9]
    $region41: #{forward.1} parent=1 // pred_fallthru
      _
    // Predicated region
    $region42: #{forward.1} parent=1 // pred_check
      _
    $region43: #{forward.1} parent=1 // pred_check_branch
      %3416 = sbr.rel (0) target = $region45
    $region44: #{forward.1} parent=1 // pred_region
      %3418 = dma.done [#allocation9], 128
    $region45: #{forward.1} parent=1 // pred_fallthru
      _
    %3419 = vsyncpa [#allocation8], 1
    %3420 = vsyncpa [#allocation11], 1
    %3421 = vsyncpa [#allocation9], 1

</llo_original>
